<compile_context>
chip_gen: v6e
topology: v6e:2x2x1
jax: 0.10.0
libtpu: 0.0.40
codegen_flags: <defaults>
</compile_context>

<pallas_src>
import math

import jax
import jax.numpy as jnp
import numpy as np
from jax import lax
from jax.experimental import pallas as pl
from jax.experimental.pallas import tpu as pltpu


# ----------------------------------------------------------------------------
# Kernel factory: one grid step == one batch element.
# ----------------------------------------------------------------------------
def _make_kernel(lm, lt, d_model, nhead):
    hd = d_model // nhead
    scale = 1.0 / math.sqrt(hd)

    def kernel(memcat_ref,                      # (1, lk, d)  f32  = [memory; tgt]
               w_in_ref, b_in_ref,              # (d, 3d) bf16, (1, 3d) f32
               w_out_ref, b_out_ref,            # (d, d)  bf16, (1, d)  f32
               g1_ref, be1_ref,                 # (1, d) f32 layernorm1
               w1_ref, b1_ref,                  # (d, dff) bf16, (1, dff) f32
               w2_ref, b2_ref,                  # (dff, d) bf16, (1, d)  f32
               g2_ref, be2_ref,                 # (1, d) f32 layernorm2
               out_ref):                        # (1, lt, d) f32
        x = memcat_ref[0]                       # (lk, d)  rows = [memory ; tgt]
        tgt = x[lm:, :]                         # (lt, d)  residual input / query rows

        # Fused Q/K/V projection over the whole concatenated sequence (bf16 -> f32 acc).
        qkv = jnp.dot(x.astype(jnp.bfloat16), w_in_ref[...],
                      preferred_element_type=jnp.float32) + b_in_ref[...]      # (lk, 3d)
        q = qkv[lm:, :d_model] * scale           # queries come only from the tgt rows
        k = qkv[:, d_model:2 * d_model]          # (lk, d)
        v = qkv[:, 2 * d_model:]                 # (lk, d)

        # Multi-head attention (tiny per-head matmuls kept in f32).
        head_outs = []
        for h in range(nhead):
            lo = h * hd
            qh = q[:, lo:lo + hd]                                   # (lt, hd)
            kh = k[:, lo:lo + hd]                                   # (lk, hd)
            vh = v[:, lo:lo + hd]                                   # (lk, hd)
            s = jnp.dot(qh, kh.T, preferred_element_type=jnp.float32)  # (lt, lk)
            m = jnp.max(s, axis=-1, keepdims=True)
            e = jnp.exp(s - m)
            pw = e / jnp.sum(e, axis=-1, keepdims=True)
            head_outs.append(jnp.dot(pw, vh, preferred_element_type=jnp.float32))
        attn = jnp.concatenate(head_outs, axis=-1)                  # (lt, d)

        attn_out = jnp.dot(attn.astype(jnp.bfloat16), w_out_ref[...],
                           preferred_element_type=jnp.float32) + b_out_ref[...]

        def layer_norm(z, g, b):
            mu = jnp.mean(z, axis=-1, keepdims=True)
            zc = z - mu
            var = jnp.mean(zc * zc, axis=-1, keepdims=True)
            return zc * lax.rsqrt(var + 1e-5) * g + b               # rsqrt -> EUP

        # residual + norm1
        x1 = layer_norm(tgt + attn_out, g1_ref[...], be1_ref[...])

        # feed-forward (bf16 matmuls, f32 accumulation)
        hid = jnp.maximum(
            jnp.dot(x1.astype(jnp.bfloat16), w1_ref[...],
                    preferred_element_type=jnp.float32) + b1_ref[...], 0.0)
        ff = jnp.dot(hid.astype(jnp.bfloat16), w2_ref[...],
                     preferred_element_type=jnp.float32) + b2_ref[...]

        # residual + norm2
        out_ref[0] = layer_norm(x1 + ff, g2_ref[...], be2_ref[...])

    return kernel


# ----------------------------------------------------------------------------
# Wrapper
# ----------------------------------------------------------------------------
def decoder_layer(tgt, memory, params, nhead):
    """tgt: [Lt, B, d] f32, memory: [Lm, B, d] f32 -> [Lt, B, d] f32 (PyTorch layout)."""
    lt, b, d = tgt.shape
    lm, b2, d2 = memory.shape
    assert b == b2 and d == d2
    lk = lm + lt
    assert lt % 8 == 0 and lk % 8 == 0, "sequence tiles must be sublane-aligned (mult of 8)"
    assert d % 128 == 0, "d_model must be lane-aligned (mult of 128)"

    # memory = cat([memory, tgt], dim=0), then go batch-first for lane-dense tiles.
    memcat = jnp.concatenate([memory, tgt], axis=0)      # (lk, b, d)
    memcat_b = jnp.transpose(memcat, (1, 0, 2))          # (b, lk, d)

    p = params
    bf16 = jnp.bfloat16
    args = (memcat_b,
            p["w_in"].astype(bf16), p["b_in"],
            p["w_out"].astype(bf16), p["b_out"],
            p["g1"], p["be1"],
            p["w1"].astype(bf16), p["b1"],
            p["w2"].astype(bf16), p["b2"],
            p["g2"], p["be2"])

    # weights/biases are VMEM-resident (constant index map); activations blocked per batch.
    resident = lambda a: pl.BlockSpec(a.shape, lambda i: (0, 0))
    in_specs = ([pl.BlockSpec((1, lk, d), lambda i: (i, 0, 0))]
                + [resident(a) for a in args[1:]])

    kernel = _make_kernel(lm, lt, d, nhead)
    out = pl.pallas_call(
        kernel,
        out_shape=jax.ShapeDtypeStruct((b, lt, d), jnp.float32),
        grid=(b,),
        in_specs=in_specs,
        out_specs=pl.BlockSpec((1, lt, d), lambda i: (i, 0, 0)),
        compiler_params=pltpu.CompilerParams(
            dimension_semantics=("parallel",),        # shard batch across TCs (v7x)
            vmem_limit_bytes=32 * 1024 * 1024,        # fits v7x 64 MiB VMEM w/ headroom
        ),
    )(*args)

    return jnp.transpose(out, (1, 0, 2))               # back to (Lt, B, d)


# ----------------------------------------------------------------------------
# Deterministic parameter init. Weights stored transposed ([in, out]) so kernels do x @ W.
# in_proj columns are [Wq | Wk | Wv]; biases made reasonably large so the test catches
# a dropped bias add.
# ----------------------------------------------------------------------------
def init_params(key, d_model, nhead, dff):
    def uni(k, shape, bound):
        return jax.random.uniform(k, shape, jnp.float32, -bound, bound)

    ks = jax.random.split(key, 12)
    xav = math.sqrt(6.0 / (d_model + 3 * d_model))       # xavier_uniform of in_proj_weight
    w_in = uni(ks[0], (d_model, 3 * d_model), xav)
    b_in = uni(ks[1], (1, 3 * d_model), 0.5)
    bo = 1.0 / math.sqrt(d_model)
    w_out = uni(ks[2], (d_model, d_model), bo)
    b_out = uni(ks[3], (1, d_model), 0.5)
    w1 = uni(ks[4], (d_model, dff), bo)
    b1 = uni(ks[5], (1, dff), 0.5)
    bf_ = 1.0 / math.sqrt(dff)
    w2 = uni(ks[6], (dff, d_model), bf_)
    b2 = uni(ks[7], (1, d_model), 0.5)
    g1 = 1.0 + 0.3 * jax.random.normal(ks[8], (1, d_model), jnp.float32)
    be1 = 0.3 * jax.random.normal(ks[9], (1, d_model), jnp.float32)
    g2 = 1.0 + 0.3 * jax.random.normal(ks[10], (1, d_model), jnp.float32)
    be2 = 0.3 * jax.random.normal(ks[11], (1, d_model), jnp.float32)
    return dict(w_in=w_in, b_in=b_in, w_out=w_out, b_out=b_out,
                w1=w1, b1=b1, w2=w2, b2=b2,
                g1=g1, be1=be1, g2=g2, be2=be2)


# ----------------------------------------------------------------------------
# Pure-JAX f32 reference mirroring the PyTorch forward (eval mode).
# ----------------------------------------------------------------------------
def reference(tgt, memory, params, nhead):
    lt, b, d = tgt.shape
    lm = memory.shape[0]
    lk = lm + lt
    hd = d // nhead
    p = params

    memcat = jnp.concatenate([memory, tgt], axis=0)      # (lk, b, d)
    x = jnp.transpose(memcat, (1, 0, 2))                 # (b, lk, d)
    t = jnp.transpose(tgt, (1, 0, 2))                    # (b, lt, d)

    qkv = x @ p["w_in"] + p["b_in"]                      # (b, lk, 3d)
    q = qkv[:, lm:, :d] / math.sqrt(hd)
    k = qkv[:, :, d:2 * d]
    v = qkv[:, :, 2 * d:]
    qh = q.reshape(b, lt, nhead, hd)
    kh = k.reshape(b, lk, nhead, hd)
    vh = v.reshape(b, lk, nhead, hd)
    s = jnp.einsum("bqhd,bkhd->bhqk", qh, kh)
    w = jax.nn.softmax(s, axis=-1)
    o = jnp.einsum("bhqk,bkhd->bqhd", w, vh).reshape(b, lt, d)
    attn_out = o @ p["w_out"] + p["b_out"]

    def ln(z, g, bb):
        mu = z.mean(axis=-1, keepdims=True)
        var = ((z - mu) ** 2).mean(axis=-1, keepdims=True)
        return (z - mu) / jnp.sqrt(var + 1e-5) * g + bb

    x1 = ln(t + attn_out, p["g1"], p["be1"])
    ff = jax.nn.relu(x1 @ p["w1"] + p["b1"]) @ p["w2"] + p["b2"]
    x2 = ln(x1 + ff, p["g2"], p["be2"])
    return jnp.transpose(x2, (1, 0, 2))                  # (lt, b, d)


if __name__ == "__main__":
    D_MODEL, NHEAD, DFF = 256, 4, 512
    LT, LM, B = 8, 16, 2

    key = jax.random.PRNGKey(0)
    k_p, k_t, k_m = jax.random.split(key, 3)
    tgt = jax.random.normal(k_t, (LT, B, D_MODEL), jnp.float32)
    memory = jax.random.normal(k_m, (LM, B, D_MODEL), jnp.float32)
    params = init_params(k_p, D_MODEL, NHEAD, DFF)

    out = jax.block_until_ready(decoder_layer(tgt, memory, params, NHEAD))
    assert out.shape == (LT, B, D_MODEL), out.shape

    ref = jax.block_until_ready(reference(tgt, memory, params, NHEAD))
    # bf16 matmuls (f32 accumulation) vs f32 reference -> loose-but-meaningful tolerance.
    np.testing.assert_allclose(np.asarray(out), np.asarray(ref), rtol=2e-2, atol=3e-2)

    print("KERNEL_OK")
</pallas_src>

<mosaic_0001>
module attributes {stable_mosaic.version = 11 : i64} {
  func.func @kernel(%arg0: i32, %arg1: memref<1x24x256xf32, #tpu.memory_space<vmem>>, %arg2: memref<256x768xbf16, #tpu.memory_space<vmem>>, %arg3: memref<1x768xf32, #tpu.memory_space<vmem>>, %arg4: memref<256x256xbf16, #tpu.memory_space<vmem>>, %arg5: memref<1x256xf32, #tpu.memory_space<vmem>>, %arg6: memref<1x256xf32, #tpu.memory_space<vmem>>, %arg7: memref<1x256xf32, #tpu.memory_space<vmem>>, %arg8: memref<256x512xbf16, #tpu.memory_space<vmem>>, %arg9: memref<1x512xf32, #tpu.memory_space<vmem>>, %arg10: memref<512x256xbf16, #tpu.memory_space<vmem>>, %arg11: memref<1x256xf32, #tpu.memory_space<vmem>>, %arg12: memref<1x256xf32, #tpu.memory_space<vmem>>, %arg13: memref<1x256xf32, #tpu.memory_space<vmem>>, %arg14: memref<1x8x256xf32, #tpu.memory_space<vmem>>) attributes {dimension_semantics = [#tpu.dimension_semantics<parallel>], iteration_bounds = array<i64: 2>, scalar_prefetch = 0 : i64, scratch_operands = 0 : i64, tpu.core_type = #tpu.core_type<tc>, window_params = [{transform_indices = @transform_0, window_bounds = array<i64: 1, 24, 256>}, {pipeline_mode = #tpu.pipeline_mode<synchronous>, transform_indices = @transform_1, window_bounds = array<i64: 256, 768>}, {pipeline_mode = #tpu.pipeline_mode<synchronous>, transform_indices = @transform_2, window_bounds = array<i64: 1, 768>}, {pipeline_mode = #tpu.pipeline_mode<synchronous>, transform_indices = @transform_3, window_bounds = array<i64: 256, 256>}, {pipeline_mode = #tpu.pipeline_mode<synchronous>, transform_indices = @transform_4, window_bounds = array<i64: 1, 256>}, {pipeline_mode = #tpu.pipeline_mode<synchronous>, transform_indices = @transform_5, window_bounds = array<i64: 1, 256>}, {pipeline_mode = #tpu.pipeline_mode<synchronous>, transform_indices = @transform_6, window_bounds = array<i64: 1, 256>}, {pipeline_mode = #tpu.pipeline_mode<synchronous>, transform_indices = @transform_7, window_bounds = array<i64: 256, 512>}, {pipeline_mode = #tpu.pipeline_mode<synchronous>, transform_indices = @transform_8, window_bounds = array<i64: 1, 512>}, {pipeline_mode = #tpu.pipeline_mode<synchronous>, transform_indices = @transform_9, window_bounds = array<i64: 512, 256>}, {pipeline_mode = #tpu.pipeline_mode<synchronous>, transform_indices = @transform_10, window_bounds = array<i64: 1, 256>}, {pipeline_mode = #tpu.pipeline_mode<synchronous>, transform_indices = @transform_11, window_bounds = array<i64: 1, 256>}, {pipeline_mode = #tpu.pipeline_mode<synchronous>, transform_indices = @transform_12, window_bounds = array<i64: 1, 256>}, {transform_indices = @transform_13, window_bounds = array<i64: 1, 8, 256>}]} {
    %c0 = arith.constant 0 : index
    %c0_0 = arith.constant 0 : index
    %c0_1 = arith.constant 0 : index
    %0 = vector.load %arg1[%c0, %c0_0, %c0_1] : memref<1x24x256xf32, #tpu.memory_space<vmem>>, vector<1x24x256xf32>
    %1 = vector.shape_cast %0 : vector<1x24x256xf32> to vector<24x256xf32>
    %2 = vector.extract_strided_slice %1 {offsets = [16, 0], sizes = [8, 256], strides = [1, 1]} : vector<24x256xf32> to vector<8x256xf32>
    %3 = arith.truncf %1 : vector<24x256xf32> to vector<24x256xbf16>
    %c0_2 = arith.constant 0 : index
    %c0_3 = arith.constant 0 : index
    %4 = vector.load %arg2[%c0_2, %c0_3] : memref<256x768xbf16, #tpu.memory_space<vmem>>, vector<256x768xbf16>
    %cst = arith.constant dense<0.000000e+00> : vector<24x768xf32>
    %5 = tpu.matmul %3, %4, %cst {dimension_numbers = #tpu.dot_dimension_numbers<[1], [0], [0], [1], [0, 0, 1, 1], [], []>} : vector<24x256xbf16>, vector<256x768xbf16>, vector<24x768xf32> -> vector<24x768xf32>
    %c0_4 = arith.constant 0 : index
    %c0_5 = arith.constant 0 : index
    %6 = vector.load %arg3[%c0_4, %c0_5] : memref<1x768xf32, #tpu.memory_space<vmem>>, vector<1x768xf32>
    %7 = vector.broadcast %6 : vector<1x768xf32> to vector<24x768xf32>
    %8 = arith.addf %5, %7 : vector<24x768xf32>
    %9 = vector.extract_strided_slice %8 {offsets = [16, 0], sizes = [8, 256], strides = [1, 1]} : vector<24x768xf32> to vector<8x256xf32>
    %cst_6 = arith.constant 1.250000e-01 : f32
    %10 = vector.broadcast %cst_6 : f32 to vector<8x256xf32>
    %11 = arith.mulf %9, %10 : vector<8x256xf32>
    %12 = vector.extract_strided_slice %8 {offsets = [0, 256], sizes = [24, 256], strides = [1, 1]} : vector<24x768xf32> to vector<24x256xf32>
    %13 = vector.extract_strided_slice %8 {offsets = [0, 512], sizes = [24, 256], strides = [1, 1]} : vector<24x768xf32> to vector<24x256xf32>
    %14 = vector.extract_strided_slice %11 {offsets = [0, 0], sizes = [8, 64], strides = [1, 1]} : vector<8x256xf32> to vector<8x64xf32>
    %15 = vector.extract_strided_slice %12 {offsets = [0, 0], sizes = [24, 64], strides = [1, 1]} : vector<24x256xf32> to vector<24x64xf32>
    %16 = vector.extract_strided_slice %13 {offsets = [0, 0], sizes = [24, 64], strides = [1, 1]} : vector<24x256xf32> to vector<24x64xf32>
    %17 = tpu.transpose %15, [1, 0] : vector<24x64xf32> -> vector<64x24xf32>
    %cst_7 = arith.constant dense<0.000000e+00> : vector<8x24xf32>
    %18 = tpu.matmul %14, %17, %cst_7 {dimension_numbers = #tpu.dot_dimension_numbers<[1], [0], [0], [1], [0, 0, 1, 1], [], []>} : vector<8x64xf32>, vector<64x24xf32>, vector<8x24xf32> -> vector<8x24xf32>
    %cst_8 = arith.constant dense<0xFF800000> : vector<8xf32>
    %19 = vector.multi_reduction <maximumf>, %18, %cst_8 [1] : vector<8x24xf32> to vector<8xf32>
    %20 = vector.shape_cast %19 : vector<8xf32> to vector<8x1xf32>
    %21 = vector.broadcast %20 : vector<8x1xf32> to vector<8x24xf32>
    %22 = arith.subf %18, %21 : vector<8x24xf32>
    %23 = math.exp %22 : vector<8x24xf32>
    %cst_9 = arith.constant dense<0.000000e+00> : vector<8xf32>
    %24 = vector.multi_reduction <add>, %23, %cst_9 [1] : vector<8x24xf32> to vector<8xf32>
    %25 = vector.shape_cast %24 : vector<8xf32> to vector<8x1xf32>
    %26 = vector.broadcast %25 : vector<8x1xf32> to vector<8x24xf32>
    %27 = arith.divf %23, %26 : vector<8x24xf32>
    %cst_10 = arith.constant dense<0.000000e+00> : vector<8x64xf32>
    %28 = tpu.matmul %27, %16, %cst_10 {dimension_numbers = #tpu.dot_dimension_numbers<[1], [0], [0], [1], [0, 0, 1, 1], [], []>} : vector<8x24xf32>, vector<24x64xf32>, vector<8x64xf32> -> vector<8x64xf32>
    %29 = vector.extract_strided_slice %11 {offsets = [0, 64], sizes = [8, 64], strides = [1, 1]} : vector<8x256xf32> to vector<8x64xf32>
    %30 = vector.extract_strided_slice %12 {offsets = [0, 64], sizes = [24, 64], strides = [1, 1]} : vector<24x256xf32> to vector<24x64xf32>
    %31 = vector.extract_strided_slice %13 {offsets = [0, 64], sizes = [24, 64], strides = [1, 1]} : vector<24x256xf32> to vector<24x64xf32>
    %32 = tpu.transpose %30, [1, 0] : vector<24x64xf32> -> vector<64x24xf32>
    %cst_11 = arith.constant dense<0.000000e+00> : vector<8x24xf32>
    %33 = tpu.matmul %29, %32, %cst_11 {dimension_numbers = #tpu.dot_dimension_numbers<[1], [0], [0], [1], [0, 0, 1, 1], [], []>} : vector<8x64xf32>, vector<64x24xf32>, vector<8x24xf32> -> vector<8x24xf32>
    %cst_12 = arith.constant dense<0xFF800000> : vector<8xf32>
    %34 = vector.multi_reduction <maximumf>, %33, %cst_12 [1] : vector<8x24xf32> to vector<8xf32>
    %35 = vector.shape_cast %34 : vector<8xf32> to vector<8x1xf32>
    %36 = vector.broadcast %35 : vector<8x1xf32> to vector<8x24xf32>
    %37 = arith.subf %33, %36 : vector<8x24xf32>
    %38 = math.exp %37 : vector<8x24xf32>
    %cst_13 = arith.constant dense<0.000000e+00> : vector<8xf32>
    %39 = vector.multi_reduction <add>, %38, %cst_13 [1] : vector<8x24xf32> to vector<8xf32>
    %40 = vector.shape_cast %39 : vector<8xf32> to vector<8x1xf32>
    %41 = vector.broadcast %40 : vector<8x1xf32> to vector<8x24xf32>
    %42 = arith.divf %38, %41 : vector<8x24xf32>
    %cst_14 = arith.constant dense<0.000000e+00> : vector<8x64xf32>
    %43 = tpu.matmul %42, %31, %cst_14 {dimension_numbers = #tpu.dot_dimension_numbers<[1], [0], [0], [1], [0, 0, 1, 1], [], []>} : vector<8x24xf32>, vector<24x64xf32>, vector<8x64xf32> -> vector<8x64xf32>
    %44 = vector.extract_strided_slice %11 {offsets = [0, 128], sizes = [8, 64], strides = [1, 1]} : vector<8x256xf32> to vector<8x64xf32>
    %45 = vector.extract_strided_slice %12 {offsets = [0, 128], sizes = [24, 64], strides = [1, 1]} : vector<24x256xf32> to vector<24x64xf32>
    %46 = vector.extract_strided_slice %13 {offsets = [0, 128], sizes = [24, 64], strides = [1, 1]} : vector<24x256xf32> to vector<24x64xf32>
    %47 = tpu.transpose %45, [1, 0] : vector<24x64xf32> -> vector<64x24xf32>
    %cst_15 = arith.constant dense<0.000000e+00> : vector<8x24xf32>
    %48 = tpu.matmul %44, %47, %cst_15 {dimension_numbers = #tpu.dot_dimension_numbers<[1], [0], [0], [1], [0, 0, 1, 1], [], []>} : vector<8x64xf32>, vector<64x24xf32>, vector<8x24xf32> -> vector<8x24xf32>
    %cst_16 = arith.constant dense<0xFF800000> : vector<8xf32>
    %49 = vector.multi_reduction <maximumf>, %48, %cst_16 [1] : vector<8x24xf32> to vector<8xf32>
    %50 = vector.shape_cast %49 : vector<8xf32> to vector<8x1xf32>
    %51 = vector.broadcast %50 : vector<8x1xf32> to vector<8x24xf32>
    %52 = arith.subf %48, %51 : vector<8x24xf32>
    %53 = math.exp %52 : vector<8x24xf32>
    %cst_17 = arith.constant dense<0.000000e+00> : vector<8xf32>
    %54 = vector.multi_reduction <add>, %53, %cst_17 [1] : vector<8x24xf32> to vector<8xf32>
    %55 = vector.shape_cast %54 : vector<8xf32> to vector<8x1xf32>
    %56 = vector.broadcast %55 : vector<8x1xf32> to vector<8x24xf32>
    %57 = arith.divf %53, %56 : vector<8x24xf32>
    %cst_18 = arith.constant dense<0.000000e+00> : vector<8x64xf32>
    %58 = tpu.matmul %57, %46, %cst_18 {dimension_numbers = #tpu.dot_dimension_numbers<[1], [0], [0], [1], [0, 0, 1, 1], [], []>} : vector<8x24xf32>, vector<24x64xf32>, vector<8x64xf32> -> vector<8x64xf32>
    %59 = vector.extract_strided_slice %11 {offsets = [0, 192], sizes = [8, 64], strides = [1, 1]} : vector<8x256xf32> to vector<8x64xf32>
    %60 = vector.extract_strided_slice %12 {offsets = [0, 192], sizes = [24, 64], strides = [1, 1]} : vector<24x256xf32> to vector<24x64xf32>
    %61 = vector.extract_strided_slice %13 {offsets = [0, 192], sizes = [24, 64], strides = [1, 1]} : vector<24x256xf32> to vector<24x64xf32>
    %62 = tpu.transpose %60, [1, 0] : vector<24x64xf32> -> vector<64x24xf32>
    %cst_19 = arith.constant dense<0.000000e+00> : vector<8x24xf32>
    %63 = tpu.matmul %59, %62, %cst_19 {dimension_numbers = #tpu.dot_dimension_numbers<[1], [0], [0], [1], [0, 0, 1, 1], [], []>} : vector<8x64xf32>, vector<64x24xf32>, vector<8x24xf32> -> vector<8x24xf32>
    %cst_20 = arith.constant dense<0xFF800000> : vector<8xf32>
    %64 = vector.multi_reduction <maximumf>, %63, %cst_20 [1] : vector<8x24xf32> to vector<8xf32>
    %65 = vector.shape_cast %64 : vector<8xf32> to vector<8x1xf32>
    %66 = vector.broadcast %65 : vector<8x1xf32> to vector<8x24xf32>
    %67 = arith.subf %63, %66 : vector<8x24xf32>
    %68 = math.exp %67 : vector<8x24xf32>
    %cst_21 = arith.constant dense<0.000000e+00> : vector<8xf32>
    %69 = vector.multi_reduction <add>, %68, %cst_21 [1] : vector<8x24xf32> to vector<8xf32>
    %70 = vector.shape_cast %69 : vector<8xf32> to vector<8x1xf32>
    %71 = vector.broadcast %70 : vector<8x1xf32> to vector<8x24xf32>
    %72 = arith.divf %68, %71 : vector<8x24xf32>
    %cst_22 = arith.constant dense<0.000000e+00> : vector<8x64xf32>
    %73 = tpu.matmul %72, %61, %cst_22 {dimension_numbers = #tpu.dot_dimension_numbers<[1], [0], [0], [1], [0, 0, 1, 1], [], []>} : vector<8x24xf32>, vector<24x64xf32>, vector<8x64xf32> -> vector<8x64xf32>
    %74 = tpu.concatenate %28, %43, %58, %73 in 1 : vector<8x64xf32>, vector<8x64xf32>, vector<8x64xf32>, vector<8x64xf32> -> vector<8x256xf32>
    %75 = arith.truncf %74 : vector<8x256xf32> to vector<8x256xbf16>
    %c0_23 = arith.constant 0 : index
    %c0_24 = arith.constant 0 : index
    %76 = vector.load %arg4[%c0_23, %c0_24] : memref<256x256xbf16, #tpu.memory_space<vmem>>, vector<256x256xbf16>
    %cst_25 = arith.constant dense<0.000000e+00> : vector<8x256xf32>
    %77 = tpu.matmul %75, %76, %cst_25 {dimension_numbers = #tpu.dot_dimension_numbers<[1], [0], [0], [1], [0, 0, 1, 1], [], []>} : vector<8x256xbf16>, vector<256x256xbf16>, vector<8x256xf32> -> vector<8x256xf32>
    %c0_26 = arith.constant 0 : index
    %c0_27 = arith.constant 0 : index
    %78 = vector.load %arg5[%c0_26, %c0_27] : memref<1x256xf32, #tpu.memory_space<vmem>>, vector<1x256xf32>
    %79 = vector.broadcast %78 : vector<1x256xf32> to vector<8x256xf32>
    %80 = arith.addf %77, %79 : vector<8x256xf32>
    %81 = arith.addf %2, %80 : vector<8x256xf32>
    %c0_28 = arith.constant 0 : index
    %c0_29 = arith.constant 0 : index
    %82 = vector.load %arg6[%c0_28, %c0_29] : memref<1x256xf32, #tpu.memory_space<vmem>>, vector<1x256xf32>
    %c0_30 = arith.constant 0 : index
    %c0_31 = arith.constant 0 : index
    %83 = vector.load %arg7[%c0_30, %c0_31] : memref<1x256xf32, #tpu.memory_space<vmem>>, vector<1x256xf32>
    %cst_32 = arith.constant dense<0.000000e+00> : vector<8xf32>
    %84 = vector.multi_reduction <add>, %81, %cst_32 [1] : vector<8x256xf32> to vector<8xf32>
    %85 = vector.shape_cast %84 : vector<8xf32> to vector<8x1xf32>
    %cst_33 = arith.constant 2.560000e+02 : f32
    %86 = vector.broadcast %cst_33 : f32 to vector<8x1xf32>
    %87 = arith.divf %85, %86 : vector<8x1xf32>
    %88 = vector.broadcast %87 : vector<8x1xf32> to vector<8x256xf32>
    %89 = arith.subf %81, %88 : vector<8x256xf32>
    %90 = arith.mulf %89, %89 : vector<8x256xf32>
    %cst_34 = arith.constant dense<0.000000e+00> : vector<8xf32>
    %91 = vector.multi_reduction <add>, %90, %cst_34 [1] : vector<8x256xf32> to vector<8xf32>
    %92 = vector.shape_cast %91 : vector<8xf32> to vector<8x1xf32>
    %cst_35 = arith.constant 2.560000e+02 : f32
    %93 = vector.broadcast %cst_35 : f32 to vector<8x1xf32>
    %94 = arith.divf %92, %93 : vector<8x1xf32>
    %cst_36 = arith.constant 9.99999974E-6 : f32
    %95 = vector.broadcast %cst_36 : f32 to vector<8x1xf32>
    %96 = arith.addf %94, %95 : vector<8x1xf32>
    %97 = math.rsqrt %96 : vector<8x1xf32>
    %98 = vector.broadcast %97 : vector<8x1xf32> to vector<8x256xf32>
    %99 = arith.mulf %89, %98 : vector<8x256xf32>
    %100 = vector.broadcast %82 : vector<1x256xf32> to vector<8x256xf32>
    %101 = arith.mulf %99, %100 : vector<8x256xf32>
    %102 = vector.broadcast %83 : vector<1x256xf32> to vector<8x256xf32>
    %103 = arith.addf %101, %102 : vector<8x256xf32>
    %104 = arith.truncf %103 : vector<8x256xf32> to vector<8x256xbf16>
    %c0_37 = arith.constant 0 : index
    %c0_38 = arith.constant 0 : index
    %105 = vector.load %arg8[%c0_37, %c0_38] : memref<256x512xbf16, #tpu.memory_space<vmem>>, vector<256x512xbf16>
    %cst_39 = arith.constant dense<0.000000e+00> : vector<8x512xf32>
    %106 = tpu.matmul %104, %105, %cst_39 {dimension_numbers = #tpu.dot_dimension_numbers<[1], [0], [0], [1], [0, 0, 1, 1], [], []>} : vector<8x256xbf16>, vector<256x512xbf16>, vector<8x512xf32> -> vector<8x512xf32>
    %c0_40 = arith.constant 0 : index
    %c0_41 = arith.constant 0 : index
    %107 = vector.load %arg9[%c0_40, %c0_41] : memref<1x512xf32, #tpu.memory_space<vmem>>, vector<1x512xf32>
    %108 = vector.broadcast %107 : vector<1x512xf32> to vector<8x512xf32>
    %109 = arith.addf %106, %108 : vector<8x512xf32>
    %cst_42 = arith.constant 0.000000e+00 : f32
    %110 = vector.broadcast %cst_42 : f32 to vector<8x512xf32>
    %111 = arith.maximumf %109, %110 : vector<8x512xf32>
    %112 = arith.truncf %111 : vector<8x512xf32> to vector<8x512xbf16>
    %c0_43 = arith.constant 0 : index
    %c0_44 = arith.constant 0 : index
    %113 = vector.load %arg10[%c0_43, %c0_44] : memref<512x256xbf16, #tpu.memory_space<vmem>>, vector<512x256xbf16>
    %cst_45 = arith.constant dense<0.000000e+00> : vector<8x256xf32>
    %114 = tpu.matmul %112, %113, %cst_45 {dimension_numbers = #tpu.dot_dimension_numbers<[1], [0], [0], [1], [0, 0, 1, 1], [], []>} : vector<8x512xbf16>, vector<512x256xbf16>, vector<8x256xf32> -> vector<8x256xf32>
    %c0_46 = arith.constant 0 : index
    %c0_47 = arith.constant 0 : index
    %115 = vector.load %arg11[%c0_46, %c0_47] : memref<1x256xf32, #tpu.memory_space<vmem>>, vector<1x256xf32>
    %116 = vector.broadcast %115 : vector<1x256xf32> to vector<8x256xf32>
    %117 = arith.addf %114, %116 : vector<8x256xf32>
    %118 = arith.addf %103, %117 : vector<8x256xf32>
    %c0_48 = arith.constant 0 : index
    %c0_49 = arith.constant 0 : index
    %119 = vector.load %arg12[%c0_48, %c0_49] : memref<1x256xf32, #tpu.memory_space<vmem>>, vector<1x256xf32>
    %c0_50 = arith.constant 0 : index
    %c0_51 = arith.constant 0 : index
    %120 = vector.load %arg13[%c0_50, %c0_51] : memref<1x256xf32, #tpu.memory_space<vmem>>, vector<1x256xf32>
    %cst_52 = arith.constant dense<0.000000e+00> : vector<8xf32>
    %121 = vector.multi_reduction <add>, %118, %cst_52 [1] : vector<8x256xf32> to vector<8xf32>
    %122 = vector.shape_cast %121 : vector<8xf32> to vector<8x1xf32>
    %cst_53 = arith.constant 2.560000e+02 : f32
    %123 = vector.broadcast %cst_53 : f32 to vector<8x1xf32>
    %124 = arith.divf %122, %123 : vector<8x1xf32>
    %125 = vector.broadcast %124 : vector<8x1xf32> to vector<8x256xf32>
    %126 = arith.subf %118, %125 : vector<8x256xf32>
    %127 = arith.mulf %126, %126 : vector<8x256xf32>
    %cst_54 = arith.constant dense<0.000000e+00> : vector<8xf32>
    %128 = vector.multi_reduction <add>, %127, %cst_54 [1] : vector<8x256xf32> to vector<8xf32>
    %129 = vector.shape_cast %128 : vector<8xf32> to vector<8x1xf32>
    %cst_55 = arith.constant 2.560000e+02 : f32
    %130 = vector.broadcast %cst_55 : f32 to vector<8x1xf32>
    %131 = arith.divf %129, %130 : vector<8x1xf32>
    %cst_56 = arith.constant 9.99999974E-6 : f32
    %132 = vector.broadcast %cst_56 : f32 to vector<8x1xf32>
    %133 = arith.addf %131, %132 : vector<8x1xf32>
    %134 = math.rsqrt %133 : vector<8x1xf32>
    %135 = vector.broadcast %134 : vector<8x1xf32> to vector<8x256xf32>
    %136 = arith.mulf %126, %135 : vector<8x256xf32>
    %137 = vector.broadcast %119 : vector<1x256xf32> to vector<8x256xf32>
    %138 = arith.mulf %136, %137 : vector<8x256xf32>
    %139 = vector.broadcast %120 : vector<1x256xf32> to vector<8x256xf32>
    %140 = arith.addf %138, %139 : vector<8x256xf32>
    %c0_57 = arith.constant 0 : index
    %c0_58 = arith.constant 0 : index
    %c0_59 = arith.constant 0 : index
    %141 = vector.load %arg14[%c0_57, %c0_58, %c0_59] : memref<1x8x256xf32, #tpu.memory_space<vmem>>, vector<1x8x256xf32>
    %142 = vector.shape_cast %141 : vector<1x8x256xf32> to vector<8x256xf32>
    %143 = vector.shape_cast %140 : vector<8x256xf32> to vector<1x8x256xf32>
    tpu.vector_store %arg14[%c0_57, %c0_58, %c0_59], %143 {strides = array<i32>} : memref<1x8x256xf32, #tpu.memory_space<vmem>>, vector<1x8x256xf32>,
    return
  }
  func.func @transform_0(%arg0: i32) -> (i32, i32, i32) {
    %c0_i32 = arith.constant 0 : i32
    %c0_i32_0 = arith.constant 0 : i32
    %c0_i32_1 = arith.constant 0 : i32
    return %arg0, %c0_i32, %c0_i32_0 : i32, i32, i32
  }
  func.func @transform_1(%arg0: i32) -> (i32, i32) {
    %c0_i32 = arith.constant 0 : i32
    %c0_i32_0 = arith.constant 0 : i32
    %c0_i32_1 = arith.constant 0 : i32
    return %c0_i32, %c0_i32_0 : i32, i32
  }
  func.func @transform_2(%arg0: i32) -> (i32, i32) {
    %c0_i32 = arith.constant 0 : i32
    %c0_i32_0 = arith.constant 0 : i32
    %c0_i32_1 = arith.constant 0 : i32
    return %c0_i32, %c0_i32_0 : i32, i32
  }
  func.func @transform_3(%arg0: i32) -> (i32, i32) {
    %c0_i32 = arith.constant 0 : i32
    %c0_i32_0 = arith.constant 0 : i32
    %c0_i32_1 = arith.constant 0 : i32
    return %c0_i32, %c0_i32_0 : i32, i32
  }
  func.func @transform_4(%arg0: i32) -> (i32, i32) {
    %c0_i32 = arith.constant 0 : i32
    %c0_i32_0 = arith.constant 0 : i32
    %c0_i32_1 = arith.constant 0 : i32
    return %c0_i32, %c0_i32_0 : i32, i32
  }
  func.func @transform_5(%arg0: i32) -> (i32, i32) {
    %c0_i32 = arith.constant 0 : i32
    %c0_i32_0 = arith.constant 0 : i32
    %c0_i32_1 = arith.constant 0 : i32
    return %c0_i32, %c0_i32_0 : i32, i32
  }
  func.func @transform_6(%arg0: i32) -> (i32, i32) {
    %c0_i32 = arith.constant 0 : i32
    %c0_i32_0 = arith.constant 0 : i32
    %c0_i32_1 = arith.constant 0 : i32
    return %c0_i32, %c0_i32_0 : i32, i32
  }
  func.func @transform_7(%arg0: i32) -> (i32, i32) {
    %c0_i32 = arith.constant 0 : i32
    %c0_i32_0 = arith.constant 0 : i32
    %c0_i32_1 = arith.constant 0 : i32
    return %c0_i32, %c0_i32_0 : i32, i32
  }
  func.func @transform_8(%arg0: i32) -> (i32, i32) {
    %c0_i32 = arith.constant 0 : i32
    %c0_i32_0 = arith.constant 0 : i32
    %c0_i32_1 = arith.constant 0 : i32
    return %c0_i32, %c0_i32_0 : i32, i32
  }
  func.func @transform_9(%arg0: i32) -> (i32, i32) {
    %c0_i32 = arith.constant 0 : i32
    %c0_i32_0 = arith.constant 0 : i32
    %c0_i32_1 = arith.constant 0 : i32
    return %c0_i32, %c0_i32_0 : i32, i32
  }
  func.func @transform_10(%arg0: i32) -> (i32, i32) {
    %c0_i32 = arith.constant 0 : i32
    %c0_i32_0 = arith.constant 0 : i32
    %c0_i32_1 = arith.constant 0 : i32
    return %c0_i32, %c0_i32_0 : i32, i32
  }
  func.func @transform_11(%arg0: i32) -> (i32, i32) {
    %c0_i32 = arith.constant 0 : i32
    %c0_i32_0 = arith.constant 0 : i32
    %c0_i32_1 = arith.constant 0 : i32
    return %c0_i32, %c0_i32_0 : i32, i32
  }
  func.func @transform_12(%arg0: i32) -> (i32, i32) {
    %c0_i32 = arith.constant 0 : i32
    %c0_i32_0 = arith.constant 0 : i32
    %c0_i32_1 = arith.constant 0 : i32
    return %c0_i32, %c0_i32_0 : i32, i32
  }
  func.func @transform_13(%arg0: i32) -> (i32, i32, i32) {
    %c0_i32 = arith.constant 0 : i32
    %c0_i32_0 = arith.constant 0 : i32
    %c0_i32_1 = arith.constant 0 : i32
    return %arg0, %c0_i32, %c0_i32_0 : i32, i32, i32
  }
}

</mosaic_0001>

<llo_original>
// kernel: tpu_custom_call.1
$region0: #{tpu_custom_call.1}
  #allocation0 [shape = 'u32[]', space=smem, size = 0x4, offset = 0x4, fixed_abs, tag = 'smem constant byte address 0x4 - core index']
  #allocation1 [shape = 'u32[144,128]{1,0:T(1,128)}', space=vmem, size = 0x12000, scoped, tag = 'internal scratch']
  %s0 = inlined_call_operand.hbm [shape: f32[2,24,256], index: 0, kind: input, shape index: {}]
  %s1 = inlined_call_operand.hbm [shape: bf16[256,768], index: 1, kind: input, shape index: {}]
  %s2 = inlined_call_operand.hbm [shape: f32[1,768], index: 2, kind: input, shape index: {}]
  %s3 = inlined_call_operand.hbm [shape: bf16[256,256], index: 3, kind: input, shape index: {}]
  %s4 = inlined_call_operand.vmem [shape: f32[1,256], index: 4, kind: input, shape index: {}]
  %s5 = inlined_call_operand.vmem [shape: f32[1,256], index: 5, kind: input, shape index: {}]
  %s6 = inlined_call_operand.vmem [shape: f32[1,256], index: 6, kind: input, shape index: {}]
  %s7 = inlined_call_operand.hbm [shape: bf16[256,512], index: 7, kind: input, shape index: {}]
  %s8 = inlined_call_operand.vmem [shape: f32[1,512], index: 8, kind: input, shape index: {}]
  %s9 = inlined_call_operand.hbm [shape: bf16[512,256], index: 9, kind: input, shape index: {}]
  %s10 = inlined_call_operand.vmem [shape: f32[1,256], index: 10, kind: input, shape index: {}]
  %s11 = inlined_call_operand.vmem [shape: f32[1,256], index: 11, kind: input, shape index: {}]
  %s12 = inlined_call_operand.vmem [shape: f32[1,256], index: 12, kind: input, shape index: {}]
  %s13 = inlined_call_operand.hbm [shape: f32[2,8,256], index: 13, kind: output, shape index: {}]
  %s14 = sld [smem:[#allocation0]]
  $region109: #{tpu_custom_call.1} parent=0
    _
  %s16 = ssub.s32 1, %s14
  %s17 = scalar_select 0, %s16, %s14
  $region1: #{tpu_custom_call.1} parent=0
    #allocation2 [shape = 'u8[49152]{0}', space=vmem, size = 0xc000, scoped, tag = 'input window, operand 0']
    #allocation3 [shape = 's32[2]{0}', space=sflag, size = 0x8, scoped, tag = 'scoped memory for tpu_custom_call.1']
    #allocation4 [shape = 's32[2]{0}', space=sflag, size = 0x8, scoped, tag = 'scoped memory for tpu_custom_call.1']
    #allocation5 [shape = 'u8[393216]{0}', space=vmem, size = 0x60000, scoped, tag = 'input window, operand 1, single buffered']
    #allocation6 [shape = 's32[1]{0}', space=sflag, size = 0x4, scoped, tag = 'scoped memory for tpu_custom_call.1']
    #allocation7 [shape = 'u8[3072]{0}', space=vmem, size = 0xc00, scoped, tag = 'input window, operand 2, single buffered']
    #allocation8 [shape = 'u8[131072]{0}', space=vmem, size = 0x20000, scoped, tag = 'input window, operand 3, single buffered']
    #allocation9 [shape = 's32[1]{0}', space=sflag, size = 0x4, scoped, tag = 'scoped memory for tpu_custom_call.1']
    #allocation10 [shape = 'u8[262144]{0}', space=vmem, size = 0x40000, scoped, tag = 'input window, operand 7, single buffered']
    #allocation11 [shape = 'u8[262144]{0}', space=vmem, size = 0x40000, scoped, tag = 'input window, operand 9, single buffered']
    #allocation12 [shape = 's32[1]{0}', space=sflag, size = 0x4, scoped, tag = 'scoped memory for tpu_custom_call.1']
    #allocation13 [shape = 'u8[16384]{0}', space=vmem, size = 0x4000, scoped, tag = 'output window, operand 0']
    %18 = vsyncpa [#allocation3], 0
    %s19 = scalar_lea.sflag [#allocation3], 1
    %20 = vsyncpa %s19, 0
    %21 = vsyncpa [#allocation6], 0
    %22 = vsyncpa [#allocation9], 0
    %23 = vsyncpa [#allocation12], 0
    %24 = vsyncpa [#allocation4], 0
    %s25 = scalar_lea.sflag [#allocation4], 1
    %26 = vsyncpa %s25, 0
    loop: start=0, step=1, limit=4
    $region2: #{tpu_custom_call.1} parent=1 // loop_pre_header
      _
    $region3: #{tpu_custom_call.1} parent=1 // loop_header
      %s28 = sphi 0, %s32
      %p29 = scmp.ge.s32.totalorder %s28, 4
      %s38 = sphi 0, %s40
      %s41 = sphi 0, %s38
      %s42 = sphi 0, %s41
      %s58 = sphi 0, %s42
      %s62 = sphi 0, %s62
      %s64 = sphi 0, %s62
      %s65 = sphi 0, %s64
      %s79 = sphi 0, %s65
      %s83 = sphi 0, %s83
      %s85 = sphi 0, %s83
      %s86 = sphi 0, %s85
      %s100 = sphi 0, %s86
      %s104 = sphi 0, %s104
      %s106 = sphi 0, %s104
      %s107 = sphi 0, %s106
      %s121 = sphi 0, %s107
      %s125 = sphi 0, %s125
      %s127 = sphi 0, %s125
      %s128 = sphi 0, %s127
      %s142 = sphi 0, %s128
      %s146 = sphi 0, %s146
      %s148 = sphi 0, %s146
      %s149 = sphi 0, %s148
      %s163 = sphi 0, %s149
      %s167 = sphi 0, %s167
      %s169 = sphi 0, %s167
      %s170 = sphi 0, %s169
      %s184 = sphi 0, %s170
      %s188 = sphi 0, %s188
      %s190 = sphi 0, %s188
      %s191 = sphi 0, %s190
      %s205 = sphi 0, %s191
      %s209 = sphi 0, %s209
      %s211 = sphi 0, %s209
      %s212 = sphi 0, %s211
      %s226 = sphi 0, %s212
      %s230 = sphi 0, %s230
      %s232 = sphi 0, %s230
      %s233 = sphi 0, %s232
      %s247 = sphi 0, %s233
      %s251 = sphi 0, %s251
      %s253 = sphi 0, %s251
      %s254 = sphi 0, %s253
      %s268 = sphi 0, %s254
      %s272 = sphi 0, %s272
      %s274 = sphi 0, %s272
      %s275 = sphi 0, %s274
      %s289 = sphi 0, %s275
      %s293 = sphi 0, %s293
      %s295 = sphi 0, %s293
      %s296 = sphi 0, %s295
      %s310 = sphi 0, %s296
      %s316 = sphi 0, %s318
      %s319 = sphi 0, %s316
      %s320 = sphi 0, %s319
      %s336 = sphi 0, %s320
    $region4: #{tpu_custom_call.1} parent=1 // loop_header_branch
      %31 = sbr.rel (%p29) target = $region8
    $region5: #{tpu_custom_call.1} parent=1 // loop_body
      %s33 = ssub.s32 %s28, 1
      %s34 = ssub.s32 %s28, 2
      %s35 = sadd.s32 %s28, 1
      %s36 = ssub.s32 %s28, %s35
      %p37 = scmp.eq.s32.totalorder %s36, 0
      %s39 = sadd.s32 %s38, 1
      %s40 = scalar_select %p37, %s38, %s39
      %p43 = pneg %p37
      %p44 = scmp.eq.s32.totalorder %s28, 1
      %p45 = por %p43, %p44
      %p46 = scmp.ne.s32.totalorder %s38, %s41
      %p47 = scmp.eq.s32.totalorder %s28, 0
      %p48 = por %p46, %p47
      %p49 = scmp.ne.s32.totalorder %s38, %s41
      %p50 = scmp.eq.s32.totalorder %s33, 1
      %p51 = por %p49, %p50
      %p52 = scmp.ne.s32.totalorder %s41, %s42
      %p53 = scmp.eq.s32.totalorder %s33, 0
      %p54 = por %p52, %p53
      %p55 = scmp.ne.s32.totalorder %s41, %s42
      %p56 = scmp.eq.s32.totalorder %s34, 1
      %p57 = por %p55, %p56
      %p59 = scmp.ne.s32.totalorder %s42, %s58
      %p60 = scmp.eq.s32.totalorder %s34, 0
      %p61 = por %p59, %p60
      %s63 = sadd.s32 %s62, 1
      %p66 = scmp.eq.s32.totalorder %s28, 1
      %p67 = scmp.ne.s32.totalorder %s62, %s64
      %p68 = scmp.eq.s32.totalorder %s28, 0
      %p69 = por %p67, %p68
      %p70 = scmp.ne.s32.totalorder %s62, %s64
      %p71 = scmp.eq.s32.totalorder %s33, 1
      %p72 = por %p70, %p71
      %p73 = scmp.ne.s32.totalorder %s64, %s65
      %p74 = scmp.eq.s32.totalorder %s33, 0
      %p75 = por %p73, %p74
      %p76 = scmp.ne.s32.totalorder %s64, %s65
      %p77 = scmp.eq.s32.totalorder %s34, 1
      %p78 = por %p76, %p77
      %p80 = scmp.ne.s32.totalorder %s65, %s79
      %p81 = scmp.eq.s32.totalorder %s34, 0
      %p82 = por %p80, %p81
      %s84 = sadd.s32 %s83, 1
      %p87 = scmp.eq.s32.totalorder %s28, 1
      %p88 = scmp.ne.s32.totalorder %s83, %s85
      %p89 = scmp.eq.s32.totalorder %s28, 0
      %p90 = por %p88, %p89
      %p91 = scmp.ne.s32.totalorder %s83, %s85
      %p92 = scmp.eq.s32.totalorder %s33, 1
      %p93 = por %p91, %p92
      %p94 = scmp.ne.s32.totalorder %s85, %s86
      %p95 = scmp.eq.s32.totalorder %s33, 0
      %p96 = por %p94, %p95
      %p97 = scmp.ne.s32.totalorder %s85, %s86
      %p98 = scmp.eq.s32.totalorder %s34, 1
      %p99 = por %p97, %p98
      %p101 = scmp.ne.s32.totalorder %s86, %s100
      %p102 = scmp.eq.s32.totalorder %s34, 0
      %p103 = por %p101, %p102
      %s105 = sadd.s32 %s104, 1
      %p108 = scmp.eq.s32.totalorder %s28, 1
      %p109 = scmp.ne.s32.totalorder %s104, %s106
      %p110 = scmp.eq.s32.totalorder %s28, 0
      %p111 = por %p109, %p110
      %p112 = scmp.ne.s32.totalorder %s104, %s106
      %p113 = scmp.eq.s32.totalorder %s33, 1
      %p114 = por %p112, %p113
      %p115 = scmp.ne.s32.totalorder %s106, %s107
      %p116 = scmp.eq.s32.totalorder %s33, 0
      %p117 = por %p115, %p116
      %p118 = scmp.ne.s32.totalorder %s106, %s107
      %p119 = scmp.eq.s32.totalorder %s34, 1
      %p120 = por %p118, %p119
      %p122 = scmp.ne.s32.totalorder %s107, %s121
      %p123 = scmp.eq.s32.totalorder %s34, 0
      %p124 = por %p122, %p123
      %s126 = sadd.s32 %s125, 1
      %p129 = scmp.eq.s32.totalorder %s28, 1
      %p130 = scmp.ne.s32.totalorder %s125, %s127
      %p131 = scmp.eq.s32.totalorder %s28, 0
      %p132 = por %p130, %p131
      %p133 = scmp.ne.s32.totalorder %s125, %s127
      %p134 = scmp.eq.s32.totalorder %s33, 1
      %p135 = por %p133, %p134
      %p136 = scmp.ne.s32.totalorder %s127, %s128
      %p137 = scmp.eq.s32.totalorder %s33, 0
      %p138 = por %p136, %p137
      %p139 = scmp.ne.s32.totalorder %s127, %s128
      %p140 = scmp.eq.s32.totalorder %s34, 1
      %p141 = por %p139, %p140
      %p143 = scmp.ne.s32.totalorder %s128, %s142
      %p144 = scmp.eq.s32.totalorder %s34, 0
      %p145 = por %p143, %p144
      %s147 = sadd.s32 %s146, 1
      %p150 = scmp.eq.s32.totalorder %s28, 1
      %p151 = scmp.ne.s32.totalorder %s146, %s148
      %p152 = scmp.eq.s32.totalorder %s28, 0
      %p153 = por %p151, %p152
      %p154 = scmp.ne.s32.totalorder %s146, %s148
      %p155 = scmp.eq.s32.totalorder %s33, 1
      %p156 = por %p154, %p155
      %p157 = scmp.ne.s32.totalorder %s148, %s149
      %p158 = scmp.eq.s32.totalorder %s33, 0
      %p159 = por %p157, %p158
      %p160 = scmp.ne.s32.totalorder %s148, %s149
      %p161 = scmp.eq.s32.totalorder %s34, 1
      %p162 = por %p160, %p161
      %p164 = scmp.ne.s32.totalorder %s149, %s163
      %p165 = scmp.eq.s32.totalorder %s34, 0
      %p166 = por %p164, %p165
      %s168 = sadd.s32 %s167, 1
      %p171 = scmp.eq.s32.totalorder %s28, 1
      %p172 = scmp.ne.s32.totalorder %s167, %s169
      %p173 = scmp.eq.s32.totalorder %s28, 0
      %p174 = por %p172, %p173
      %p175 = scmp.ne.s32.totalorder %s167, %s169
      %p176 = scmp.eq.s32.totalorder %s33, 1
      %p177 = por %p175, %p176
      %p178 = scmp.ne.s32.totalorder %s169, %s170
      %p179 = scmp.eq.s32.totalorder %s33, 0
      %p180 = por %p178, %p179
      %p181 = scmp.ne.s32.totalorder %s169, %s170
      %p182 = scmp.eq.s32.totalorder %s34, 1
      %p183 = por %p181, %p182
      %p185 = scmp.ne.s32.totalorder %s170, %s184
      %p186 = scmp.eq.s32.totalorder %s34, 0
      %p187 = por %p185, %p186
      %s189 = sadd.s32 %s188, 1
      %p192 = scmp.eq.s32.totalorder %s28, 1
      %p193 = scmp.ne.s32.totalorder %s188, %s190
      %p194 = scmp.eq.s32.totalorder %s28, 0
      %p195 = por %p193, %p194
      %p196 = scmp.ne.s32.totalorder %s188, %s190
      %p197 = scmp.eq.s32.totalorder %s33, 1
      %p198 = por %p196, %p197
      %p199 = scmp.ne.s32.totalorder %s190, %s191
      %p200 = scmp.eq.s32.totalorder %s33, 0
      %p201 = por %p199, %p200
      %p202 = scmp.ne.s32.totalorder %s190, %s191
      %p203 = scmp.eq.s32.totalorder %s34, 1
      %p204 = por %p202, %p203
      %p206 = scmp.ne.s32.totalorder %s191, %s205
      %p207 = scmp.eq.s32.totalorder %s34, 0
      %p208 = por %p206, %p207
      %s210 = sadd.s32 %s209, 1
      %p213 = scmp.eq.s32.totalorder %s28, 1
      %p214 = scmp.ne.s32.totalorder %s209, %s211
      %p215 = scmp.eq.s32.totalorder %s28, 0
      %p216 = por %p214, %p215
      %p217 = scmp.ne.s32.totalorder %s209, %s211
      %p218 = scmp.eq.s32.totalorder %s33, 1
      %p219 = por %p217, %p218
      %p220 = scmp.ne.s32.totalorder %s211, %s212
      %p221 = scmp.eq.s32.totalorder %s33, 0
      %p222 = por %p220, %p221
      %p223 = scmp.ne.s32.totalorder %s211, %s212
      %p224 = scmp.eq.s32.totalorder %s34, 1
      %p225 = por %p223, %p224
      %p227 = scmp.ne.s32.totalorder %s212, %s226
      %p228 = scmp.eq.s32.totalorder %s34, 0
      %p229 = por %p227, %p228
      %s231 = sadd.s32 %s230, 1
      %p234 = scmp.eq.s32.totalorder %s28, 1
      %p235 = scmp.ne.s32.totalorder %s230, %s232
      %p236 = scmp.eq.s32.totalorder %s28, 0
      %p237 = por %p235, %p236
      %p238 = scmp.ne.s32.totalorder %s230, %s232
      %p239 = scmp.eq.s32.totalorder %s33, 1
      %p240 = por %p238, %p239
      %p241 = scmp.ne.s32.totalorder %s232, %s233
      %p242 = scmp.eq.s32.totalorder %s33, 0
      %p243 = por %p241, %p242
      %p244 = scmp.ne.s32.totalorder %s232, %s233
      %p245 = scmp.eq.s32.totalorder %s34, 1
      %p246 = por %p244, %p245
      %p248 = scmp.ne.s32.totalorder %s233, %s247
      %p249 = scmp.eq.s32.totalorder %s34, 0
      %p250 = por %p248, %p249
      %s252 = sadd.s32 %s251, 1
      %p255 = scmp.eq.s32.totalorder %s28, 1
      %p256 = scmp.ne.s32.totalorder %s251, %s253
      %p257 = scmp.eq.s32.totalorder %s28, 0
      %p258 = por %p256, %p257
      %p259 = scmp.ne.s32.totalorder %s251, %s253
      %p260 = scmp.eq.s32.totalorder %s33, 1
      %p261 = por %p259, %p260
      %p262 = scmp.ne.s32.totalorder %s253, %s254
      %p263 = scmp.eq.s32.totalorder %s33, 0
      %p264 = por %p262, %p263
      %p265 = scmp.ne.s32.totalorder %s253, %s254
      %p266 = scmp.eq.s32.totalorder %s34, 1
      %p267 = por %p265, %p266
      %p269 = scmp.ne.s32.totalorder %s254, %s268
      %p270 = scmp.eq.s32.totalorder %s34, 0
      %p271 = por %p269, %p270
      %s273 = sadd.s32 %s272, 1
      %p276 = scmp.eq.s32.totalorder %s28, 1
      %p277 = scmp.ne.s32.totalorder %s272, %s274
      %p278 = scmp.eq.s32.totalorder %s28, 0
      %p279 = por %p277, %p278
      %p280 = scmp.ne.s32.totalorder %s272, %s274
      %p281 = scmp.eq.s32.totalorder %s33, 1
      %p282 = por %p280, %p281
      %p283 = scmp.ne.s32.totalorder %s274, %s275
      %p284 = scmp.eq.s32.totalorder %s33, 0
      %p285 = por %p283, %p284
      %p286 = scmp.ne.s32.totalorder %s274, %s275
      %p287 = scmp.eq.s32.totalorder %s34, 1
      %p288 = por %p286, %p287
      %p290 = scmp.ne.s32.totalorder %s275, %s289
      %p291 = scmp.eq.s32.totalorder %s34, 0
      %p292 = por %p290, %p291
      %s294 = sadd.s32 %s293, 1
      %p297 = scmp.eq.s32.totalorder %s28, 1
      %p298 = scmp.ne.s32.totalorder %s293, %s295
      %p299 = scmp.eq.s32.totalorder %s28, 0
      %p300 = por %p298, %p299
      %p301 = scmp.ne.s32.totalorder %s293, %s295
      %p302 = scmp.eq.s32.totalorder %s33, 1
      %p303 = por %p301, %p302
      %p304 = scmp.ne.s32.totalorder %s295, %s296
      %p305 = scmp.eq.s32.totalorder %s33, 0
      %p306 = por %p304, %p305
      %p307 = scmp.ne.s32.totalorder %s295, %s296
      %p308 = scmp.eq.s32.totalorder %s34, 1
      %p309 = por %p307, %p308
      %p311 = scmp.ne.s32.totalorder %s296, %s310
      %p312 = scmp.eq.s32.totalorder %s34, 0
      %p313 = por %p311, %p312
      %s314 = ssub.s32 %s28, %s35
      %p315 = scmp.eq.s32.totalorder %s314, 0
      %s317 = sadd.s32 %s316, 1
      %s318 = scalar_select %p315, %s316, %s317
      %p321 = pneg %p315
      %p322 = scmp.eq.s32.totalorder %s28, 1
      %p323 = por %p321, %p322
      %p324 = scmp.ne.s32.totalorder %s316, %s319
      %p325 = scmp.eq.s32.totalorder %s28, 0
      %p326 = por %p324, %p325
      %p327 = scmp.ne.s32.totalorder %s316, %s319
      %p328 = scmp.eq.s32.totalorder %s33, 1
      %p329 = por %p327, %p328
      %p330 = scmp.ne.s32.totalorder %s319, %s320
      %p331 = scmp.eq.s32.totalorder %s33, 0
      %p332 = por %p330, %p331
      %p333 = scmp.ne.s32.totalorder %s319, %s320
      %p334 = scmp.eq.s32.totalorder %s34, 1
      %p335 = por %p333, %p334
      %p337 = scmp.ne.s32.totalorder %s320, %s336
      %p338 = scmp.eq.s32.totalorder %s34, 0
      %p339 = por %p337, %p338
      %p340 = scmp.le.s32.totalorder 1, %s28
      %p341 = scmp.lt.s32.totalorder %s28, 3
      %p342 = pnand %p340, %p341
      %p343 = pneg %p342
      // Predicated region
      $region9: #{tpu_custom_call.1} parent=5 // pred_check
        _
      $region10: #{tpu_custom_call.1} parent=5 // pred_check_branch
        %345 = sbr.rel (%p342) target = $region12
      $region11: #{tpu_custom_call.1} parent=5 // pred_region
        %s346 = ssub.s32 %s28, 1
        // Predicated region
        $region13: #{tpu_custom_call.1} parent=11 // pred_check
          %p347 = pneg %p75
        $region14: #{tpu_custom_call.1} parent=11 // pred_check_branch
          %349 = sbr.rel (%p347) target = $region16
        $region15: #{tpu_custom_call.1} parent=11 // pred_region
          %s351 = ssub.s32 12288, 12288
          %352 = vsyncadd [#allocation6], %s351
          %s353 = sshll.u32 [#allocation5], 4
          %s354 = int_to_ptr.vmem [resolvable:$true] %s353
          %359 = dma.hbm_to_vmem [thread:$0]  %s1, 12288, %s354, [#allocation6], 384, 384, 24
        $region16: #{tpu_custom_call.1} parent=11 // pred_fallthru
          _
        // Predicated region
        $region17: #{tpu_custom_call.1} parent=11 // pred_check
          %p360 = pneg %p96
        $region18: #{tpu_custom_call.1} parent=11 // pred_check_branch
          %362 = sbr.rel (%p360) target = $region20
        $region19: #{tpu_custom_call.1} parent=11 // pred_region
          %s364 = ssub.s32 96, 96
          %365 = vsyncadd [#allocation6], %s364
          %s367 = sshll.u32 [#allocation7], 4
          %s368 = int_to_ptr.vmem [resolvable:$true] %s367
          %370 = dma.hbm_to_vmem [thread:$0]  %s2, 96, %s368, [#allocation6]
        $region20: #{tpu_custom_call.1} parent=11 // pred_fallthru
          _
        // Predicated region
        $region21: #{tpu_custom_call.1} parent=11 // pred_check
          %p371 = pneg %p117
        $region22: #{tpu_custom_call.1} parent=11 // pred_check_branch
          %373 = sbr.rel (%p371) target = $region24
        $region23: #{tpu_custom_call.1} parent=11 // pred_region
          %s375 = ssub.s32 4096, 4096
          %376 = vsyncadd [#allocation9], %s375
          %s377 = sshll.u32 [#allocation8], 4
          %s378 = int_to_ptr.vmem [resolvable:$true] %s377
          %383 = dma.hbm_to_vmem [thread:$0]  %s3, 4096, %s378, [#allocation9], 128, 128, 8
        $region24: #{tpu_custom_call.1} parent=11 // pred_fallthru
          _
        // Predicated region
        $region25: #{tpu_custom_call.1} parent=11 // pred_check
          %p384 = pneg %p138
        $region26: #{tpu_custom_call.1} parent=11 // pred_check_branch
          %386 = sbr.rel (%p384) target = $region28
        $region27: #{tpu_custom_call.1} parent=11 // pred_region
          _
        $region28: #{tpu_custom_call.1} parent=11 // pred_fallthru
          _
        // Predicated region
        $region29: #{tpu_custom_call.1} parent=11 // pred_check
          %p387 = pneg %p159
        $region30: #{tpu_custom_call.1} parent=11 // pred_check_branch
          %389 = sbr.rel (%p387) target = $region32
        $region31: #{tpu_custom_call.1} parent=11 // pred_region
          _
        $region32: #{tpu_custom_call.1} parent=11 // pred_fallthru
          _
        // Predicated region
        $region33: #{tpu_custom_call.1} parent=11 // pred_check
          %p390 = pneg %p180
        $region34: #{tpu_custom_call.1} parent=11 // pred_check_branch
          %392 = sbr.rel (%p390) target = $region36
        $region35: #{tpu_custom_call.1} parent=11 // pred_region
          _
        $region36: #{tpu_custom_call.1} parent=11 // pred_fallthru
          _
        // Predicated region
        $region37: #{tpu_custom_call.1} parent=11 // pred_check
          %p393 = pneg %p201
        $region38: #{tpu_custom_call.1} parent=11 // pred_check_branch
          %395 = sbr.rel (%p393) target = $region40
        $region39: #{tpu_custom_call.1} parent=11 // pred_region
          %s397 = ssub.s32 8192, 8192
          %398 = vsyncadd [#allocation9], %s397
          %s399 = sshll.u32 [#allocation10], 4
          %s400 = int_to_ptr.vmem [resolvable:$true] %s399
          %405 = dma.hbm_to_vmem [thread:$0]  %s7, 8192, %s400, [#allocation9], 256, 256, 16
        $region40: #{tpu_custom_call.1} parent=11 // pred_fallthru
          _
        // Predicated region
        $region41: #{tpu_custom_call.1} parent=11 // pred_check
          %p406 = pneg %p222
        $region42: #{tpu_custom_call.1} parent=11 // pred_check_branch
          %408 = sbr.rel (%p406) target = $region44
        $region43: #{tpu_custom_call.1} parent=11 // pred_region
          _
        $region44: #{tpu_custom_call.1} parent=11 // pred_fallthru
          _
        // Predicated region
        $region45: #{tpu_custom_call.1} parent=11 // pred_check
          %p409 = pneg %p243
        $region46: #{tpu_custom_call.1} parent=11 // pred_check_branch
          %411 = sbr.rel (%p409) target = $region48
        $region47: #{tpu_custom_call.1} parent=11 // pred_region
          %s413 = ssub.s32 8192, 8192
          %414 = vsyncadd [#allocation12], %s413
          %s415 = sshll.u32 [#allocation11], 4
          %s416 = int_to_ptr.vmem [resolvable:$true] %s415
          %421 = dma.hbm_to_vmem [thread:$0]  %s9, 8192, %s416, [#allocation12], 128, 128, 8
        $region48: #{tpu_custom_call.1} parent=11 // pred_fallthru
          _
        // Predicated region
        $region49: #{tpu_custom_call.1} parent=11 // pred_check
          %p422 = pneg %p264
        $region50: #{tpu_custom_call.1} parent=11 // pred_check_branch
          %424 = sbr.rel (%p422) target = $region52
        $region51: #{tpu_custom_call.1} parent=11 // pred_region
          _
        $region52: #{tpu_custom_call.1} parent=11 // pred_fallthru
          _
        // Predicated region
        $region53: #{tpu_custom_call.1} parent=11 // pred_check
          %p425 = pneg %p285
        $region54: #{tpu_custom_call.1} parent=11 // pred_check_branch
          %427 = sbr.rel (%p425) target = $region56
        $region55: #{tpu_custom_call.1} parent=11 // pred_region
          _
        $region56: #{tpu_custom_call.1} parent=11 // pred_fallthru
          _
        // Predicated region
        $region57: #{tpu_custom_call.1} parent=11 // pred_check
          %p428 = pneg %p306
        $region58: #{tpu_custom_call.1} parent=11 // pred_check_branch
          %430 = sbr.rel (%p428) target = $region60
        $region59: #{tpu_custom_call.1} parent=11 // pred_region
          _
        $region60: #{tpu_custom_call.1} parent=11 // pred_fallthru
          _
      $region12: #{tpu_custom_call.1} parent=5 // pred_fallthru
        _
      %p431 = scmp.lt.s32.totalorder %s28, 2
      // Predicated region
      $region61: #{tpu_custom_call.1} parent=5 // pred_check
        %p432 = pneg %p431
      $region62: #{tpu_custom_call.1} parent=5 // pred_check_branch
        %434 = sbr.rel (%p432) target = $region64
      $region63: #{tpu_custom_call.1} parent=5 // pred_region
        // Predicated region
        $region65: #{tpu_custom_call.1} parent=63 // pred_check
          %p435 = pneg %p48
        $region66: #{tpu_custom_call.1} parent=63 // pred_check_branch
          %437 = sbr.rel (%p435) target = $region68
        $region67: #{tpu_custom_call.1} parent=63 // pred_region
          %s438 = sand.u32 %s38, 1
          %s439 = scalar_lea.sflag [#allocation3], %s438
          %s440 = sand.u32 %s38, 1
          %s441 = smul.addr %s440, 48
          %s442 = scalar_lea.vmem [#allocation2], %s441
          %s444 = ssub.s32 768, 768
          %445 = vsyncadd %s439, %s444
          %s446 = smul.addr %s28, 6
          %s447 = smul.addr %s446, 128
          %s448 = scalar_lea.hbm %s0, %s447
          %s449 = sshll.u32 %s442, 4
          %s450 = int_to_ptr.vmem [resolvable:$true] %s449
          %455 = dma.hbm_to_vmem [thread:$0]  %s448, 768, %s450, %s439, 256, 256, 16
        $region68: #{tpu_custom_call.1} parent=63 // pred_fallthru
          _
      $region64: #{tpu_custom_call.1} parent=5 // pred_fallthru
        _
      %p456 = scmp.le.s32.totalorder 1, %s28
      %p457 = scmp.lt.s32.totalorder %s28, 3
      %p458 = pnand %p456, %p457
      %p459 = pneg %p458
      // Predicated region
      $region69: #{tpu_custom_call.1} parent=5 // pred_check
        _
      $region70: #{tpu_custom_call.1} parent=5 // pred_check_branch
        %461 = sbr.rel (%p458) target = $region72
      $region71: #{tpu_custom_call.1} parent=5 // pred_region
        %s462 = ssub.s32 %s28, 1
        %s463 = sand.u32 %s41, 1
        %s464 = scalar_lea.sflag [#allocation3], %s463
        %s465 = sand.u32 %s41, 1
        %s466 = smul.addr %s465, 48
        %s467 = scalar_lea.vmem [#allocation2], %s466
        // Predicated region
        $region73: #{tpu_custom_call.1} parent=71 // pred_check
          %p468 = pneg %p54
        $region74: #{tpu_custom_call.1} parent=71 // pred_check_branch
          %470 = sbr.rel (%p468) target = $region76
        $region75: #{tpu_custom_call.1} parent=71 // pred_region
          %471 = dma.done %s464, 768
        $region76: #{tpu_custom_call.1} parent=71 // pred_fallthru
          _
        // Predicated region
        $region77: #{tpu_custom_call.1} parent=71 // pred_check
          %p472 = pneg %p75
        $region78: #{tpu_custom_call.1} parent=71 // pred_check_branch
          %474 = sbr.rel (%p472) target = $region80
        $region79: #{tpu_custom_call.1} parent=71 // pred_region
          %475 = dma.done [#allocation6], 12288
        $region80: #{tpu_custom_call.1} parent=71 // pred_fallthru
          _
        // Predicated region
        $region81: #{tpu_custom_call.1} parent=71 // pred_check
          %p476 = pneg %p96
        $region82: #{tpu_custom_call.1} parent=71 // pred_check_branch
          %478 = sbr.rel (%p476) target = $region84
        $region83: #{tpu_custom_call.1} parent=71 // pred_region
          %479 = dma.done [#allocation6], 96
        $region84: #{tpu_custom_call.1} parent=71 // pred_fallthru
          _
        // Predicated region
        $region85: #{tpu_custom_call.1} parent=71 // pred_check
          %p480 = pneg %p117
        $region86: #{tpu_custom_call.1} parent=71 // pred_check_branch
          %482 = sbr.rel (%p480) target = $region88
        $region87: #{tpu_custom_call.1} parent=71 // pred_region
          %483 = dma.done [#allocation9], 4096
        $region88: #{tpu_custom_call.1} parent=71 // pred_fallthru
          _
        // Predicated region
        $region89: #{tpu_custom_call.1} parent=71 // pred_check
          %p484 = pneg %p201
        $region90: #{tpu_custom_call.1} parent=71 // pred_check_branch
          %486 = sbr.rel (%p484) target = $region92
        $region91: #{tpu_custom_call.1} parent=71 // pred_region
          %487 = dma.done [#allocation9], 8192
        $region92: #{tpu_custom_call.1} parent=71 // pred_fallthru
          _
        // Predicated region
        $region93: #{tpu_custom_call.1} parent=71 // pred_check
          %p488 = pneg %p243
        $region94: #{tpu_custom_call.1} parent=71 // pred_check_branch
          %490 = sbr.rel (%p488) target = $region96
        $region95: #{tpu_custom_call.1} parent=71 // pred_region
          %491 = dma.done [#allocation12], 8192
        $region96: #{tpu_custom_call.1} parent=71 // pred_fallthru
          _
        %s492 = sand.u32 %s41, 1
        %s493 = scalar_lea.sflag [#allocation3], %s492
        %s494 = sand.u32 %s41, 1
        %s495 = smul.addr %s494, 48
        %s496 = scalar_lea.vmem [#allocation2], %s495
        %p497 = pneg %p54
        %p498 = pneg %p51
        %p499 = pneg %p75
        %p500 = pneg %p72
        %p501 = pneg %p96
        %p502 = pneg %p93
        %p503 = pneg %p117
        %p504 = pneg %p114
        %p505 = pneg %p138
        %p506 = pneg %p135
        %p507 = pneg %p159
        %p508 = pneg %p156
        %p509 = pneg %p180
        %p510 = pneg %p177
        %p511 = pneg %p201
        %p512 = pneg %p198
        %p513 = pneg %p222
        %p514 = pneg %p219
        %p515 = pneg %p243
        %p516 = pneg %p240
        %p517 = pneg %p264
        %p518 = pneg %p261
        %p519 = pneg %p285
        %p520 = pneg %p282
        %p521 = pneg %p306
        %p522 = pneg %p303
        %p523 = pneg %p332
        %p524 = pneg %p329
        %s525 = sand.u32 %s319, 1
        %s526 = scalar_lea.sflag [#allocation4], %s525
        %s527 = sand.u32 %s319, 1
        %s528 = smul.addr %s527, 16
        %s529 = scalar_lea.vmem [#allocation13], %s528
        %v530 = vld [vmem:[%s467] sm:$0xff]
        %v531 = vld [vmem:[%s467 + $0x8] sm:$0xff]
        %v532 = vld [vmem:[%s467 + $0x10] sm:$0xff]
        %v533 = vld [vmem:[%s467 + $0x18] sm:$0xff]
        %v534 = vld [vmem:[%s467 + $0x20] sm:$0xff]
        %v535 = vld [vmem:[%s467 + $0x28] sm:$0xff]
        %v536 = vpack.c.bf16 %v532, %v530
        %v537 = vpack.c.bf16 %v533, %v531
        %v538 = vpack.c.bf16 %v534, %v534
        %v539 = vpack.c.bf16 %v535, %v535
        %v540 = vld [vmem:[#allocation5] sm:$0xff]
        %v541 = vld [vmem:[#allocation5 + $0x8] sm:$0xff]
        %v542 = vld [vmem:[#allocation5 + $0x10] sm:$0xff]
        %v543 = vld [vmem:[#allocation5 + $0x18] sm:$0xff]
        %v544 = vld [vmem:[#allocation5 + $0x20] sm:$0xff]
        %v545 = vld [vmem:[#allocation5 + $0x28] sm:$0xff]
        %v546 = vld [vmem:[#allocation5 + $0x30] sm:$0xff]
        %v547 = vld [vmem:[#allocation5 + $0x38] sm:$0xff]
        %v548 = vld [vmem:[#allocation5 + $0x40] sm:$0xff]
        %v549 = vld [vmem:[#allocation5 + $0x48] sm:$0xff]
        %v550 = vld [vmem:[#allocation5 + $0x50] sm:$0xff]
        %v551 = vld [vmem:[#allocation5 + $0x58] sm:$0xff]
        %v552 = vld [vmem:[#allocation5 + $0x60] sm:$0xff]
        %v553 = vld [vmem:[#allocation5 + $0x68] sm:$0xff]
        %v554 = vld [vmem:[#allocation5 + $0x70] sm:$0xff]
        %v555 = vld [vmem:[#allocation5 + $0x78] sm:$0xff]
        %v556 = vld [vmem:[#allocation5 + $0x80] sm:$0xff]
        %v557 = vld [vmem:[#allocation5 + $0x88] sm:$0xff]
        %v558 = vld [vmem:[#allocation5 + $0x90] sm:$0xff]
        %v559 = vld [vmem:[#allocation5 + $0x98] sm:$0xff]
        %v560 = vld [vmem:[#allocation5 + $0xa0] sm:$0xff]
        %v561 = vld [vmem:[#allocation5 + $0xa8] sm:$0xff]
        %v562 = vld [vmem:[#allocation5 + $0xb0] sm:$0xff]
        %v563 = vld [vmem:[#allocation5 + $0xb8] sm:$0xff]
        %v564 = vld [vmem:[#allocation5 + $0xc0] sm:$0xff]
        %v565 = vld [vmem:[#allocation5 + $0xc8] sm:$0xff]
        %v566 = vld [vmem:[#allocation5 + $0xd0] sm:$0xff]
        %v567 = vld [vmem:[#allocation5 + $0xd8] sm:$0xff]
        %v568 = vld [vmem:[#allocation5 + $0xe0] sm:$0xff]
        %v569 = vld [vmem:[#allocation5 + $0xe8] sm:$0xff]
        %v570 = vld [vmem:[#allocation5 + $0xf0] sm:$0xff]
        %v571 = vld [vmem:[#allocation5 + $0xf8] sm:$0xff]
        %v572 = vld [vmem:[#allocation5 + $0x100] sm:$0xff]
        %v573 = vld [vmem:[#allocation5 + $0x108] sm:$0xff]
        %v574 = vld [vmem:[#allocation5 + $0x110] sm:$0xff]
        %v575 = vld [vmem:[#allocation5 + $0x118] sm:$0xff]
        %v576 = vld [vmem:[#allocation5 + $0x120] sm:$0xff]
        %v577 = vld [vmem:[#allocation5 + $0x128] sm:$0xff]
        %v578 = vld [vmem:[#allocation5 + $0x130] sm:$0xff]
        %v579 = vld [vmem:[#allocation5 + $0x138] sm:$0xff]
        %v580 = vld [vmem:[#allocation5 + $0x140] sm:$0xff]
        %v581 = vld [vmem:[#allocation5 + $0x148] sm:$0xff]
        %v582 = vld [vmem:[#allocation5 + $0x150] sm:$0xff]
        %v583 = vld [vmem:[#allocation5 + $0x158] sm:$0xff]
        %v584 = vld [vmem:[#allocation5 + $0x160] sm:$0xff]
        %v585 = vld [vmem:[#allocation5 + $0x168] sm:$0xff]
        %v586 = vld [vmem:[#allocation5 + $0x170] sm:$0xff]
        %v587 = vld [vmem:[#allocation5 + $0x178] sm:$0xff]
        %v588 = vld [vmem:[#allocation5 + $0x180] sm:$0xff]
        %v589 = vld [vmem:[#allocation5 + $0x188] sm:$0xff]
        %v590 = vld [vmem:[#allocation5 + $0x190] sm:$0xff]
        %v591 = vld [vmem:[#allocation5 + $0x198] sm:$0xff]
        %v592 = vld [vmem:[#allocation5 + $0x1a0] sm:$0xff]
        %v593 = vld [vmem:[#allocation5 + $0x1a8] sm:$0xff]
        %v594 = vld [vmem:[#allocation5 + $0x1b0] sm:$0xff]
        %v595 = vld [vmem:[#allocation5 + $0x1b8] sm:$0xff]
        %v596 = vld [vmem:[#allocation5 + $0x1c0] sm:$0xff]
        %v597 = vld [vmem:[#allocation5 + $0x1c8] sm:$0xff]
        %v598 = vld [vmem:[#allocation5 + $0x1d0] sm:$0xff]
        %v599 = vld [vmem:[#allocation5 + $0x1d8] sm:$0xff]
        %v600 = vld [vmem:[#allocation5 + $0x1e0] sm:$0xff]
        %v601 = vld [vmem:[#allocation5 + $0x1e8] sm:$0xff]
        %v602 = vld [vmem:[#allocation5 + $0x1f0] sm:$0xff]
        %v603 = vld [vmem:[#allocation5 + $0x1f8] sm:$0xff]
        %v604 = vld [vmem:[#allocation5 + $0x200] sm:$0xff]
        %v605 = vld [vmem:[#allocation5 + $0x208] sm:$0xff]
        %v606 = vld [vmem:[#allocation5 + $0x210] sm:$0xff]
        %v607 = vld [vmem:[#allocation5 + $0x218] sm:$0xff]
        %v608 = vld [vmem:[#allocation5 + $0x220] sm:$0xff]
        %v609 = vld [vmem:[#allocation5 + $0x228] sm:$0xff]
        %v610 = vld [vmem:[#allocation5 + $0x230] sm:$0xff]
        %v611 = vld [vmem:[#allocation5 + $0x238] sm:$0xff]
        %v612 = vld [vmem:[#allocation5 + $0x240] sm:$0xff]
        %v613 = vld [vmem:[#allocation5 + $0x248] sm:$0xff]
        %v614 = vld [vmem:[#allocation5 + $0x250] sm:$0xff]
        %v615 = vld [vmem:[#allocation5 + $0x258] sm:$0xff]
        %v616 = vld [vmem:[#allocation5 + $0x260] sm:$0xff]
        %v617 = vld [vmem:[#allocation5 + $0x268] sm:$0xff]
        %v618 = vld [vmem:[#allocation5 + $0x270] sm:$0xff]
        %v619 = vld [vmem:[#allocation5 + $0x278] sm:$0xff]
        %v620 = vld [vmem:[#allocation5 + $0x280] sm:$0xff]
        %v621 = vld [vmem:[#allocation5 + $0x288] sm:$0xff]
        %v622 = vld [vmem:[#allocation5 + $0x290] sm:$0xff]
        %v623 = vld [vmem:[#allocation5 + $0x298] sm:$0xff]
        %v624 = vld [vmem:[#allocation5 + $0x2a0] sm:$0xff]
        %v625 = vld [vmem:[#allocation5 + $0x2a8] sm:$0xff]
        %v626 = vld [vmem:[#allocation5 + $0x2b0] sm:$0xff]
        %v627 = vld [vmem:[#allocation5 + $0x2b8] sm:$0xff]
        %v628 = vld [vmem:[#allocation5 + $0x2c0] sm:$0xff]
        %v629 = vld [vmem:[#allocation5 + $0x2c8] sm:$0xff]
        %v630 = vld [vmem:[#allocation5 + $0x2d0] sm:$0xff]
        %v631 = vld [vmem:[#allocation5 + $0x2d8] sm:$0xff]
        %v632 = vld [vmem:[#allocation5 + $0x2e0] sm:$0xff]
        %v633 = vld [vmem:[#allocation5 + $0x2e8] sm:$0xff]
        %v634 = vld [vmem:[#allocation5 + $0x2f0] sm:$0xff]
        %v635 = vld [vmem:[#allocation5 + $0x2f8] sm:$0xff]
        %v636 = vld [vmem:[#allocation7] sm:$0x3f]
        %v638 = vlaneseq
        %v639 = vshrl.u32 %v638, 7
        %v640 = vsub.s32 0, %v639
        %v641 = vrot.slane %v636, %v640
        %v642 = vlaneseq
        %v643 = vshrl.u32 %v642, 7
        %v644 = vsub.s32 1, %v643
        %v645 = vrot.slane %v636, %v644
        %v646 = vlaneseq
        %v647 = vshrl.u32 %v646, 7
        %v648 = vsub.s32 2, %v647
        %v649 = vrot.slane %v636, %v648
        %v650 = vlaneseq
        %v651 = vshrl.u32 %v650, 7
        %v652 = vsub.s32 3, %v651
        %v653 = vrot.slane %v636, %v652
        %v654 = vlaneseq
        %v655 = vshrl.u32 %v654, 7
        %v656 = vsub.s32 4, %v655
        %v657 = vrot.slane %v636, %v656
        %v658 = vlaneseq
        %v659 = vshrl.u32 %v658, 7
        %v660 = vsub.s32 5, %v659
        %v661 = vrot.slane %v636, %v660
        %v764 = vunpack.c.l.b16 %v540
        %v765 = vunpack.c.h.b16 %v540
        %v766 = vunpack.c.l.b16 %v541
        %v767 = vunpack.c.h.b16 %v541
        %v768 = vunpack.c.l.b16 %v542
        %v769 = vunpack.c.h.b16 %v542
        %v770 = vunpack.c.l.b16 %v543
        %v771 = vunpack.c.h.b16 %v543
        %v772 = vunpack.c.l.b16 %v544
        %v773 = vunpack.c.h.b16 %v544
        %v774 = vunpack.c.l.b16 %v545
        %v775 = vunpack.c.h.b16 %v545
        %v776 = vunpack.c.l.b16 %v546
        %v777 = vunpack.c.h.b16 %v546
        %v778 = vunpack.c.l.b16 %v547
        %v779 = vunpack.c.h.b16 %v547
        %v780 = vunpack.c.l.b16 %v548
        %v781 = vunpack.c.h.b16 %v548
        %v782 = vunpack.c.l.b16 %v549
        %v783 = vunpack.c.h.b16 %v549
        %v784 = vunpack.c.l.b16 %v550
        %v785 = vunpack.c.h.b16 %v550
        %v786 = vunpack.c.l.b16 %v551
        %v787 = vunpack.c.h.b16 %v551
        %v788 = vunpack.c.l.b16 %v552
        %v789 = vunpack.c.h.b16 %v552
        %v790 = vunpack.c.l.b16 %v553
        %v791 = vunpack.c.h.b16 %v553
        %v792 = vunpack.c.l.b16 %v554
        %v793 = vunpack.c.h.b16 %v554
        %v794 = vunpack.c.l.b16 %v555
        %v795 = vunpack.c.h.b16 %v555
        %v796 = vunpack.c.l.b16 %v556
        %v797 = vunpack.c.h.b16 %v556
        %v798 = vunpack.c.l.b16 %v557
        %v799 = vunpack.c.h.b16 %v557
        %v800 = vunpack.c.l.b16 %v558
        %v801 = vunpack.c.h.b16 %v558
        %v802 = vunpack.c.l.b16 %v559
        %v803 = vunpack.c.h.b16 %v559
        %v804 = vunpack.c.l.b16 %v560
        %v805 = vunpack.c.h.b16 %v560
        %v806 = vunpack.c.l.b16 %v561
        %v807 = vunpack.c.h.b16 %v561
        %v808 = vunpack.c.l.b16 %v562
        %v809 = vunpack.c.h.b16 %v562
        %v810 = vunpack.c.l.b16 %v563
        %v811 = vunpack.c.h.b16 %v563
        %v812 = vunpack.c.l.b16 %v564
        %v813 = vunpack.c.h.b16 %v564
        %v814 = vunpack.c.l.b16 %v565
        %v815 = vunpack.c.h.b16 %v565
        %v816 = vunpack.c.l.b16 %v566
        %v817 = vunpack.c.h.b16 %v566
        %v818 = vunpack.c.l.b16 %v567
        %v819 = vunpack.c.h.b16 %v567
        %v820 = vunpack.c.l.b16 %v568
        %v821 = vunpack.c.h.b16 %v568
        %v822 = vunpack.c.l.b16 %v569
        %v823 = vunpack.c.h.b16 %v569
        %v824 = vunpack.c.l.b16 %v570
        %v825 = vunpack.c.h.b16 %v570
        %v826 = vunpack.c.l.b16 %v571
        %v827 = vunpack.c.h.b16 %v571
        %v828 = vunpack.c.l.b16 %v572
        %v829 = vunpack.c.h.b16 %v572
        %v830 = vunpack.c.l.b16 %v573
        %v831 = vunpack.c.h.b16 %v573
        %v832 = vunpack.c.l.b16 %v574
        %v833 = vunpack.c.h.b16 %v574
        %v834 = vunpack.c.l.b16 %v575
        %v835 = vunpack.c.h.b16 %v575
        %v836 = vunpack.c.l.b16 %v576
        %v837 = vunpack.c.h.b16 %v576
        %v838 = vunpack.c.l.b16 %v577
        %v839 = vunpack.c.h.b16 %v577
        %v840 = vunpack.c.l.b16 %v578
        %v841 = vunpack.c.h.b16 %v578
        %v842 = vunpack.c.l.b16 %v579
        %v843 = vunpack.c.h.b16 %v579
        %v844 = vunpack.c.l.b16 %v580
        %v845 = vunpack.c.h.b16 %v580
        %v846 = vunpack.c.l.b16 %v581
        %v847 = vunpack.c.h.b16 %v581
        %v848 = vunpack.c.l.b16 %v582
        %v849 = vunpack.c.h.b16 %v582
        %v850 = vunpack.c.l.b16 %v583
        %v851 = vunpack.c.h.b16 %v583
        %v852 = vunpack.c.l.b16 %v584
        %v853 = vunpack.c.h.b16 %v584
        %v854 = vunpack.c.l.b16 %v585
        %v855 = vunpack.c.h.b16 %v585
        %v856 = vunpack.c.l.b16 %v586
        %v857 = vunpack.c.h.b16 %v586
        %v858 = vunpack.c.l.b16 %v587
        %v859 = vunpack.c.h.b16 %v587
        %v860 = vunpack.c.l.b16 %v588
        %v861 = vunpack.c.h.b16 %v588
        %v862 = vunpack.c.l.b16 %v589
        %v863 = vunpack.c.h.b16 %v589
        %v864 = vunpack.c.l.b16 %v590
        %v865 = vunpack.c.h.b16 %v590
        %v866 = vunpack.c.l.b16 %v591
        %v867 = vunpack.c.h.b16 %v591
        %v868 = vunpack.c.l.b16 %v592
        %v869 = vunpack.c.h.b16 %v592
        %v870 = vunpack.c.l.b16 %v593
        %v871 = vunpack.c.h.b16 %v593
        %v872 = vunpack.c.l.b16 %v594
        %v873 = vunpack.c.h.b16 %v594
        %v874 = vunpack.c.l.b16 %v595
        %v875 = vunpack.c.h.b16 %v595
        %v876 = vunpack.c.l.b16 %v596
        %v877 = vunpack.c.h.b16 %v596
        %v878 = vunpack.c.l.b16 %v597
        %v879 = vunpack.c.h.b16 %v597
        %v880 = vunpack.c.l.b16 %v598
        %v881 = vunpack.c.h.b16 %v598
        %v882 = vunpack.c.l.b16 %v599
        %v883 = vunpack.c.h.b16 %v599
        %v884 = vunpack.c.l.b16 %v600
        %v885 = vunpack.c.h.b16 %v600
        %v886 = vunpack.c.l.b16 %v601
        %v887 = vunpack.c.h.b16 %v601
        %v888 = vunpack.c.l.b16 %v602
        %v889 = vunpack.c.h.b16 %v602
        %v890 = vunpack.c.l.b16 %v603
        %v891 = vunpack.c.h.b16 %v603
        %v892 = vunpack.c.l.b16 %v604
        %v893 = vunpack.c.h.b16 %v604
        %v894 = vunpack.c.l.b16 %v605
        %v895 = vunpack.c.h.b16 %v605
        %v896 = vunpack.c.l.b16 %v606
        %v897 = vunpack.c.h.b16 %v606
        %v898 = vunpack.c.l.b16 %v607
        %v899 = vunpack.c.h.b16 %v607
        %v900 = vunpack.c.l.b16 %v608
        %v901 = vunpack.c.h.b16 %v608
        %v902 = vunpack.c.l.b16 %v609
        %v903 = vunpack.c.h.b16 %v609
        %v904 = vunpack.c.l.b16 %v610
        %v905 = vunpack.c.h.b16 %v610
        %v906 = vunpack.c.l.b16 %v611
        %v907 = vunpack.c.h.b16 %v611
        %v908 = vunpack.c.l.b16 %v612
        %v909 = vunpack.c.h.b16 %v612
        %v910 = vunpack.c.l.b16 %v613
        %v911 = vunpack.c.h.b16 %v613
        %v912 = vunpack.c.l.b16 %v614
        %v913 = vunpack.c.h.b16 %v614
        %v914 = vunpack.c.l.b16 %v615
        %v915 = vunpack.c.h.b16 %v615
        %v916 = vunpack.c.l.b16 %v616
        %v917 = vunpack.c.h.b16 %v616
        %v918 = vunpack.c.l.b16 %v617
        %v919 = vunpack.c.h.b16 %v617
        %v920 = vunpack.c.l.b16 %v618
        %v921 = vunpack.c.h.b16 %v618
        %v922 = vunpack.c.l.b16 %v619
        %v923 = vunpack.c.h.b16 %v619
        %v924 = vunpack.c.l.b16 %v620
        %v925 = vunpack.c.h.b16 %v620
        %v926 = vunpack.c.l.b16 %v621
        %v927 = vunpack.c.h.b16 %v621
        %v928 = vunpack.c.l.b16 %v622
        %v929 = vunpack.c.h.b16 %v622
        %v930 = vunpack.c.l.b16 %v623
        %v931 = vunpack.c.h.b16 %v623
        %v932 = vunpack.c.l.b16 %v624
        %v933 = vunpack.c.h.b16 %v624
        %v934 = vunpack.c.l.b16 %v625
        %v935 = vunpack.c.h.b16 %v625
        %v936 = vunpack.c.l.b16 %v626
        %v937 = vunpack.c.h.b16 %v626
        %v938 = vunpack.c.l.b16 %v627
        %v939 = vunpack.c.h.b16 %v627
        %v940 = vunpack.c.l.b16 %v628
        %v941 = vunpack.c.h.b16 %v628
        %v942 = vunpack.c.l.b16 %v629
        %v943 = vunpack.c.h.b16 %v629
        %v944 = vunpack.c.l.b16 %v630
        %v945 = vunpack.c.h.b16 %v630
        %v946 = vunpack.c.l.b16 %v631
        %v947 = vunpack.c.h.b16 %v631
        %v948 = vunpack.c.l.b16 %v632
        %v949 = vunpack.c.h.b16 %v632
        %v950 = vunpack.c.l.b16 %v633
        %v951 = vunpack.c.h.b16 %v633
        %v952 = vunpack.c.l.b16 %v634
        %v953 = vunpack.c.h.b16 %v634
        %v954 = vunpack.c.l.b16 %v635
        %v955 = vunpack.c.h.b16 %v635
        %v956 = vpack.c.b16 %v770, %v764
        %v957 = vpack.c.b16 %v771, %v765
        %v958 = vpack.c.b16 %v772, %v766
        %v959 = vpack.c.b16 %v773, %v767
        %v960 = vpack.c.b16 %v774, %v768
        %v961 = vpack.c.b16 %v775, %v769
        %v962 = vpack.c.b16 %v782, %v776
        %v963 = vpack.c.b16 %v783, %v777
        %v964 = vpack.c.b16 %v784, %v778
        %v965 = vpack.c.b16 %v785, %v779
        %v966 = vpack.c.b16 %v786, %v780
        %v967 = vpack.c.b16 %v787, %v781
        %v968 = vpack.c.b16 %v794, %v788
        %v969 = vpack.c.b16 %v795, %v789
        %v970 = vpack.c.b16 %v796, %v790
        %v971 = vpack.c.b16 %v797, %v791
        %v972 = vpack.c.b16 %v798, %v792
        %v973 = vpack.c.b16 %v799, %v793
        %v974 = vpack.c.b16 %v806, %v800
        %v975 = vpack.c.b16 %v807, %v801
        %v976 = vpack.c.b16 %v808, %v802
        %v977 = vpack.c.b16 %v809, %v803
        %v978 = vpack.c.b16 %v810, %v804
        %v979 = vpack.c.b16 %v811, %v805
        %v980 = vpack.c.b16 %v818, %v812
        %v981 = vpack.c.b16 %v819, %v813
        %v982 = vpack.c.b16 %v820, %v814
        %v983 = vpack.c.b16 %v821, %v815
        %v984 = vpack.c.b16 %v822, %v816
        %v985 = vpack.c.b16 %v823, %v817
        %v986 = vpack.c.b16 %v830, %v824
        %v987 = vpack.c.b16 %v831, %v825
        %v988 = vpack.c.b16 %v832, %v826
        %v989 = vpack.c.b16 %v833, %v827
        %v990 = vpack.c.b16 %v834, %v828
        %v991 = vpack.c.b16 %v835, %v829
        %v992 = vpack.c.b16 %v842, %v836
        %v993 = vpack.c.b16 %v843, %v837
        %v994 = vpack.c.b16 %v844, %v838
        %v995 = vpack.c.b16 %v845, %v839
        %v996 = vpack.c.b16 %v846, %v840
        %v997 = vpack.c.b16 %v847, %v841
        %v998 = vpack.c.b16 %v854, %v848
        %v999 = vpack.c.b16 %v855, %v849
        %v1000 = vpack.c.b16 %v856, %v850
        %v1001 = vpack.c.b16 %v857, %v851
        %v1002 = vpack.c.b16 %v858, %v852
        %v1003 = vpack.c.b16 %v859, %v853
        %v1004 = vpack.c.b16 %v866, %v860
        %v1005 = vpack.c.b16 %v867, %v861
        %v1006 = vpack.c.b16 %v868, %v862
        %v1007 = vpack.c.b16 %v869, %v863
        %v1008 = vpack.c.b16 %v870, %v864
        %v1009 = vpack.c.b16 %v871, %v865
        %v1010 = vpack.c.b16 %v878, %v872
        %v1011 = vpack.c.b16 %v879, %v873
        %v1012 = vpack.c.b16 %v880, %v874
        %v1013 = vpack.c.b16 %v881, %v875
        %v1014 = vpack.c.b16 %v882, %v876
        %v1015 = vpack.c.b16 %v883, %v877
        %v1016 = vpack.c.b16 %v890, %v884
        %v1017 = vpack.c.b16 %v891, %v885
        %v1018 = vpack.c.b16 %v892, %v886
        %v1019 = vpack.c.b16 %v893, %v887
        %v1020 = vpack.c.b16 %v894, %v888
        %v1021 = vpack.c.b16 %v895, %v889
        %v1022 = vpack.c.b16 %v902, %v896
        %v1023 = vpack.c.b16 %v903, %v897
        %v1024 = vpack.c.b16 %v904, %v898
        %v1025 = vpack.c.b16 %v905, %v899
        %v1026 = vpack.c.b16 %v906, %v900
        %v1027 = vpack.c.b16 %v907, %v901
        %v1028 = vpack.c.b16 %v914, %v908
        %v1029 = vpack.c.b16 %v915, %v909
        %v1030 = vpack.c.b16 %v916, %v910
        %v1031 = vpack.c.b16 %v917, %v911
        %v1032 = vpack.c.b16 %v918, %v912
        %v1033 = vpack.c.b16 %v919, %v913
        %v1034 = vpack.c.b16 %v926, %v920
        %v1035 = vpack.c.b16 %v927, %v921
        %v1036 = vpack.c.b16 %v928, %v922
        %v1037 = vpack.c.b16 %v929, %v923
        %v1038 = vpack.c.b16 %v930, %v924
        %v1039 = vpack.c.b16 %v931, %v925
        %v1040 = vpack.c.b16 %v938, %v932
        %v1041 = vpack.c.b16 %v939, %v933
        %v1042 = vpack.c.b16 %v940, %v934
        %v1043 = vpack.c.b16 %v941, %v935
        %v1044 = vpack.c.b16 %v942, %v936
        %v1045 = vpack.c.b16 %v943, %v937
        %v1046 = vpack.c.b16 %v950, %v944
        %v1047 = vpack.c.b16 %v951, %v945
        %v1048 = vpack.c.b16 %v952, %v946
        %v1049 = vpack.c.b16 %v953, %v947
        %v1050 = vpack.c.b16 %v954, %v948
        %v1051 = vpack.c.b16 %v955, %v949
        %1148 = vmatprep.subr.bf16.mxu0 %v999
        %1149 = vmatpush1.bf16.msra.mxu0 %v998
        %1150 = vmatprep.subr.bf16.mxu0 %v993
        %1151 = vmatpush1.bf16.msra.mxu0 %v992
        %1152 = vmatprep.subr.bf16.mxu0 %v987
        %1153 = vmatpush1.bf16.msra.mxu0 %v986
        %1154 = vmatprep.subr.bf16.mxu0 %v981
        %1155 = vmatpush1.bf16.msra.mxu0 %v980
        %1156 = vmatprep.subr.bf16.mxu0 %v975
        %1157 = vmatpush1.bf16.msra.mxu0 %v974
        %1158 = vmatprep.subr.bf16.mxu0 %v969
        %1159 = vmatpush1.bf16.msra.mxu0 %v968
        %1160 = vmatprep.subr.bf16.mxu0 %v963
        %1161 = vmatpush1.bf16.msra.mxu0 %v962
        %1162 = vmatprep.subr.bf16.mxu0 %v957
        %1163 = vmatpush1.bf16.msra.mxu0 %v956
        %1164 = vmatprep.subr.bf16.mxu0 %v1047
        %1165 = vmatpush2.bf16.msra.mxu0 %v1046
        %1166 = vmatprep.subr.bf16.mxu0 %v1041
        %1167 = vmatpush2.bf16.msra.mxu0 %v1040
        %1168 = vmatprep.subr.bf16.mxu0 %v1035
        %1169 = vmatpush2.bf16.msra.mxu0 %v1034
        %1170 = vmatprep.subr.bf16.mxu0 %v1029
        %1171 = vmatpush2.bf16.msra.mxu0 %v1028
        %1172 = vmatprep.subr.bf16.mxu0 %v1023
        %1173 = vmatpush2.bf16.msra.mxu0 %v1022
        %1174 = vmatprep.subr.bf16.mxu0 %v1017
        %1175 = vmatpush2.bf16.msra.mxu0 %v1016
        %1176 = vmatprep.subr.bf16.mxu0 %v1011
        %1177 = vmatpush2.bf16.msra.mxu0 %v1010
        %1178 = vmatprep.subr.bf16.mxu0 %v1005
        %1179 = vmatpush2.bf16.msra.mxu0 %v1004
        %1180 = vmatprep.mubr.bf16.mxu0 %v537
        %1181 = vmatmul.mubr.bf16.gmra.mxu0 %v536
        %v1182 = vpop.f32.mrf.mxu0
        %v1183 = vpop.f32.mrf.mxu0
        %v1184 = vpop.f32.mrf.mxu0
        %v1185 = vpop.f32.mrf.mxu0
        %1186 = vmatprep.mubr.bf16.mxu0 %v539
        %1187 = vmatmul.mubr.bf16.gmra.mxu0 %v538
        %v1188 = vpop.f32.mrf.mxu0
        %v1189 = vadd.f32 %v641, %v1188
        %v1190 = vpop.f32.mrf.mxu0
        %v1191 = vadd.f32 %v645, %v1190
        %v1192 = vpop.f32.mrf.mxu0
        %v1193 = vpop.f32.mrf.mxu0
        %1194 = vdwg.mxu0
        %1195 = vmatprep.subr.bf16.mxu0 %v1001
        %1196 = vmatpush1.bf16.msra.mxu0 %v1000
        %1197 = vmatprep.subr.bf16.mxu0 %v995
        %1198 = vmatpush1.bf16.msra.mxu0 %v994
        %1199 = vmatprep.subr.bf16.mxu0 %v989
        %1200 = vmatpush1.bf16.msra.mxu0 %v988
        %1201 = vmatprep.subr.bf16.mxu0 %v983
        %1202 = vmatpush1.bf16.msra.mxu0 %v982
        %1203 = vmatprep.subr.bf16.mxu0 %v977
        %1204 = vmatpush1.bf16.msra.mxu0 %v976
        %1205 = vmatprep.subr.bf16.mxu0 %v971
        %1206 = vmatpush1.bf16.msra.mxu0 %v970
        %1207 = vmatprep.subr.bf16.mxu0 %v965
        %1208 = vmatpush1.bf16.msra.mxu0 %v964
        %1209 = vmatprep.subr.bf16.mxu0 %v959
        %1210 = vmatpush1.bf16.msra.mxu0 %v958
        %1211 = vmatprep.subr.bf16.mxu0 %v1049
        %1212 = vmatpush2.bf16.msra.mxu0 %v1048
        %1213 = vmatprep.subr.bf16.mxu0 %v1043
        %1214 = vmatpush2.bf16.msra.mxu0 %v1042
        %1215 = vmatprep.subr.bf16.mxu0 %v1037
        %1216 = vmatpush2.bf16.msra.mxu0 %v1036
        %1217 = vmatprep.subr.bf16.mxu0 %v1031
        %1218 = vmatpush2.bf16.msra.mxu0 %v1030
        %1219 = vmatprep.subr.bf16.mxu0 %v1025
        %1220 = vmatpush2.bf16.msra.mxu0 %v1024
        %1221 = vmatprep.subr.bf16.mxu0 %v1019
        %1222 = vmatpush2.bf16.msra.mxu0 %v1018
        %1223 = vmatprep.subr.bf16.mxu0 %v1013
        %1224 = vmatpush2.bf16.msra.mxu0 %v1012
        %1225 = vmatprep.subr.bf16.mxu0 %v1007
        %1226 = vmatpush2.bf16.msra.mxu0 %v1006
        %1227 = vmatprep.mubr.bf16.mxu0 %v537
        %1228 = vmatmul.mubr.bf16.gmra.mxu0 %v536
        %v1229 = vpop.f32.mrf.mxu0
        %v1230 = vadd.f32 %v649, %v1229
        %v1231 = vpop.f32.mrf.mxu0
        %v1232 = vadd.f32 %v653, %v1231
        %v1233 = vpop.f32.mrf.mxu0
        %v1234 = vadd.f32 %v649, %v1233
        %v1235 = vpop.f32.mrf.mxu0
        %v1236 = vadd.f32 %v653, %v1235
        %1237 = vmatprep.mubr.bf16.mxu0 %v539
        %1238 = vmatmul.mubr.bf16.gmra.mxu0 %v538
        %v1239 = vpop.f32.mrf.mxu0
        %v1240 = vadd.f32 %v649, %v1239
        %v1241 = vpop.f32.mrf.mxu0
        %v1242 = vadd.f32 %v653, %v1241
        %v1243 = vpop.f32.mrf.mxu0
        %v1244 = vpop.f32.mrf.mxu0
        %1245 = vdwg.mxu0
        %1246 = vmatprep.subr.bf16.mxu0 %v1003
        %1247 = vmatpush1.bf16.msra.mxu0 %v1002
        %1248 = vmatprep.subr.bf16.mxu0 %v997
        %1249 = vmatpush1.bf16.msra.mxu0 %v996
        %1250 = vmatprep.subr.bf16.mxu0 %v991
        %1251 = vmatpush1.bf16.msra.mxu0 %v990
        %1252 = vmatprep.subr.bf16.mxu0 %v985
        %1253 = vmatpush1.bf16.msra.mxu0 %v984
        %1254 = vmatprep.subr.bf16.mxu0 %v979
        %1255 = vmatpush1.bf16.msra.mxu0 %v978
        %1256 = vmatprep.subr.bf16.mxu0 %v973
        %1257 = vmatpush1.bf16.msra.mxu0 %v972
        %1258 = vmatprep.subr.bf16.mxu0 %v967
        %1259 = vmatpush1.bf16.msra.mxu0 %v966
        %1260 = vmatprep.subr.bf16.mxu0 %v961
        %1261 = vmatpush1.bf16.msra.mxu0 %v960
        %1262 = vmatprep.subr.bf16.mxu0 %v1051
        %1263 = vmatpush2.bf16.msra.mxu0 %v1050
        %1264 = vmatprep.subr.bf16.mxu0 %v1045
        %1265 = vmatpush2.bf16.msra.mxu0 %v1044
        %1266 = vmatprep.subr.bf16.mxu0 %v1039
        %1267 = vmatpush2.bf16.msra.mxu0 %v1038
        %1268 = vmatprep.subr.bf16.mxu0 %v1033
        %1269 = vmatpush2.bf16.msra.mxu0 %v1032
        %1270 = vmatprep.subr.bf16.mxu0 %v1027
        %1271 = vmatpush2.bf16.msra.mxu0 %v1026
        %1272 = vmatprep.subr.bf16.mxu0 %v1021
        %1273 = vmatpush2.bf16.msra.mxu0 %v1020
        %1274 = vmatprep.subr.bf16.mxu0 %v1015
        %1275 = vmatpush2.bf16.msra.mxu0 %v1014
        %1276 = vmatprep.subr.bf16.mxu0 %v1009
        %1277 = vmatpush2.bf16.msra.mxu0 %v1008
        %1278 = vmatprep.mubr.bf16.mxu0 %v537
        %1279 = vmatmul.mubr.bf16.gmra.mxu0 %v536
        %v1280 = vpop.f32.mrf.mxu0
        %v1281 = vadd.f32 %v657, %v1280
        %v1282 = vpop.f32.mrf.mxu0
        %v1283 = vadd.f32 %v661, %v1282
        %v1284 = vpop.f32.mrf.mxu0
        %v1285 = vadd.f32 %v657, %v1284
        %v1286 = vpop.f32.mrf.mxu0
        %v1287 = vadd.f32 %v661, %v1286
        %1288 = vmatprep.mubr.bf16.mxu0 %v539
        %1289 = vmatmul.mubr.bf16.gmra.mxu0 %v538
        %v1290 = vpop.f32.mrf.mxu0
        %v1291 = vadd.f32 %v657, %v1290
        %v1292 = vpop.f32.mrf.mxu0
        %v1293 = vadd.f32 %v661, %v1292
        %v1294 = vpop.f32.mrf.mxu0
        %v1295 = vpop.f32.mrf.mxu0
        %1296 = vdwg.mxu0
        %v1297 = vmul.f32 %v1189, 0.125
        %v1298 = vmul.f32 %v1191, 0.125
        %vm1299 = vcmask 523264
        %v1301 = vsel %vm1299, %v1297, 0
        %v1304 = vsel %vm1299, %v1230, 0
        %v1307 = vsel %vm1299, %v1234, 0
        %v1310 = vsel %vm1299, %v1240, 0
        %1312 = vmatprep.subr.mxu0 0.0
        %1313 = vmatpush1.xpose.msra.mxu0 0.0
        %1314 = vmatprep.subr.mxu0 0.0
        %1315 = vmatpush1.xpose.msra.mxu0 0.0
        %1316 = vmatprep.subr.mxu0 0.0
        %1317 = vmatpush1.xpose.msra.mxu0 0.0
        %1318 = vmatprep.subr.mxu0 0.0
        %1319 = vmatpush1.xpose.msra.mxu0 0.0
        %1320 = vmatprep.subr.mxu0 0.0
        %1321 = vmatpush1.xpose.msra.mxu0 0.0
        %1322 = vmatprep.subr.mxu0 0.0
        %1323 = vmatpush1.xpose.msra.mxu0 0.0
        %1324 = vmatprep.subr.mxu0 0.0
        %1325 = vmatpush1.xpose.msra.mxu0 0.0
        %1326 = vmatprep.subr.mxu0 0.0
        %1327 = vmatpush1.xpose.msra.mxu0 0.0
        %1328 = vmatprep.subr.mxu0 0.0
        %1329 = vmatpush1.xpose.msra.mxu0 0.0
        %1330 = vmatprep.subr.mxu0 0.0
        %1331 = vmatpush1.xpose.msra.mxu0 0.0
        %1332 = vmatprep.subr.mxu0 0.0
        %1333 = vmatpush1.xpose.msra.mxu0 0.0
        %1334 = vmatprep.subr.mxu0 0.0
        %1335 = vmatpush1.xpose.msra.mxu0 0.0
        %1336 = vmatprep.subr.mxu0 0.0
        %1337 = vmatpush1.xpose.msra.mxu0 0.0
        %1338 = vmatprep.subr.mxu0 0.0
        %1339 = vmatpush1.xpose.msra.mxu0 %v1310
        %1340 = vmatprep.subr.mxu0 0.0
        %1341 = vmatpush1.xpose.msra.mxu0 %v1307
        %1342 = vmatprep.subr.mxu0 0.0
        %1343 = vmatpush1.xpose.msra.mxu0 %v1304
        %1344 = vmatprep.subr.mxu0 0.0
        %1345 = vmatpush2.xpose.msra.mxu0 0.0
        %1346 = vmatprep.subr.mxu0 0.0
        %1347 = vmatpush2.xpose.msra.mxu0 0.0
        %1348 = vmatprep.subr.mxu0 0.0
        %1349 = vmatpush2.xpose.msra.mxu0 0.0
        %1350 = vmatprep.subr.mxu0 0.0
        %1351 = vmatpush2.xpose.msra.mxu0 0.0
        %1352 = vmatprep.subr.mxu0 0.0
        %1353 = vmatpush2.xpose.msra.mxu0 0.0
        %1354 = vmatprep.subr.mxu0 0.0
        %1355 = vmatpush2.xpose.msra.mxu0 0.0
        %1356 = vmatprep.subr.mxu0 0.0
        %1357 = vmatpush2.xpose.msra.mxu0 0.0
        %1358 = vmatprep.subr.mxu0 0.0
        %1359 = vmatpush2.xpose.msra.mxu0 0.0
        %1360 = vmatprep.subr.mxu0 0.0
        %1361 = vmatpush2.xpose.msra.mxu0 0.0
        %1362 = vmatprep.subr.mxu0 0.0
        %1363 = vmatpush2.xpose.msra.mxu0 0.0
        %1364 = vmatprep.subr.mxu0 0.0
        %1365 = vmatpush2.xpose.msra.mxu0 0.0
        %1366 = vmatprep.subr.mxu0 0.0
        %1367 = vmatpush2.xpose.msra.mxu0 0.0
        %1368 = vmatprep.subr.mxu0 0.0
        %1369 = vmatpush2.xpose.msra.mxu0 0.0
        %1370 = vmatprep.subr.mxu0 0.0
        %1371 = vmatpush2.xpose.msra.mxu0 0.0
        %1372 = vmatprep.subr.mxu0 0.0
        %1373 = vmatpush2.xpose.msra.mxu0 0.0
        %1374 = vmatprep.subr.mxu0 0.0
        %1375 = vmatpush2.xpose.msra.mxu0 0.0
        %1376 = vmatprep.mubr.f32.mxu0 0.0
        %1377 = vmatmul.mubr.f32.gmra.mxu0 %v1301
        %v1378 = vpop.f32.mrf.mxu0
        %v1379 = vadd.f32 0.0, %v1378
        %v1380 = vpop.f32.mrf.mxu0
        %1381 = vdwg.mxu0
        %vm1382 = vcmask 195584
        %v1383 = vsel %vm1382, %v1379, -inf
        %1384 = vmax.xlane.f32.xlu0 %v1383
        %v1385 = vpop.xlane.xlu0 %1384
        %v1386 = vsub.f32 %v1379, %v1385
        %v1387 = vmul.f32 %v1386, 1.442695
        %v1388 = vpow.pop %v1387
        %v1389 = vsel %vm1382, %v1388, 0.0
        %1390 = vadd.xlane.f32.xlu0 %v1389
        %v1391 = vpop.xlane.xlu0 %1390
        %v1392 = vrcp.pop %v1391
        %v1393 = vmul.f32 %v1388, %v1392
        %v1395 = vsel %vm1382, %v1393, 0
        %1397 = vmatprep.subr.mxu0 0.0
        %1398 = vmatpush1.msra.mxu0 0.0
        %1399 = vmatprep.subr.mxu0 0.0
        %1400 = vmatpush1.msra.mxu0 0.0
        %1401 = vmatprep.subr.mxu0 0.0
        %1402 = vmatpush1.msra.mxu0 0.0
        %1403 = vmatprep.subr.mxu0 0.0
        %1404 = vmatpush1.msra.mxu0 0.0
        %1405 = vmatprep.subr.mxu0 0.0
        %1406 = vmatpush1.msra.mxu0 0.0
        %1407 = vmatprep.subr.mxu0 0.0
        %1408 = vmatpush1.msra.mxu0 0.0
        %1409 = vmatprep.subr.mxu0 0.0
        %1410 = vmatpush1.msra.mxu0 0.0
        %1411 = vmatprep.subr.mxu0 0.0
        %1412 = vmatpush1.msra.mxu0 0.0
        %1413 = vmatprep.subr.mxu0 0.0
        %1414 = vmatpush1.msra.mxu0 0.0
        %1415 = vmatprep.subr.mxu0 0.0
        %1416 = vmatpush1.msra.mxu0 0.0
        %1417 = vmatprep.subr.mxu0 0.0
        %1418 = vmatpush1.msra.mxu0 0.0
        %1419 = vmatprep.subr.mxu0 0.0
        %1420 = vmatpush1.msra.mxu0 0.0
        %1421 = vmatprep.subr.mxu0 0.0
        %1422 = vmatpush1.msra.mxu0 0.0
        %1423 = vmatprep.subr.mxu0 0.0
        %1424 = vmatpush1.msra.mxu0 %v1291
        %1425 = vmatprep.subr.mxu0 0.0
        %1426 = vmatpush1.msra.mxu0 %v1285
        %1427 = vmatprep.subr.mxu0 0.0
        %1428 = vmatpush1.msra.mxu0 %v1281
        %1429 = vmatprep.subr.mxu0 0.0
        %1430 = vmatpush2.msra.mxu0 0.0
        %1431 = vmatprep.subr.mxu0 0.0
        %1432 = vmatpush2.msra.mxu0 0.0
        %1433 = vmatprep.subr.mxu0 0.0
        %1434 = vmatpush2.msra.mxu0 0.0
        %1435 = vmatprep.subr.mxu0 0.0
        %1436 = vmatpush2.msra.mxu0 0.0
        %1437 = vmatprep.subr.mxu0 0.0
        %1438 = vmatpush2.msra.mxu0 0.0
        %1439 = vmatprep.subr.mxu0 0.0
        %1440 = vmatpush2.msra.mxu0 0.0
        %1441 = vmatprep.subr.mxu0 0.0
        %1442 = vmatpush2.msra.mxu0 0.0
        %1443 = vmatprep.subr.mxu0 0.0
        %1444 = vmatpush2.msra.mxu0 0.0
        %1445 = vmatprep.subr.mxu0 0.0
        %1446 = vmatpush2.msra.mxu0 0.0
        %1447 = vmatprep.subr.mxu0 0.0
        %1448 = vmatpush2.msra.mxu0 0.0
        %1449 = vmatprep.subr.mxu0 0.0
        %1450 = vmatpush2.msra.mxu0 0.0
        %1451 = vmatprep.subr.mxu0 0.0
        %1452 = vmatpush2.msra.mxu0 0.0
        %1453 = vmatprep.subr.mxu0 0.0
        %1454 = vmatpush2.msra.mxu0 0.0
        %1455 = vmatprep.subr.mxu0 0.0
        %1456 = vmatpush2.msra.mxu0 0.0
        %1457 = vmatprep.subr.mxu0 0.0
        %1458 = vmatpush2.msra.mxu0 0.0
        %1459 = vmatprep.subr.mxu0 0.0
        %1460 = vmatpush2.msra.mxu0 0.0
        %1461 = vmatprep.mubr.f32.mxu0 0.0
        %1462 = vmatmul.mubr.f32.gmra.mxu0 %v1395
        %v1463 = vpop.f32.mrf.mxu0
        %v1464 = vadd.f32 0.0, %v1463
        %v1465 = vpop.f32.mrf.mxu0
        %1466 = vdwg.mxu0
        %1467 = vrot.lane.b32.xlu0 %v1297, 64
        %v1468 = vpop.permute.xlu0 %1467
        %1469 = vrot.lane.b32.xlu0 %v1230, 64
        %v1470 = vpop.permute.xlu0 %1469
        %1471 = vrot.lane.b32.xlu0 %v1234, 64
        %v1472 = vpop.permute.xlu0 %1471
        %1473 = vrot.lane.b32.xlu0 %v1240, 64
        %v1474 = vpop.permute.xlu0 %1473
        %v1475 = vsel %vm1299, %v1468, 0
        %v1477 = vsel %vm1299, %v1470, 0
        %v1479 = vsel %vm1299, %v1472, 0
        %v1481 = vsel %vm1299, %v1474, 0
        %1483 = vmatprep.subr.mxu0 0.0
        %1484 = vmatpush1.xpose.msra.mxu0 0.0
        %1485 = vmatprep.subr.mxu0 0.0
        %1486 = vmatpush1.xpose.msra.mxu0 0.0
        %1487 = vmatprep.subr.mxu0 0.0
        %1488 = vmatpush1.xpose.msra.mxu0 0.0
        %1489 = vmatprep.subr.mxu0 0.0
        %1490 = vmatpush1.xpose.msra.mxu0 0.0
        %1491 = vmatprep.subr.mxu0 0.0
        %1492 = vmatpush1.xpose.msra.mxu0 0.0
        %1493 = vmatprep.subr.mxu0 0.0
        %1494 = vmatpush1.xpose.msra.mxu0 0.0
        %1495 = vmatprep.subr.mxu0 0.0
        %1496 = vmatpush1.xpose.msra.mxu0 0.0
        %1497 = vmatprep.subr.mxu0 0.0
        %1498 = vmatpush1.xpose.msra.mxu0 0.0
        %1499 = vmatprep.subr.mxu0 0.0
        %1500 = vmatpush1.xpose.msra.mxu0 0.0
        %1501 = vmatprep.subr.mxu0 0.0
        %1502 = vmatpush1.xpose.msra.mxu0 0.0
        %1503 = vmatprep.subr.mxu0 0.0
        %1504 = vmatpush1.xpose.msra.mxu0 0.0
        %1505 = vmatprep.subr.mxu0 0.0
        %1506 = vmatpush1.xpose.msra.mxu0 0.0
        %1507 = vmatprep.subr.mxu0 0.0
        %1508 = vmatpush1.xpose.msra.mxu0 0.0
        %1509 = vmatprep.subr.mxu0 0.0
        %1510 = vmatpush1.xpose.msra.mxu0 %v1481
        %1511 = vmatprep.subr.mxu0 0.0
        %1512 = vmatpush1.xpose.msra.mxu0 %v1479
        %1513 = vmatprep.subr.mxu0 0.0
        %1514 = vmatpush1.xpose.msra.mxu0 %v1477
        %1515 = vmatprep.subr.mxu0 0.0
        %1516 = vmatpush2.xpose.msra.mxu0 0.0
        %1517 = vmatprep.subr.mxu0 0.0
        %1518 = vmatpush2.xpose.msra.mxu0 0.0
        %1519 = vmatprep.subr.mxu0 0.0
        %1520 = vmatpush2.xpose.msra.mxu0 0.0
        %1521 = vmatprep.subr.mxu0 0.0
        %1522 = vmatpush2.xpose.msra.mxu0 0.0
        %1523 = vmatprep.subr.mxu0 0.0
        %1524 = vmatpush2.xpose.msra.mxu0 0.0
        %1525 = vmatprep.subr.mxu0 0.0
        %1526 = vmatpush2.xpose.msra.mxu0 0.0
        %1527 = vmatprep.subr.mxu0 0.0
        %1528 = vmatpush2.xpose.msra.mxu0 0.0
        %1529 = vmatprep.subr.mxu0 0.0
        %1530 = vmatpush2.xpose.msra.mxu0 0.0
        %1531 = vmatprep.subr.mxu0 0.0
        %1532 = vmatpush2.xpose.msra.mxu0 0.0
        %1533 = vmatprep.subr.mxu0 0.0
        %1534 = vmatpush2.xpose.msra.mxu0 0.0
        %1535 = vmatprep.subr.mxu0 0.0
        %1536 = vmatpush2.xpose.msra.mxu0 0.0
        %1537 = vmatprep.subr.mxu0 0.0
        %1538 = vmatpush2.xpose.msra.mxu0 0.0
        %1539 = vmatprep.subr.mxu0 0.0
        %1540 = vmatpush2.xpose.msra.mxu0 0.0
        %1541 = vmatprep.subr.mxu0 0.0
        %1542 = vmatpush2.xpose.msra.mxu0 0.0
        %1543 = vmatprep.subr.mxu0 0.0
        %1544 = vmatpush2.xpose.msra.mxu0 0.0
        %1545 = vmatprep.subr.mxu0 0.0
        %1546 = vmatpush2.xpose.msra.mxu0 0.0
        %1547 = vmatprep.mubr.f32.mxu0 0.0
        %1548 = vmatmul.mubr.f32.gmra.mxu0 %v1475
        %v1549 = vpop.f32.mrf.mxu0
        %v1550 = vadd.f32 0.0, %v1549
        %v1551 = vpop.f32.mrf.mxu0
        %1552 = vdwg.mxu0
        %v1553 = vsel %vm1382, %v1550, -inf
        %1554 = vmax.xlane.f32.xlu0 %v1553
        %v1555 = vpop.xlane.xlu0 %1554
        %v1556 = vsub.f32 %v1550, %v1555
        %v1557 = vmul.f32 %v1556, 1.442695
        %v1558 = vpow.pop %v1557
        %v1559 = vsel %vm1382, %v1558, 0.0
        %1560 = vadd.xlane.f32.xlu0 %v1559
        %v1561 = vpop.xlane.xlu0 %1560
        %v1562 = vrcp.pop %v1561
        %v1563 = vmul.f32 %v1558, %v1562
        %1567 = vrot.lane.b32.xlu0 %v1281, 64
        %v1568 = vpop.permute.xlu0 %1567
        %1569 = vrot.lane.b32.xlu0 %v1285, 64
        %v1570 = vpop.permute.xlu0 %1569
        %1571 = vrot.lane.b32.xlu0 %v1291, 64
        %v1572 = vpop.permute.xlu0 %1571
        %v1577 = vsel %vm1382, %v1563, 0
        %1579 = vmatprep.subr.mxu0 0.0
        %1580 = vmatpush1.msra.mxu0 0.0
        %1581 = vmatprep.subr.mxu0 0.0
        %1582 = vmatpush1.msra.mxu0 0.0
        %1583 = vmatprep.subr.mxu0 0.0
        %1584 = vmatpush1.msra.mxu0 0.0
        %1585 = vmatprep.subr.mxu0 0.0
        %1586 = vmatpush1.msra.mxu0 0.0
        %1587 = vmatprep.subr.mxu0 0.0
        %1588 = vmatpush1.msra.mxu0 0.0
        %1589 = vmatprep.subr.mxu0 0.0
        %1590 = vmatpush1.msra.mxu0 0.0
        %1591 = vmatprep.subr.mxu0 0.0
        %1592 = vmatpush1.msra.mxu0 0.0
        %1593 = vmatprep.subr.mxu0 0.0
        %1594 = vmatpush1.msra.mxu0 0.0
        %1595 = vmatprep.subr.mxu0 0.0
        %1596 = vmatpush1.msra.mxu0 0.0
        %1597 = vmatprep.subr.mxu0 0.0
        %1598 = vmatpush1.msra.mxu0 0.0
        %1599 = vmatprep.subr.mxu0 0.0
        %1600 = vmatpush1.msra.mxu0 0.0
        %1601 = vmatprep.subr.mxu0 0.0
        %1602 = vmatpush1.msra.mxu0 0.0
        %1603 = vmatprep.subr.mxu0 0.0
        %1604 = vmatpush1.msra.mxu0 0.0
        %1605 = vmatprep.subr.mxu0 0.0
        %1606 = vmatpush1.msra.mxu0 %v1572
        %1607 = vmatprep.subr.mxu0 0.0
        %1608 = vmatpush1.msra.mxu0 %v1570
        %1609 = vmatprep.subr.mxu0 0.0
        %1610 = vmatpush1.msra.mxu0 %v1568
        %1611 = vmatprep.subr.mxu0 0.0
        %1612 = vmatpush2.msra.mxu0 0.0
        %1613 = vmatprep.subr.mxu0 0.0
        %1614 = vmatpush2.msra.mxu0 0.0
        %1615 = vmatprep.subr.mxu0 0.0
        %1616 = vmatpush2.msra.mxu0 0.0
        %1617 = vmatprep.subr.mxu0 0.0
        %1618 = vmatpush2.msra.mxu0 0.0
        %1619 = vmatprep.subr.mxu0 0.0
        %1620 = vmatpush2.msra.mxu0 0.0
        %1621 = vmatprep.subr.mxu0 0.0
        %1622 = vmatpush2.msra.mxu0 0.0
        %1623 = vmatprep.subr.mxu0 0.0
        %1624 = vmatpush2.msra.mxu0 0.0
        %1625 = vmatprep.subr.mxu0 0.0
        %1626 = vmatpush2.msra.mxu0 0.0
        %1627 = vmatprep.subr.mxu0 0.0
        %1628 = vmatpush2.msra.mxu0 0.0
        %1629 = vmatprep.subr.mxu0 0.0
        %1630 = vmatpush2.msra.mxu0 0.0
        %1631 = vmatprep.subr.mxu0 0.0
        %1632 = vmatpush2.msra.mxu0 0.0
        %1633 = vmatprep.subr.mxu0 0.0
        %1634 = vmatpush2.msra.mxu0 0.0
        %1635 = vmatprep.subr.mxu0 0.0
        %1636 = vmatpush2.msra.mxu0 0.0
        %1637 = vmatprep.subr.mxu0 0.0
        %1638 = vmatpush2.msra.mxu0 0.0
        %1639 = vmatprep.subr.mxu0 0.0
        %1640 = vmatpush2.msra.mxu0 0.0
        %1641 = vmatprep.subr.mxu0 0.0
        %1642 = vmatpush2.msra.mxu0 0.0
        %1643 = vmatprep.mubr.f32.mxu0 0.0
        %1644 = vmatmul.mubr.f32.gmra.mxu0 %v1577
        %v1645 = vpop.f32.mrf.mxu0
        %v1646 = vadd.f32 0.0, %v1645
        %v1647 = vpop.f32.mrf.mxu0
        %1648 = vdwg.mxu0
        %v1650 = vsel %vm1299, %v1298, 0
        %v1653 = vsel %vm1299, %v1232, 0
        %v1656 = vsel %vm1299, %v1236, 0
        %v1659 = vsel %vm1299, %v1242, 0
        %1661 = vmatprep.subr.mxu0 0.0
        %1662 = vmatpush1.xpose.msra.mxu0 0.0
        %1663 = vmatprep.subr.mxu0 0.0
        %1664 = vmatpush1.xpose.msra.mxu0 0.0
        %1665 = vmatprep.subr.mxu0 0.0
        %1666 = vmatpush1.xpose.msra.mxu0 0.0
        %1667 = vmatprep.subr.mxu0 0.0
        %1668 = vmatpush1.xpose.msra.mxu0 0.0
        %1669 = vmatprep.subr.mxu0 0.0
        %1670 = vmatpush1.xpose.msra.mxu0 0.0
        %1671 = vmatprep.subr.mxu0 0.0
        %1672 = vmatpush1.xpose.msra.mxu0 0.0
        %1673 = vmatprep.subr.mxu0 0.0
        %1674 = vmatpush1.xpose.msra.mxu0 0.0
        %1675 = vmatprep.subr.mxu0 0.0
        %1676 = vmatpush1.xpose.msra.mxu0 0.0
        %1677 = vmatprep.subr.mxu0 0.0
        %1678 = vmatpush1.xpose.msra.mxu0 0.0
        %1679 = vmatprep.subr.mxu0 0.0
        %1680 = vmatpush1.xpose.msra.mxu0 0.0
        %1681 = vmatprep.subr.mxu0 0.0
        %1682 = vmatpush1.xpose.msra.mxu0 0.0
        %1683 = vmatprep.subr.mxu0 0.0
        %1684 = vmatpush1.xpose.msra.mxu0 0.0
        %1685 = vmatprep.subr.mxu0 0.0
        %1686 = vmatpush1.xpose.msra.mxu0 0.0
        %1687 = vmatprep.subr.mxu0 0.0
        %1688 = vmatpush1.xpose.msra.mxu0 %v1659
        %1689 = vmatprep.subr.mxu0 0.0
        %1690 = vmatpush1.xpose.msra.mxu0 %v1656
        %1691 = vmatprep.subr.mxu0 0.0
        %1692 = vmatpush1.xpose.msra.mxu0 %v1653
        %1693 = vmatprep.subr.mxu0 0.0
        %1694 = vmatpush2.xpose.msra.mxu0 0.0
        %1695 = vmatprep.subr.mxu0 0.0
        %1696 = vmatpush2.xpose.msra.mxu0 0.0
        %1697 = vmatprep.subr.mxu0 0.0
        %1698 = vmatpush2.xpose.msra.mxu0 0.0
        %1699 = vmatprep.subr.mxu0 0.0
        %1700 = vmatpush2.xpose.msra.mxu0 0.0
        %1701 = vmatprep.subr.mxu0 0.0
        %1702 = vmatpush2.xpose.msra.mxu0 0.0
        %1703 = vmatprep.subr.mxu0 0.0
        %1704 = vmatpush2.xpose.msra.mxu0 0.0
        %1705 = vmatprep.subr.mxu0 0.0
        %1706 = vmatpush2.xpose.msra.mxu0 0.0
        %1707 = vmatprep.subr.mxu0 0.0
        %1708 = vmatpush2.xpose.msra.mxu0 0.0
        %1709 = vmatprep.subr.mxu0 0.0
        %1710 = vmatpush2.xpose.msra.mxu0 0.0
        %1711 = vmatprep.subr.mxu0 0.0
        %1712 = vmatpush2.xpose.msra.mxu0 0.0
        %1713 = vmatprep.subr.mxu0 0.0
        %1714 = vmatpush2.xpose.msra.mxu0 0.0
        %1715 = vmatprep.subr.mxu0 0.0
        %1716 = vmatpush2.xpose.msra.mxu0 0.0
        %1717 = vmatprep.subr.mxu0 0.0
        %1718 = vmatpush2.xpose.msra.mxu0 0.0
        %1719 = vmatprep.subr.mxu0 0.0
        %1720 = vmatpush2.xpose.msra.mxu0 0.0
        %1721 = vmatprep.subr.mxu0 0.0
        %1722 = vmatpush2.xpose.msra.mxu0 0.0
        %1723 = vmatprep.subr.mxu0 0.0
        %1724 = vmatpush2.xpose.msra.mxu0 0.0
        %1725 = vmatprep.mubr.f32.mxu0 0.0
        %1726 = vmatmul.mubr.f32.gmra.mxu0 %v1650
        %v1727 = vpop.f32.mrf.mxu0
        %v1728 = vadd.f32 0.0, %v1727
        %v1729 = vpop.f32.mrf.mxu0
        %1730 = vdwg.mxu0
        %v1731 = vsel %vm1382, %v1728, -inf
        %1732 = vmax.xlane.f32.xlu0 %v1731
        %v1733 = vpop.xlane.xlu0 %1732
        %v1734 = vsub.f32 %v1728, %v1733
        %v1735 = vmul.f32 %v1734, 1.442695
        %v1736 = vpow.pop %v1735
        %v1737 = vsel %vm1382, %v1736, 0.0
        %1738 = vadd.xlane.f32.xlu0 %v1737
        %v1739 = vpop.xlane.xlu0 %1738
        %v1740 = vrcp.pop %v1739
        %v1741 = vmul.f32 %v1736, %v1740
        %v1743 = vsel %vm1382, %v1741, 0
        %1745 = vmatprep.subr.mxu0 0.0
        %1746 = vmatpush1.msra.mxu0 0.0
        %1747 = vmatprep.subr.mxu0 0.0
        %1748 = vmatpush1.msra.mxu0 0.0
        %1749 = vmatprep.subr.mxu0 0.0
        %1750 = vmatpush1.msra.mxu0 0.0
        %1751 = vmatprep.subr.mxu0 0.0
        %1752 = vmatpush1.msra.mxu0 0.0
        %1753 = vmatprep.subr.mxu0 0.0
        %1754 = vmatpush1.msra.mxu0 0.0
        %1755 = vmatprep.subr.mxu0 0.0
        %1756 = vmatpush1.msra.mxu0 0.0
        %1757 = vmatprep.subr.mxu0 0.0
        %1758 = vmatpush1.msra.mxu0 0.0
        %1759 = vmatprep.subr.mxu0 0.0
        %1760 = vmatpush1.msra.mxu0 0.0
        %1761 = vmatprep.subr.mxu0 0.0
        %1762 = vmatpush1.msra.mxu0 0.0
        %1763 = vmatprep.subr.mxu0 0.0
        %1764 = vmatpush1.msra.mxu0 0.0
        %1765 = vmatprep.subr.mxu0 0.0
        %1766 = vmatpush1.msra.mxu0 0.0
        %1767 = vmatprep.subr.mxu0 0.0
        %1768 = vmatpush1.msra.mxu0 0.0
        %1769 = vmatprep.subr.mxu0 0.0
        %1770 = vmatpush1.msra.mxu0 0.0
        %1771 = vmatprep.subr.mxu0 0.0
        %1772 = vmatpush1.msra.mxu0 %v1293
        %1773 = vmatprep.subr.mxu0 0.0
        %1774 = vmatpush1.msra.mxu0 %v1287
        %1775 = vmatprep.subr.mxu0 0.0
        %1776 = vmatpush1.msra.mxu0 %v1283
        %1777 = vmatprep.subr.mxu0 0.0
        %1778 = vmatpush2.msra.mxu0 0.0
        %1779 = vmatprep.subr.mxu0 0.0
        %1780 = vmatpush2.msra.mxu0 0.0
        %1781 = vmatprep.subr.mxu0 0.0
        %1782 = vmatpush2.msra.mxu0 0.0
        %1783 = vmatprep.subr.mxu0 0.0
        %1784 = vmatpush2.msra.mxu0 0.0
        %1785 = vmatprep.subr.mxu0 0.0
        %1786 = vmatpush2.msra.mxu0 0.0
        %1787 = vmatprep.subr.mxu0 0.0
        %1788 = vmatpush2.msra.mxu0 0.0
        %1789 = vmatprep.subr.mxu0 0.0
        %1790 = vmatpush2.msra.mxu0 0.0
        %1791 = vmatprep.subr.mxu0 0.0
        %1792 = vmatpush2.msra.mxu0 0.0
        %1793 = vmatprep.subr.mxu0 0.0
        %1794 = vmatpush2.msra.mxu0 0.0
        %1795 = vmatprep.subr.mxu0 0.0
        %1796 = vmatpush2.msra.mxu0 0.0
        %1797 = vmatprep.subr.mxu0 0.0
        %1798 = vmatpush2.msra.mxu0 0.0
        %1799 = vmatprep.subr.mxu0 0.0
        %1800 = vmatpush2.msra.mxu0 0.0
        %1801 = vmatprep.subr.mxu0 0.0
        %1802 = vmatpush2.msra.mxu0 0.0
        %1803 = vmatprep.subr.mxu0 0.0
        %1804 = vmatpush2.msra.mxu0 0.0
        %1805 = vmatprep.subr.mxu0 0.0
        %1806 = vmatpush2.msra.mxu0 0.0
        %1807 = vmatprep.subr.mxu0 0.0
        %1808 = vmatpush2.msra.mxu0 0.0
        %1809 = vmatprep.mubr.f32.mxu0 0.0
        %1810 = vmatmul.mubr.f32.gmra.mxu0 %v1743
        %v1811 = vpop.f32.mrf.mxu0
        %v1812 = vadd.f32 0.0, %v1811
        %v1813 = vpop.f32.mrf.mxu0
        %1814 = vdwg.mxu0
        %1815 = vrot.lane.b32.xlu0 %v1298, 64
        %v1816 = vpop.permute.xlu0 %1815
        %1817 = vrot.lane.b32.xlu0 %v1232, 64
        %v1818 = vpop.permute.xlu0 %1817
        %1819 = vrot.lane.b32.xlu0 %v1236, 64
        %v1820 = vpop.permute.xlu0 %1819
        %1821 = vrot.lane.b32.xlu0 %v1242, 64
        %v1822 = vpop.permute.xlu0 %1821
        %v1823 = vsel %vm1299, %v1816, 0
        %v1825 = vsel %vm1299, %v1818, 0
        %v1827 = vsel %vm1299, %v1820, 0
        %v1829 = vsel %vm1299, %v1822, 0
        %1831 = vmatprep.subr.mxu0 0.0
        %1832 = vmatpush1.xpose.msra.mxu0 0.0
        %1833 = vmatprep.subr.mxu0 0.0
        %1834 = vmatpush1.xpose.msra.mxu0 0.0
        %1835 = vmatprep.subr.mxu0 0.0
        %1836 = vmatpush1.xpose.msra.mxu0 0.0
        %1837 = vmatprep.subr.mxu0 0.0
        %1838 = vmatpush1.xpose.msra.mxu0 0.0
        %1839 = vmatprep.subr.mxu0 0.0
        %1840 = vmatpush1.xpose.msra.mxu0 0.0
        %1841 = vmatprep.subr.mxu0 0.0
        %1842 = vmatpush1.xpose.msra.mxu0 0.0
        %1843 = vmatprep.subr.mxu0 0.0
        %1844 = vmatpush1.xpose.msra.mxu0 0.0
        %1845 = vmatprep.subr.mxu0 0.0
        %1846 = vmatpush1.xpose.msra.mxu0 0.0
        %1847 = vmatprep.subr.mxu0 0.0
        %1848 = vmatpush1.xpose.msra.mxu0 0.0
        %1849 = vmatprep.subr.mxu0 0.0
        %1850 = vmatpush1.xpose.msra.mxu0 0.0
        %1851 = vmatprep.subr.mxu0 0.0
        %1852 = vmatpush1.xpose.msra.mxu0 0.0
        %1853 = vmatprep.subr.mxu0 0.0
        %1854 = vmatpush1.xpose.msra.mxu0 0.0
        %1855 = vmatprep.subr.mxu0 0.0
        %1856 = vmatpush1.xpose.msra.mxu0 0.0
        %1857 = vmatprep.subr.mxu0 0.0
        %1858 = vmatpush1.xpose.msra.mxu0 %v1829
        %1859 = vmatprep.subr.mxu0 0.0
        %1860 = vmatpush1.xpose.msra.mxu0 %v1827
        %1861 = vmatprep.subr.mxu0 0.0
        %1862 = vmatpush1.xpose.msra.mxu0 %v1825
        %1863 = vmatprep.subr.mxu0 0.0
        %1864 = vmatpush2.xpose.msra.mxu0 0.0
        %1865 = vmatprep.subr.mxu0 0.0
        %1866 = vmatpush2.xpose.msra.mxu0 0.0
        %1867 = vmatprep.subr.mxu0 0.0
        %1868 = vmatpush2.xpose.msra.mxu0 0.0
        %1869 = vmatprep.subr.mxu0 0.0
        %1870 = vmatpush2.xpose.msra.mxu0 0.0
        %1871 = vmatprep.subr.mxu0 0.0
        %1872 = vmatpush2.xpose.msra.mxu0 0.0
        %1873 = vmatprep.subr.mxu0 0.0
        %1874 = vmatpush2.xpose.msra.mxu0 0.0
        %1875 = vmatprep.subr.mxu0 0.0
        %1876 = vmatpush2.xpose.msra.mxu0 0.0
        %1877 = vmatprep.subr.mxu0 0.0
        %1878 = vmatpush2.xpose.msra.mxu0 0.0
        %1879 = vmatprep.subr.mxu0 0.0
        %1880 = vmatpush2.xpose.msra.mxu0 0.0
        %1881 = vmatprep.subr.mxu0 0.0
        %1882 = vmatpush2.xpose.msra.mxu0 0.0
        %1883 = vmatprep.subr.mxu0 0.0
        %1884 = vmatpush2.xpose.msra.mxu0 0.0
        %1885 = vmatprep.subr.mxu0 0.0
        %1886 = vmatpush2.xpose.msra.mxu0 0.0
        %1887 = vmatprep.subr.mxu0 0.0
        %1888 = vmatpush2.xpose.msra.mxu0 0.0
        %1889 = vmatprep.subr.mxu0 0.0
        %1890 = vmatpush2.xpose.msra.mxu0 0.0
        %1891 = vmatprep.subr.mxu0 0.0
        %1892 = vmatpush2.xpose.msra.mxu0 0.0
        %1893 = vmatprep.subr.mxu0 0.0
        %1894 = vmatpush2.xpose.msra.mxu0 0.0
        %1895 = vmatprep.mubr.f32.mxu0 0.0
        %1896 = vmatmul.mubr.f32.gmra.mxu0 %v1823
        %v1897 = vpop.f32.mrf.mxu0
        %v1898 = vadd.f32 0.0, %v1897
        %v1899 = vpop.f32.mrf.mxu0
        %1900 = vdwg.mxu0
        %v1901 = vsel %vm1382, %v1898, -inf
        %1902 = vmax.xlane.f32.xlu0 %v1901
        %v1903 = vpop.xlane.xlu0 %1902
        %v1904 = vsub.f32 %v1898, %v1903
        %v1905 = vmul.f32 %v1904, 1.442695
        %v1906 = vpow.pop %v1905
        %v1907 = vsel %vm1382, %v1906, 0.0
        %1908 = vadd.xlane.f32.xlu0 %v1907
        %v1909 = vpop.xlane.xlu0 %1908
        %v1910 = vrcp.pop %v1909
        %v1911 = vmul.f32 %v1906, %v1910
        %1915 = vrot.lane.b32.xlu0 %v1283, 64
        %v1916 = vpop.permute.xlu0 %1915
        %1917 = vrot.lane.b32.xlu0 %v1287, 64
        %v1918 = vpop.permute.xlu0 %1917
        %1919 = vrot.lane.b32.xlu0 %v1293, 64
        %v1920 = vpop.permute.xlu0 %1919
        %v1925 = vsel %vm1382, %v1911, 0
        %1927 = vmatprep.subr.mxu0 0.0
        %1928 = vmatpush1.msra.mxu0 0.0
        %1929 = vmatprep.subr.mxu0 0.0
        %1930 = vmatpush1.msra.mxu0 0.0
        %1931 = vmatprep.subr.mxu0 0.0
        %1932 = vmatpush1.msra.mxu0 0.0
        %1933 = vmatprep.subr.mxu0 0.0
        %1934 = vmatpush1.msra.mxu0 0.0
        %1935 = vmatprep.subr.mxu0 0.0
        %1936 = vmatpush1.msra.mxu0 0.0
        %1937 = vmatprep.subr.mxu0 0.0
        %1938 = vmatpush1.msra.mxu0 0.0
        %1939 = vmatprep.subr.mxu0 0.0
        %1940 = vmatpush1.msra.mxu0 0.0
        %1941 = vmatprep.subr.mxu0 0.0
        %1942 = vmatpush1.msra.mxu0 0.0
        %1943 = vmatprep.subr.mxu0 0.0
        %1944 = vmatpush1.msra.mxu0 0.0
        %1945 = vmatprep.subr.mxu0 0.0
        %1946 = vmatpush1.msra.mxu0 0.0
        %1947 = vmatprep.subr.mxu0 0.0
        %1948 = vmatpush1.msra.mxu0 0.0
        %1949 = vmatprep.subr.mxu0 0.0
        %1950 = vmatpush1.msra.mxu0 0.0
        %1951 = vmatprep.subr.mxu0 0.0
        %1952 = vmatpush1.msra.mxu0 0.0
        %1953 = vmatprep.subr.mxu0 0.0
        %1954 = vmatpush1.msra.mxu0 %v1920
        %1955 = vmatprep.subr.mxu0 0.0
        %1956 = vmatpush1.msra.mxu0 %v1918
        %1957 = vmatprep.subr.mxu0 0.0
        %1958 = vmatpush1.msra.mxu0 %v1916
        %1959 = vmatprep.subr.mxu0 0.0
        %1960 = vmatpush2.msra.mxu0 0.0
        %1961 = vmatprep.subr.mxu0 0.0
        %1962 = vmatpush2.msra.mxu0 0.0
        %1963 = vmatprep.subr.mxu0 0.0
        %1964 = vmatpush2.msra.mxu0 0.0
        %1965 = vmatprep.subr.mxu0 0.0
        %1966 = vmatpush2.msra.mxu0 0.0
        %1967 = vmatprep.subr.mxu0 0.0
        %1968 = vmatpush2.msra.mxu0 0.0
        %1969 = vmatprep.subr.mxu0 0.0
        %1970 = vmatpush2.msra.mxu0 0.0
        %1971 = vmatprep.subr.mxu0 0.0
        %1972 = vmatpush2.msra.mxu0 0.0
        %1973 = vmatprep.subr.mxu0 0.0
        %1974 = vmatpush2.msra.mxu0 0.0
        %1975 = vmatprep.subr.mxu0 0.0
        %1976 = vmatpush2.msra.mxu0 0.0
        %1977 = vmatprep.subr.mxu0 0.0
        %1978 = vmatpush2.msra.mxu0 0.0
        %1979 = vmatprep.subr.mxu0 0.0
        %1980 = vmatpush2.msra.mxu0 0.0
        %1981 = vmatprep.subr.mxu0 0.0
        %1982 = vmatpush2.msra.mxu0 0.0
        %1983 = vmatprep.subr.mxu0 0.0
        %1984 = vmatpush2.msra.mxu0 0.0
        %1985 = vmatprep.subr.mxu0 0.0
        %1986 = vmatpush2.msra.mxu0 0.0
        %1987 = vmatprep.subr.mxu0 0.0
        %1988 = vmatpush2.msra.mxu0 0.0
        %1989 = vmatprep.subr.mxu0 0.0
        %1990 = vmatpush2.msra.mxu0 0.0
        %1991 = vmatprep.mubr.f32.mxu0 0.0
        %1992 = vmatmul.mubr.f32.gmra.mxu0 %v1925
        %v1993 = vpop.f32.mrf.mxu0
        %v1994 = vadd.f32 0.0, %v1993
        %v1995 = vpop.f32.mrf.mxu0
        %1996 = vdwg.mxu0
        %1998 = vrot.lane.b32.xlu0 %v1646, 64
        %v1999 = vpop.permute.xlu0 %1998
        %2002 = vrot.lane.b32.xlu0 %v1994, 64
        %v2003 = vpop.permute.xlu0 %2002
        %v2005 = vsel %vm1299, %v1464, %v1999
        %v2006 = vsel %vm1299, %v1812, %v2003
        %v2007 = vpack.c.bf16 %v2005, %v2005
        %v2008 = vpack.c.bf16 %v2006, %v2006
        %v2009 = vld [vmem:[#allocation8] sm:$0xff]
        %v2010 = vld [vmem:[#allocation8 + $0x8] sm:$0xff]
        %v2011 = vld [vmem:[#allocation8 + $0x10] sm:$0xff]
        %v2012 = vld [vmem:[#allocation8 + $0x18] sm:$0xff]
        %v2013 = vld [vmem:[#allocation8 + $0x20] sm:$0xff]
        %v2014 = vld [vmem:[#allocation8 + $0x28] sm:$0xff]
        %v2015 = vld [vmem:[#allocation8 + $0x30] sm:$0xff]
        %v2016 = vld [vmem:[#allocation8 + $0x38] sm:$0xff]
        %v2017 = vld [vmem:[#allocation8 + $0x40] sm:$0xff]
        %v2018 = vld [vmem:[#allocation8 + $0x48] sm:$0xff]
        %v2019 = vld [vmem:[#allocation8 + $0x50] sm:$0xff]
        %v2020 = vld [vmem:[#allocation8 + $0x58] sm:$0xff]
        %v2021 = vld [vmem:[#allocation8 + $0x60] sm:$0xff]
        %v2022 = vld [vmem:[#allocation8 + $0x68] sm:$0xff]
        %v2023 = vld [vmem:[#allocation8 + $0x70] sm:$0xff]
        %v2024 = vld [vmem:[#allocation8 + $0x78] sm:$0xff]
        %v2025 = vld [vmem:[#allocation8 + $0x80] sm:$0xff]
        %v2026 = vld [vmem:[#allocation8 + $0x88] sm:$0xff]
        %v2027 = vld [vmem:[#allocation8 + $0x90] sm:$0xff]
        %v2028 = vld [vmem:[#allocation8 + $0x98] sm:$0xff]
        %v2029 = vld [vmem:[#allocation8 + $0xa0] sm:$0xff]
        %v2030 = vld [vmem:[#allocation8 + $0xa8] sm:$0xff]
        %v2031 = vld [vmem:[#allocation8 + $0xb0] sm:$0xff]
        %v2032 = vld [vmem:[#allocation8 + $0xb8] sm:$0xff]
        %v2033 = vld [vmem:[#allocation8 + $0xc0] sm:$0xff]
        %v2034 = vld [vmem:[#allocation8 + $0xc8] sm:$0xff]
        %v2035 = vld [vmem:[#allocation8 + $0xd0] sm:$0xff]
        %v2036 = vld [vmem:[#allocation8 + $0xd8] sm:$0xff]
        %v2037 = vld [vmem:[#allocation8 + $0xe0] sm:$0xff]
        %v2038 = vld [vmem:[#allocation8 + $0xe8] sm:$0xff]
        %v2039 = vld [vmem:[#allocation8 + $0xf0] sm:$0xff]
        %v2040 = vld [vmem:[#allocation8 + $0xf8] sm:$0xff]
        %v2041 = vld [vmem:[%s4] sm:$0x3]
        %v2043 = vlaneseq
        %v2044 = vshrl.u32 %v2043, 7
        %v2045 = vsub.s32 0, %v2044
        %v2046 = vrot.slane %v2041, %v2045
        %v2047 = vlaneseq
        %v2048 = vshrl.u32 %v2047, 7
        %v2049 = vsub.s32 1, %v2048
        %v2050 = vrot.slane %v2041, %v2049
        %v2085 = vunpack.c.l.b16 %v2009
        %v2086 = vunpack.c.h.b16 %v2009
        %v2087 = vunpack.c.l.b16 %v2010
        %v2088 = vunpack.c.h.b16 %v2010
        %v2089 = vunpack.c.l.b16 %v2011
        %v2090 = vunpack.c.h.b16 %v2011
        %v2091 = vunpack.c.l.b16 %v2012
        %v2092 = vunpack.c.h.b16 %v2012
        %v2093 = vunpack.c.l.b16 %v2013
        %v2094 = vunpack.c.h.b16 %v2013
        %v2095 = vunpack.c.l.b16 %v2014
        %v2096 = vunpack.c.h.b16 %v2014
        %v2097 = vunpack.c.l.b16 %v2015
        %v2098 = vunpack.c.h.b16 %v2015
        %v2099 = vunpack.c.l.b16 %v2016
        %v2100 = vunpack.c.h.b16 %v2016
        %v2101 = vunpack.c.l.b16 %v2017
        %v2102 = vunpack.c.h.b16 %v2017
        %v2103 = vunpack.c.l.b16 %v2018
        %v2104 = vunpack.c.h.b16 %v2018
        %v2105 = vunpack.c.l.b16 %v2019
        %v2106 = vunpack.c.h.b16 %v2019
        %v2107 = vunpack.c.l.b16 %v2020
        %v2108 = vunpack.c.h.b16 %v2020
        %v2109 = vunpack.c.l.b16 %v2021
        %v2110 = vunpack.c.h.b16 %v2021
        %v2111 = vunpack.c.l.b16 %v2022
        %v2112 = vunpack.c.h.b16 %v2022
        %v2113 = vunpack.c.l.b16 %v2023
        %v2114 = vunpack.c.h.b16 %v2023
        %v2115 = vunpack.c.l.b16 %v2024
        %v2116 = vunpack.c.h.b16 %v2024
        %v2117 = vunpack.c.l.b16 %v2025
        %v2118 = vunpack.c.h.b16 %v2025
        %v2119 = vunpack.c.l.b16 %v2026
        %v2120 = vunpack.c.h.b16 %v2026
        %v2121 = vunpack.c.l.b16 %v2027
        %v2122 = vunpack.c.h.b16 %v2027
        %v2123 = vunpack.c.l.b16 %v2028
        %v2124 = vunpack.c.h.b16 %v2028
        %v2125 = vunpack.c.l.b16 %v2029
        %v2126 = vunpack.c.h.b16 %v2029
        %v2127 = vunpack.c.l.b16 %v2030
        %v2128 = vunpack.c.h.b16 %v2030
        %v2129 = vunpack.c.l.b16 %v2031
        %v2130 = vunpack.c.h.b16 %v2031
        %v2131 = vunpack.c.l.b16 %v2032
        %v2132 = vunpack.c.h.b16 %v2032
        %v2133 = vunpack.c.l.b16 %v2033
        %v2134 = vunpack.c.h.b16 %v2033
        %v2135 = vunpack.c.l.b16 %v2034
        %v2136 = vunpack.c.h.b16 %v2034
        %v2137 = vunpack.c.l.b16 %v2035
        %v2138 = vunpack.c.h.b16 %v2035
        %v2139 = vunpack.c.l.b16 %v2036
        %v2140 = vunpack.c.h.b16 %v2036
        %v2141 = vunpack.c.l.b16 %v2037
        %v2142 = vunpack.c.h.b16 %v2037
        %v2143 = vunpack.c.l.b16 %v2038
        %v2144 = vunpack.c.h.b16 %v2038
        %v2145 = vunpack.c.l.b16 %v2039
        %v2146 = vunpack.c.h.b16 %v2039
        %v2147 = vunpack.c.l.b16 %v2040
        %v2148 = vunpack.c.h.b16 %v2040
        %v2149 = vpack.c.b16 %v2087, %v2085
        %v2150 = vpack.c.b16 %v2088, %v2086
        %v2151 = vpack.c.b16 %v2091, %v2089
        %v2152 = vpack.c.b16 %v2092, %v2090
        %v2153 = vpack.c.b16 %v2095, %v2093
        %v2154 = vpack.c.b16 %v2096, %v2094
        %v2155 = vpack.c.b16 %v2099, %v2097
        %v2156 = vpack.c.b16 %v2100, %v2098
        %v2157 = vpack.c.b16 %v2103, %v2101
        %v2158 = vpack.c.b16 %v2104, %v2102
        %v2159 = vpack.c.b16 %v2107, %v2105
        %v2160 = vpack.c.b16 %v2108, %v2106
        %v2161 = vpack.c.b16 %v2111, %v2109
        %v2162 = vpack.c.b16 %v2112, %v2110
        %v2163 = vpack.c.b16 %v2115, %v2113
        %v2164 = vpack.c.b16 %v2116, %v2114
        %v2165 = vpack.c.b16 %v2119, %v2117
        %v2166 = vpack.c.b16 %v2120, %v2118
        %v2167 = vpack.c.b16 %v2123, %v2121
        %v2168 = vpack.c.b16 %v2124, %v2122
        %v2169 = vpack.c.b16 %v2127, %v2125
        %v2170 = vpack.c.b16 %v2128, %v2126
        %v2171 = vpack.c.b16 %v2131, %v2129
        %v2172 = vpack.c.b16 %v2132, %v2130
        %v2173 = vpack.c.b16 %v2135, %v2133
        %v2174 = vpack.c.b16 %v2136, %v2134
        %v2175 = vpack.c.b16 %v2139, %v2137
        %v2176 = vpack.c.b16 %v2140, %v2138
        %v2177 = vpack.c.b16 %v2143, %v2141
        %v2178 = vpack.c.b16 %v2144, %v2142
        %v2179 = vpack.c.b16 %v2147, %v2145
        %v2180 = vpack.c.b16 %v2148, %v2146
        %2213 = vmatprep.subr.bf16.mxu0 %v2164
        %2214 = vmatpush1.bf16.msra.mxu0 %v2163
        %2215 = vmatprep.subr.bf16.mxu0 %v2162
        %2216 = vmatpush1.bf16.msra.mxu0 %v2161
        %2217 = vmatprep.subr.bf16.mxu0 %v2160
        %2218 = vmatpush1.bf16.msra.mxu0 %v2159
        %2219 = vmatprep.subr.bf16.mxu0 %v2158
        %2220 = vmatpush1.bf16.msra.mxu0 %v2157
        %2221 = vmatprep.subr.bf16.mxu0 %v2156
        %2222 = vmatpush1.bf16.msra.mxu0 %v2155
        %2223 = vmatprep.subr.bf16.mxu0 %v2154
        %2224 = vmatpush1.bf16.msra.mxu0 %v2153
        %2225 = vmatprep.subr.bf16.mxu0 %v2152
        %2226 = vmatpush1.bf16.msra.mxu0 %v2151
        %2227 = vmatprep.subr.bf16.mxu0 %v2150
        %2228 = vmatpush1.bf16.msra.mxu0 %v2149
        %2229 = vmatprep.subr.bf16.mxu0 %v2180
        %2230 = vmatpush2.bf16.msra.mxu0 %v2179
        %2231 = vmatprep.subr.bf16.mxu0 %v2178
        %2232 = vmatpush2.bf16.msra.mxu0 %v2177
        %2233 = vmatprep.subr.bf16.mxu0 %v2176
        %2234 = vmatpush2.bf16.msra.mxu0 %v2175
        %2235 = vmatprep.subr.bf16.mxu0 %v2174
        %2236 = vmatpush2.bf16.msra.mxu0 %v2173
        %2237 = vmatprep.subr.bf16.mxu0 %v2172
        %2238 = vmatpush2.bf16.msra.mxu0 %v2171
        %2239 = vmatprep.subr.bf16.mxu0 %v2170
        %2240 = vmatpush2.bf16.msra.mxu0 %v2169
        %2241 = vmatprep.subr.bf16.mxu0 %v2168
        %2242 = vmatpush2.bf16.msra.mxu0 %v2167
        %2243 = vmatprep.subr.bf16.mxu0 %v2166
        %2244 = vmatpush2.bf16.msra.mxu0 %v2165
        %2245 = vmatprep.mubr.bf16.mxu0 %v2008
        %2246 = vmatmul.mubr.bf16.gmra.mxu0 %v2007
        %v2247 = vpop.f32.mrf.mxu0
        %v2248 = vadd.f32 %v2046, %v2247
        %v2249 = vpop.f32.mrf.mxu0
        %v2250 = vadd.f32 %v2050, %v2249
        %v2251 = vpop.f32.mrf.mxu0
        %v2252 = vpop.f32.mrf.mxu0
        %2253 = vdwg.mxu0
        %v2254 = vadd.f32 %v534, %v2248
        %v2255 = vadd.f32 %v535, %v2250
        %v2256 = vld [vmem:[%s5] sm:$0x3]
        %v2257 = vld [vmem:[%s6] sm:$0x3]
        %v2258 = vadd.f32 %v2254, %v2255
        %2259 = vadd.xlane.f32.xlu0 %v2258
        %v2260 = vpop.xlane.xlu0 %2259
        %v2261 = vrcp.pop 256.0
        %v2262 = vmul.f32 %v2260, %v2261
        %v2263 = vsub.f32 %v2254, %v2262
        %v2264 = vsub.f32 %v2255, %v2262
        %v2265 = vmul.f32 %v2263, %v2263
        %v2266 = vmul.f32 %v2264, %v2264
        %v2267 = vadd.f32 %v2265, %v2266
        %2268 = vadd.xlane.f32.xlu0 %v2267
        %v2269 = vpop.xlane.xlu0 %2268
        %v2270 = vmul.f32 %v2269, %v2261
        %v2271 = vadd.f32 %v2270, 1e-05
        %v2272 = vrsqrt.pop %v2271
        %v2273 = vmul.f32 %v2263, %v2272
        %v2274 = vmul.f32 %v2264, %v2272
        %v2276 = vlaneseq
        %v2277 = vshrl.u32 %v2276, 7
        %v2278 = vsub.s32 0, %v2277
        %v2279 = vrot.slane %v2256, %v2278
        %v2280 = vlaneseq
        %v2281 = vshrl.u32 %v2280, 7
        %v2282 = vsub.s32 1, %v2281
        %v2283 = vrot.slane %v2256, %v2282
        %v2286 = vmul.f32 %v2273, %v2279
        %v2287 = vmul.f32 %v2274, %v2283
        %v2289 = vlaneseq
        %v2290 = vshrl.u32 %v2289, 7
        %v2291 = vsub.s32 0, %v2290
        %v2292 = vrot.slane %v2257, %v2291
        %v2293 = vlaneseq
        %v2294 = vshrl.u32 %v2293, 7
        %v2295 = vsub.s32 1, %v2294
        %v2296 = vrot.slane %v2257, %v2295
        %v2299 = vadd.f32 %v2286, %v2292
        %v2300 = vadd.f32 %v2287, %v2296
        %v2301 = vpack.c.bf16 %v2299, %v2299
        %v2302 = vpack.c.bf16 %v2300, %v2300
        %v2303 = vld [vmem:[#allocation10] sm:$0xff]
        %v2304 = vld [vmem:[#allocation10 + $0x8] sm:$0xff]
        %v2305 = vld [vmem:[#allocation10 + $0x10] sm:$0xff]
        %v2306 = vld [vmem:[#allocation10 + $0x18] sm:$0xff]
        %v2307 = vld [vmem:[#allocation10 + $0x20] sm:$0xff]
        %v2308 = vld [vmem:[#allocation10 + $0x28] sm:$0xff]
        %v2309 = vld [vmem:[#allocation10 + $0x30] sm:$0xff]
        %v2310 = vld [vmem:[#allocation10 + $0x38] sm:$0xff]
        %v2311 = vld [vmem:[#allocation10 + $0x40] sm:$0xff]
        %v2312 = vld [vmem:[#allocation10 + $0x48] sm:$0xff]
        %v2313 = vld [vmem:[#allocation10 + $0x50] sm:$0xff]
        %v2314 = vld [vmem:[#allocation10 + $0x58] sm:$0xff]
        %v2315 = vld [vmem:[#allocation10 + $0x60] sm:$0xff]
        %v2316 = vld [vmem:[#allocation10 + $0x68] sm:$0xff]
        %v2317 = vld [vmem:[#allocation10 + $0x70] sm:$0xff]
        %v2318 = vld [vmem:[#allocation10 + $0x78] sm:$0xff]
        %v2319 = vld [vmem:[#allocation10 + $0x80] sm:$0xff]
        %v2320 = vld [vmem:[#allocation10 + $0x88] sm:$0xff]
        %v2321 = vld [vmem:[#allocation10 + $0x90] sm:$0xff]
        %v2322 = vld [vmem:[#allocation10 + $0x98] sm:$0xff]
        %v2323 = vld [vmem:[#allocation10 + $0xa0] sm:$0xff]
        %v2324 = vld [vmem:[#allocation10 + $0xa8] sm:$0xff]
        %v2325 = vld [vmem:[#allocation10 + $0xb0] sm:$0xff]
        %v2326 = vld [vmem:[#allocation10 + $0xb8] sm:$0xff]
        %v2327 = vld [vmem:[#allocation10 + $0xc0] sm:$0xff]
        %v2328 = vld [vmem:[#allocation10 + $0xc8] sm:$0xff]
        %v2329 = vld [vmem:[#allocation10 + $0xd0] sm:$0xff]
        %v2330 = vld [vmem:[#allocation10 + $0xd8] sm:$0xff]
        %v2331 = vld [vmem:[#allocation10 + $0xe0] sm:$0xff]
        %v2332 = vld [vmem:[#allocation10 + $0xe8] sm:$0xff]
        %v2333 = vld [vmem:[#allocation10 + $0xf0] sm:$0xff]
        %v2334 = vld [vmem:[#allocation10 + $0xf8] sm:$0xff]
        %v2335 = vld [vmem:[#allocation10 + $0x100] sm:$0xff]
        %v2336 = vld [vmem:[#allocation10 + $0x108] sm:$0xff]
        %v2337 = vld [vmem:[#allocation10 + $0x110] sm:$0xff]
        %v2338 = vld [vmem:[#allocation10 + $0x118] sm:$0xff]
        %v2339 = vld [vmem:[#allocation10 + $0x120] sm:$0xff]
        %v2340 = vld [vmem:[#allocation10 + $0x128] sm:$0xff]
        %v2341 = vld [vmem:[#allocation10 + $0x130] sm:$0xff]
        %v2342 = vld [vmem:[#allocation10 + $0x138] sm:$0xff]
        %v2343 = vld [vmem:[#allocation10 + $0x140] sm:$0xff]
        %v2344 = vld [vmem:[#allocation10 + $0x148] sm:$0xff]
        %v2345 = vld [vmem:[#allocation10 + $0x150] sm:$0xff]
        %v2346 = vld [vmem:[#allocation10 + $0x158] sm:$0xff]
        %v2347 = vld [vmem:[#allocation10 + $0x160] sm:$0xff]
        %v2348 = vld [vmem:[#allocation10 + $0x168] sm:$0xff]
        %v2349 = vld [vmem:[#allocation10 + $0x170] sm:$0xff]
        %v2350 = vld [vmem:[#allocation10 + $0x178] sm:$0xff]
        %v2351 = vld [vmem:[#allocation10 + $0x180] sm:$0xff]
        %v2352 = vld [vmem:[#allocation10 + $0x188] sm:$0xff]
        %v2353 = vld [vmem:[#allocation10 + $0x190] sm:$0xff]
        %v2354 = vld [vmem:[#allocation10 + $0x198] sm:$0xff]
        %v2355 = vld [vmem:[#allocation10 + $0x1a0] sm:$0xff]
        %v2356 = vld [vmem:[#allocation10 + $0x1a8] sm:$0xff]
        %v2357 = vld [vmem:[#allocation10 + $0x1b0] sm:$0xff]
        %v2358 = vld [vmem:[#allocation10 + $0x1b8] sm:$0xff]
        %v2359 = vld [vmem:[#allocation10 + $0x1c0] sm:$0xff]
        %v2360 = vld [vmem:[#allocation10 + $0x1c8] sm:$0xff]
        %v2361 = vld [vmem:[#allocation10 + $0x1d0] sm:$0xff]
        %v2362 = vld [vmem:[#allocation10 + $0x1d8] sm:$0xff]
        %v2363 = vld [vmem:[#allocation10 + $0x1e0] sm:$0xff]
        %v2364 = vld [vmem:[#allocation10 + $0x1e8] sm:$0xff]
        %v2365 = vld [vmem:[#allocation10 + $0x1f0] sm:$0xff]
        %v2366 = vld [vmem:[#allocation10 + $0x1f8] sm:$0xff]
        %v2367 = vld [vmem:[%s8] sm:$0xf]
        %v2369 = vlaneseq
        %v2370 = vshrl.u32 %v2369, 7
        %v2371 = vsub.s32 0, %v2370
        %v2372 = vrot.slane %v2367, %v2371
        %v2373 = vlaneseq
        %v2374 = vshrl.u32 %v2373, 7
        %v2375 = vsub.s32 1, %v2374
        %v2376 = vrot.slane %v2367, %v2375
        %v2377 = vlaneseq
        %v2378 = vshrl.u32 %v2377, 7
        %v2379 = vsub.s32 2, %v2378
        %v2380 = vrot.slane %v2367, %v2379
        %v2381 = vlaneseq
        %v2382 = vshrl.u32 %v2381, 7
        %v2383 = vsub.s32 3, %v2382
        %v2384 = vrot.slane %v2367, %v2383
        %v2453 = vunpack.c.l.b16 %v2303
        %v2454 = vunpack.c.h.b16 %v2303
        %v2455 = vunpack.c.l.b16 %v2304
        %v2456 = vunpack.c.h.b16 %v2304
        %v2457 = vunpack.c.l.b16 %v2305
        %v2458 = vunpack.c.h.b16 %v2305
        %v2459 = vunpack.c.l.b16 %v2306
        %v2460 = vunpack.c.h.b16 %v2306
        %v2461 = vunpack.c.l.b16 %v2307
        %v2462 = vunpack.c.h.b16 %v2307
        %v2463 = vunpack.c.l.b16 %v2308
        %v2464 = vunpack.c.h.b16 %v2308
        %v2465 = vunpack.c.l.b16 %v2309
        %v2466 = vunpack.c.h.b16 %v2309
        %v2467 = vunpack.c.l.b16 %v2310
        %v2468 = vunpack.c.h.b16 %v2310
        %v2469 = vunpack.c.l.b16 %v2311
        %v2470 = vunpack.c.h.b16 %v2311
        %v2471 = vunpack.c.l.b16 %v2312
        %v2472 = vunpack.c.h.b16 %v2312
        %v2473 = vunpack.c.l.b16 %v2313
        %v2474 = vunpack.c.h.b16 %v2313
        %v2475 = vunpack.c.l.b16 %v2314
        %v2476 = vunpack.c.h.b16 %v2314
        %v2477 = vunpack.c.l.b16 %v2315
        %v2478 = vunpack.c.h.b16 %v2315
        %v2479 = vunpack.c.l.b16 %v2316
        %v2480 = vunpack.c.h.b16 %v2316
        %v2481 = vunpack.c.l.b16 %v2317
        %v2482 = vunpack.c.h.b16 %v2317
        %v2483 = vunpack.c.l.b16 %v2318
        %v2484 = vunpack.c.h.b16 %v2318
        %v2485 = vunpack.c.l.b16 %v2319
        %v2486 = vunpack.c.h.b16 %v2319
        %v2487 = vunpack.c.l.b16 %v2320
        %v2488 = vunpack.c.h.b16 %v2320
        %v2489 = vunpack.c.l.b16 %v2321
        %v2490 = vunpack.c.h.b16 %v2321
        %v2491 = vunpack.c.l.b16 %v2322
        %v2492 = vunpack.c.h.b16 %v2322
        %v2493 = vunpack.c.l.b16 %v2323
        %v2494 = vunpack.c.h.b16 %v2323
        %v2495 = vunpack.c.l.b16 %v2324
        %v2496 = vunpack.c.h.b16 %v2324
        %v2497 = vunpack.c.l.b16 %v2325
        %v2498 = vunpack.c.h.b16 %v2325
        %v2499 = vunpack.c.l.b16 %v2326
        %v2500 = vunpack.c.h.b16 %v2326
        %v2501 = vunpack.c.l.b16 %v2327
        %v2502 = vunpack.c.h.b16 %v2327
        %v2503 = vunpack.c.l.b16 %v2328
        %v2504 = vunpack.c.h.b16 %v2328
        %v2505 = vunpack.c.l.b16 %v2329
        %v2506 = vunpack.c.h.b16 %v2329
        %v2507 = vunpack.c.l.b16 %v2330
        %v2508 = vunpack.c.h.b16 %v2330
        %v2509 = vunpack.c.l.b16 %v2331
        %v2510 = vunpack.c.h.b16 %v2331
        %v2511 = vunpack.c.l.b16 %v2332
        %v2512 = vunpack.c.h.b16 %v2332
        %v2513 = vunpack.c.l.b16 %v2333
        %v2514 = vunpack.c.h.b16 %v2333
        %v2515 = vunpack.c.l.b16 %v2334
        %v2516 = vunpack.c.h.b16 %v2334
        %v2517 = vunpack.c.l.b16 %v2335
        %v2518 = vunpack.c.h.b16 %v2335
        %v2519 = vunpack.c.l.b16 %v2336
        %v2520 = vunpack.c.h.b16 %v2336
        %v2521 = vunpack.c.l.b16 %v2337
        %v2522 = vunpack.c.h.b16 %v2337
        %v2523 = vunpack.c.l.b16 %v2338
        %v2524 = vunpack.c.h.b16 %v2338
        %v2525 = vunpack.c.l.b16 %v2339
        %v2526 = vunpack.c.h.b16 %v2339
        %v2527 = vunpack.c.l.b16 %v2340
        %v2528 = vunpack.c.h.b16 %v2340
        %v2529 = vunpack.c.l.b16 %v2341
        %v2530 = vunpack.c.h.b16 %v2341
        %v2531 = vunpack.c.l.b16 %v2342
        %v2532 = vunpack.c.h.b16 %v2342
        %v2533 = vunpack.c.l.b16 %v2343
        %v2534 = vunpack.c.h.b16 %v2343
        %v2535 = vunpack.c.l.b16 %v2344
        %v2536 = vunpack.c.h.b16 %v2344
        %v2537 = vunpack.c.l.b16 %v2345
        %v2538 = vunpack.c.h.b16 %v2345
        %v2539 = vunpack.c.l.b16 %v2346
        %v2540 = vunpack.c.h.b16 %v2346
        %v2541 = vunpack.c.l.b16 %v2347
        %v2542 = vunpack.c.h.b16 %v2347
        %v2543 = vunpack.c.l.b16 %v2348
        %v2544 = vunpack.c.h.b16 %v2348
        %v2545 = vunpack.c.l.b16 %v2349
        %v2546 = vunpack.c.h.b16 %v2349
        %v2547 = vunpack.c.l.b16 %v2350
        %v2548 = vunpack.c.h.b16 %v2350
        %v2549 = vunpack.c.l.b16 %v2351
        %v2550 = vunpack.c.h.b16 %v2351
        %v2551 = vunpack.c.l.b16 %v2352
        %v2552 = vunpack.c.h.b16 %v2352
        %v2553 = vunpack.c.l.b16 %v2353
        %v2554 = vunpack.c.h.b16 %v2353
        %v2555 = vunpack.c.l.b16 %v2354
        %v2556 = vunpack.c.h.b16 %v2354
        %v2557 = vunpack.c.l.b16 %v2355
        %v2558 = vunpack.c.h.b16 %v2355
        %v2559 = vunpack.c.l.b16 %v2356
        %v2560 = vunpack.c.h.b16 %v2356
        %v2561 = vunpack.c.l.b16 %v2357
        %v2562 = vunpack.c.h.b16 %v2357
        %v2563 = vunpack.c.l.b16 %v2358
        %v2564 = vunpack.c.h.b16 %v2358
        %v2565 = vunpack.c.l.b16 %v2359
        %v2566 = vunpack.c.h.b16 %v2359
        %v2567 = vunpack.c.l.b16 %v2360
        %v2568 = vunpack.c.h.b16 %v2360
        %v2569 = vunpack.c.l.b16 %v2361
        %v2570 = vunpack.c.h.b16 %v2361
        %v2571 = vunpack.c.l.b16 %v2362
        %v2572 = vunpack.c.h.b16 %v2362
        %v2573 = vunpack.c.l.b16 %v2363
        %v2574 = vunpack.c.h.b16 %v2363
        %v2575 = vunpack.c.l.b16 %v2364
        %v2576 = vunpack.c.h.b16 %v2364
        %v2577 = vunpack.c.l.b16 %v2365
        %v2578 = vunpack.c.h.b16 %v2365
        %v2579 = vunpack.c.l.b16 %v2366
        %v2580 = vunpack.c.h.b16 %v2366
        %v2581 = vpack.c.b16 %v2457, %v2453
        %v2582 = vpack.c.b16 %v2458, %v2454
        %v2583 = vpack.c.b16 %v2459, %v2455
        %v2584 = vpack.c.b16 %v2460, %v2456
        %v2585 = vpack.c.b16 %v2465, %v2461
        %v2586 = vpack.c.b16 %v2466, %v2462
        %v2587 = vpack.c.b16 %v2467, %v2463
        %v2588 = vpack.c.b16 %v2468, %v2464
        %v2589 = vpack.c.b16 %v2473, %v2469
        %v2590 = vpack.c.b16 %v2474, %v2470
        %v2591 = vpack.c.b16 %v2475, %v2471
        %v2592 = vpack.c.b16 %v2476, %v2472
        %v2593 = vpack.c.b16 %v2481, %v2477
        %v2594 = vpack.c.b16 %v2482, %v2478
        %v2595 = vpack.c.b16 %v2483, %v2479
        %v2596 = vpack.c.b16 %v2484, %v2480
        %v2597 = vpack.c.b16 %v2489, %v2485
        %v2598 = vpack.c.b16 %v2490, %v2486
        %v2599 = vpack.c.b16 %v2491, %v2487
        %v2600 = vpack.c.b16 %v2492, %v2488
        %v2601 = vpack.c.b16 %v2497, %v2493
        %v2602 = vpack.c.b16 %v2498, %v2494
        %v2603 = vpack.c.b16 %v2499, %v2495
        %v2604 = vpack.c.b16 %v2500, %v2496
        %v2605 = vpack.c.b16 %v2505, %v2501
        %v2606 = vpack.c.b16 %v2506, %v2502
        %v2607 = vpack.c.b16 %v2507, %v2503
        %v2608 = vpack.c.b16 %v2508, %v2504
        %v2609 = vpack.c.b16 %v2513, %v2509
        %v2610 = vpack.c.b16 %v2514, %v2510
        %v2611 = vpack.c.b16 %v2515, %v2511
        %v2612 = vpack.c.b16 %v2516, %v2512
        %v2613 = vpack.c.b16 %v2521, %v2517
        %v2614 = vpack.c.b16 %v2522, %v2518
        %v2615 = vpack.c.b16 %v2523, %v2519
        %v2616 = vpack.c.b16 %v2524, %v2520
        %v2617 = vpack.c.b16 %v2529, %v2525
        %v2618 = vpack.c.b16 %v2530, %v2526
        %v2619 = vpack.c.b16 %v2531, %v2527
        %v2620 = vpack.c.b16 %v2532, %v2528
        %v2621 = vpack.c.b16 %v2537, %v2533
        %v2622 = vpack.c.b16 %v2538, %v2534
        %v2623 = vpack.c.b16 %v2539, %v2535
        %v2624 = vpack.c.b16 %v2540, %v2536
        %v2625 = vpack.c.b16 %v2545, %v2541
        %v2626 = vpack.c.b16 %v2546, %v2542
        %v2627 = vpack.c.b16 %v2547, %v2543
        %v2628 = vpack.c.b16 %v2548, %v2544
        %v2629 = vpack.c.b16 %v2553, %v2549
        %v2630 = vpack.c.b16 %v2554, %v2550
        %v2631 = vpack.c.b16 %v2555, %v2551
        %v2632 = vpack.c.b16 %v2556, %v2552
        %v2633 = vpack.c.b16 %v2561, %v2557
        %v2634 = vpack.c.b16 %v2562, %v2558
        %v2635 = vpack.c.b16 %v2563, %v2559
        %v2636 = vpack.c.b16 %v2564, %v2560
        %v2637 = vpack.c.b16 %v2569, %v2565
        %v2638 = vpack.c.b16 %v2570, %v2566
        %v2639 = vpack.c.b16 %v2571, %v2567
        %v2640 = vpack.c.b16 %v2572, %v2568
        %v2641 = vpack.c.b16 %v2577, %v2573
        %v2642 = vpack.c.b16 %v2578, %v2574
        %v2643 = vpack.c.b16 %v2579, %v2575
        %v2644 = vpack.c.b16 %v2580, %v2576
        %2709 = vmatprep.subr.bf16.mxu0 %v2610
        %2710 = vmatpush1.bf16.msra.mxu0 %v2609
        %2711 = vmatprep.subr.bf16.mxu0 %v2606
        %2712 = vmatpush1.bf16.msra.mxu0 %v2605
        %2713 = vmatprep.subr.bf16.mxu0 %v2602
        %2714 = vmatpush1.bf16.msra.mxu0 %v2601
        %2715 = vmatprep.subr.bf16.mxu0 %v2598
        %2716 = vmatpush1.bf16.msra.mxu0 %v2597
        %2717 = vmatprep.subr.bf16.mxu0 %v2594
        %2718 = vmatpush1.bf16.msra.mxu0 %v2593
        %2719 = vmatprep.subr.bf16.mxu0 %v2590
        %2720 = vmatpush1.bf16.msra.mxu0 %v2589
        %2721 = vmatprep.subr.bf16.mxu0 %v2586
        %2722 = vmatpush1.bf16.msra.mxu0 %v2585
        %2723 = vmatprep.subr.bf16.mxu0 %v2582
        %2724 = vmatpush1.bf16.msra.mxu0 %v2581
        %2725 = vmatprep.subr.bf16.mxu0 %v2642
        %2726 = vmatpush2.bf16.msra.mxu0 %v2641
        %2727 = vmatprep.subr.bf16.mxu0 %v2638
        %2728 = vmatpush2.bf16.msra.mxu0 %v2637
        %2729 = vmatprep.subr.bf16.mxu0 %v2634
        %2730 = vmatpush2.bf16.msra.mxu0 %v2633
        %2731 = vmatprep.subr.bf16.mxu0 %v2630
        %2732 = vmatpush2.bf16.msra.mxu0 %v2629
        %2733 = vmatprep.subr.bf16.mxu0 %v2626
        %2734 = vmatpush2.bf16.msra.mxu0 %v2625
        %2735 = vmatprep.subr.bf16.mxu0 %v2622
        %2736 = vmatpush2.bf16.msra.mxu0 %v2621
        %2737 = vmatprep.subr.bf16.mxu0 %v2618
        %2738 = vmatpush2.bf16.msra.mxu0 %v2617
        %2739 = vmatprep.subr.bf16.mxu0 %v2614
        %2740 = vmatpush2.bf16.msra.mxu0 %v2613
        %2741 = vmatprep.mubr.bf16.mxu0 %v2302
        %2742 = vmatmul.mubr.bf16.gmra.mxu0 %v2301
        %v2743 = vpop.f32.mrf.mxu0
        %v2744 = vadd.f32 %v2372, %v2743
        %v2745 = vpop.f32.mrf.mxu0
        %v2746 = vadd.f32 %v2376, %v2745
        %v2747 = vpop.f32.mrf.mxu0
        %v2748 = vpop.f32.mrf.mxu0
        %2749 = vdwg.mxu0
        %2750 = vmatprep.subr.bf16.mxu0 %v2612
        %2751 = vmatpush1.bf16.msra.mxu0 %v2611
        %2752 = vmatprep.subr.bf16.mxu0 %v2608
        %2753 = vmatpush1.bf16.msra.mxu0 %v2607
        %2754 = vmatprep.subr.bf16.mxu0 %v2604
        %2755 = vmatpush1.bf16.msra.mxu0 %v2603
        %2756 = vmatprep.subr.bf16.mxu0 %v2600
        %2757 = vmatpush1.bf16.msra.mxu0 %v2599
        %2758 = vmatprep.subr.bf16.mxu0 %v2596
        %2759 = vmatpush1.bf16.msra.mxu0 %v2595
        %2760 = vmatprep.subr.bf16.mxu0 %v2592
        %2761 = vmatpush1.bf16.msra.mxu0 %v2591
        %2762 = vmatprep.subr.bf16.mxu0 %v2588
        %2763 = vmatpush1.bf16.msra.mxu0 %v2587
        %2764 = vmatprep.subr.bf16.mxu0 %v2584
        %2765 = vmatpush1.bf16.msra.mxu0 %v2583
        %2766 = vmatprep.subr.bf16.mxu0 %v2644
        %2767 = vmatpush2.bf16.msra.mxu0 %v2643
        %2768 = vmatprep.subr.bf16.mxu0 %v2640
        %2769 = vmatpush2.bf16.msra.mxu0 %v2639
        %2770 = vmatprep.subr.bf16.mxu0 %v2636
        %2771 = vmatpush2.bf16.msra.mxu0 %v2635
        %2772 = vmatprep.subr.bf16.mxu0 %v2632
        %2773 = vmatpush2.bf16.msra.mxu0 %v2631
        %2774 = vmatprep.subr.bf16.mxu0 %v2628
        %2775 = vmatpush2.bf16.msra.mxu0 %v2627
        %2776 = vmatprep.subr.bf16.mxu0 %v2624
        %2777 = vmatpush2.bf16.msra.mxu0 %v2623
        %2778 = vmatprep.subr.bf16.mxu0 %v2620
        %2779 = vmatpush2.bf16.msra.mxu0 %v2619
        %2780 = vmatprep.subr.bf16.mxu0 %v2616
        %2781 = vmatpush2.bf16.msra.mxu0 %v2615
        %2782 = vmatprep.mubr.bf16.mxu0 %v2302
        %2783 = vmatmul.mubr.bf16.gmra.mxu0 %v2301
        %v2784 = vpop.f32.mrf.mxu0
        %v2785 = vadd.f32 %v2380, %v2784
        %v2786 = vpop.f32.mrf.mxu0
        %v2787 = vadd.f32 %v2384, %v2786
        %v2788 = vpop.f32.mrf.mxu0
        %v2789 = vpop.f32.mrf.mxu0
        %2790 = vdwg.mxu0
        %v2791 = vmax.f32 %v2744, 0.0
        %v2792 = vmax.f32 %v2746, 0.0
        %v2793 = vmax.f32 %v2785, 0.0
        %v2794 = vmax.f32 %v2787, 0.0
        %v2795 = vpack.c.bf16 %v2791, %v2791
        %v2796 = vpack.c.bf16 %v2792, %v2792
        %v2797 = vpack.c.bf16 %v2793, %v2793
        %v2798 = vpack.c.bf16 %v2794, %v2794
        %v2799 = vld [vmem:[#allocation11] sm:$0xff]
        %v2800 = vld [vmem:[#allocation11 + $0x8] sm:$0xff]
        %v2801 = vld [vmem:[#allocation11 + $0x10] sm:$0xff]
        %v2802 = vld [vmem:[#allocation11 + $0x18] sm:$0xff]
        %v2803 = vld [vmem:[#allocation11 + $0x20] sm:$0xff]
        %v2804 = vld [vmem:[#allocation11 + $0x28] sm:$0xff]
        %v2805 = vld [vmem:[#allocation11 + $0x30] sm:$0xff]
        %v2806 = vld [vmem:[#allocation11 + $0x38] sm:$0xff]
        %v2807 = vld [vmem:[#allocation11 + $0x40] sm:$0xff]
        %v2808 = vld [vmem:[#allocation11 + $0x48] sm:$0xff]
        %v2809 = vld [vmem:[#allocation11 + $0x50] sm:$0xff]
        %v2810 = vld [vmem:[#allocation11 + $0x58] sm:$0xff]
        %v2811 = vld [vmem:[#allocation11 + $0x60] sm:$0xff]
        %v2812 = vld [vmem:[#allocation11 + $0x68] sm:$0xff]
        %v2813 = vld [vmem:[#allocation11 + $0x70] sm:$0xff]
        %v2814 = vld [vmem:[#allocation11 + $0x78] sm:$0xff]
        %v2815 = vld [vmem:[#allocation11 + $0x80] sm:$0xff]
        %v2816 = vld [vmem:[#allocation11 + $0x88] sm:$0xff]
        %v2817 = vld [vmem:[#allocation11 + $0x90] sm:$0xff]
        %v2818 = vld [vmem:[#allocation11 + $0x98] sm:$0xff]
        %v2819 = vld [vmem:[#allocation11 + $0xa0] sm:$0xff]
        %v2820 = vld [vmem:[#allocation11 + $0xa8] sm:$0xff]
        %v2821 = vld [vmem:[#allocation11 + $0xb0] sm:$0xff]
        %v2822 = vld [vmem:[#allocation11 + $0xb8] sm:$0xff]
        %v2823 = vld [vmem:[#allocation11 + $0xc0] sm:$0xff]
        %v2824 = vld [vmem:[#allocation11 + $0xc8] sm:$0xff]
        %v2825 = vld [vmem:[#allocation11 + $0xd0] sm:$0xff]
        %v2826 = vld [vmem:[#allocation11 + $0xd8] sm:$0xff]
        %v2827 = vld [vmem:[#allocation11 + $0xe0] sm:$0xff]
        %v2828 = vld [vmem:[#allocation11 + $0xe8] sm:$0xff]
        %v2829 = vld [vmem:[#allocation11 + $0xf0] sm:$0xff]
        %v2830 = vld [vmem:[#allocation11 + $0xf8] sm:$0xff]
        %v2831 = vld [vmem:[#allocation11 + $0x100] sm:$0xff]
        %v2832 = vld [vmem:[#allocation11 + $0x108] sm:$0xff]
        %v2833 = vld [vmem:[#allocation11 + $0x110] sm:$0xff]
        %v2834 = vld [vmem:[#allocation11 + $0x118] sm:$0xff]
        %v2835 = vld [vmem:[#allocation11 + $0x120] sm:$0xff]
        %v2836 = vld [vmem:[#allocation11 + $0x128] sm:$0xff]
        %v2837 = vld [vmem:[#allocation11 + $0x130] sm:$0xff]
        %v2838 = vld [vmem:[#allocation11 + $0x138] sm:$0xff]
        %v2839 = vld [vmem:[#allocation11 + $0x140] sm:$0xff]
        %v2840 = vld [vmem:[#allocation11 + $0x148] sm:$0xff]
        %v2841 = vld [vmem:[#allocation11 + $0x150] sm:$0xff]
        %v2842 = vld [vmem:[#allocation11 + $0x158] sm:$0xff]
        %v2843 = vld [vmem:[#allocation11 + $0x160] sm:$0xff]
        %v2844 = vld [vmem:[#allocation11 + $0x168] sm:$0xff]
        %v2845 = vld [vmem:[#allocation11 + $0x170] sm:$0xff]
        %v2846 = vld [vmem:[#allocation11 + $0x178] sm:$0xff]
        %v2847 = vld [vmem:[#allocation11 + $0x180] sm:$0xff]
        %v2848 = vld [vmem:[#allocation11 + $0x188] sm:$0xff]
        %v2849 = vld [vmem:[#allocation11 + $0x190] sm:$0xff]
        %v2850 = vld [vmem:[#allocation11 + $0x198] sm:$0xff]
        %v2851 = vld [vmem:[#allocation11 + $0x1a0] sm:$0xff]
        %v2852 = vld [vmem:[#allocation11 + $0x1a8] sm:$0xff]
        %v2853 = vld [vmem:[#allocation11 + $0x1b0] sm:$0xff]
        %v2854 = vld [vmem:[#allocation11 + $0x1b8] sm:$0xff]
        %v2855 = vld [vmem:[#allocation11 + $0x1c0] sm:$0xff]
        %v2856 = vld [vmem:[#allocation11 + $0x1c8] sm:$0xff]
        %v2857 = vld [vmem:[#allocation11 + $0x1d0] sm:$0xff]
        %v2858 = vld [vmem:[#allocation11 + $0x1d8] sm:$0xff]
        %v2859 = vld [vmem:[#allocation11 + $0x1e0] sm:$0xff]
        %v2860 = vld [vmem:[#allocation11 + $0x1e8] sm:$0xff]
        %v2861 = vld [vmem:[#allocation11 + $0x1f0] sm:$0xff]
        %v2862 = vld [vmem:[#allocation11 + $0x1f8] sm:$0xff]
        %v2863 = vld [vmem:[%s10] sm:$0x3]
        %v2865 = vlaneseq
        %v2866 = vshrl.u32 %v2865, 7
        %v2867 = vsub.s32 0, %v2866
        %v2868 = vrot.slane %v2863, %v2867
        %v2869 = vlaneseq
        %v2870 = vshrl.u32 %v2869, 7
        %v2871 = vsub.s32 1, %v2870
        %v2872 = vrot.slane %v2863, %v2871
        %v2939 = vunpack.c.l.b16 %v2799
        %v2940 = vunpack.c.h.b16 %v2799
        %v2941 = vunpack.c.l.b16 %v2800
        %v2942 = vunpack.c.h.b16 %v2800
        %v2943 = vunpack.c.l.b16 %v2801
        %v2944 = vunpack.c.h.b16 %v2801
        %v2945 = vunpack.c.l.b16 %v2802
        %v2946 = vunpack.c.h.b16 %v2802
        %v2947 = vunpack.c.l.b16 %v2803
        %v2948 = vunpack.c.h.b16 %v2803
        %v2949 = vunpack.c.l.b16 %v2804
        %v2950 = vunpack.c.h.b16 %v2804
        %v2951 = vunpack.c.l.b16 %v2805
        %v2952 = vunpack.c.h.b16 %v2805
        %v2953 = vunpack.c.l.b16 %v2806
        %v2954 = vunpack.c.h.b16 %v2806
        %v2955 = vunpack.c.l.b16 %v2807
        %v2956 = vunpack.c.h.b16 %v2807
        %v2957 = vunpack.c.l.b16 %v2808
        %v2958 = vunpack.c.h.b16 %v2808
        %v2959 = vunpack.c.l.b16 %v2809
        %v2960 = vunpack.c.h.b16 %v2809
        %v2961 = vunpack.c.l.b16 %v2810
        %v2962 = vunpack.c.h.b16 %v2810
        %v2963 = vunpack.c.l.b16 %v2811
        %v2964 = vunpack.c.h.b16 %v2811
        %v2965 = vunpack.c.l.b16 %v2812
        %v2966 = vunpack.c.h.b16 %v2812
        %v2967 = vunpack.c.l.b16 %v2813
        %v2968 = vunpack.c.h.b16 %v2813
        %v2969 = vunpack.c.l.b16 %v2814
        %v2970 = vunpack.c.h.b16 %v2814
        %v2971 = vunpack.c.l.b16 %v2815
        %v2972 = vunpack.c.h.b16 %v2815
        %v2973 = vunpack.c.l.b16 %v2816
        %v2974 = vunpack.c.h.b16 %v2816
        %v2975 = vunpack.c.l.b16 %v2817
        %v2976 = vunpack.c.h.b16 %v2817
        %v2977 = vunpack.c.l.b16 %v2818
        %v2978 = vunpack.c.h.b16 %v2818
        %v2979 = vunpack.c.l.b16 %v2819
        %v2980 = vunpack.c.h.b16 %v2819
        %v2981 = vunpack.c.l.b16 %v2820
        %v2982 = vunpack.c.h.b16 %v2820
        %v2983 = vunpack.c.l.b16 %v2821
        %v2984 = vunpack.c.h.b16 %v2821
        %v2985 = vunpack.c.l.b16 %v2822
        %v2986 = vunpack.c.h.b16 %v2822
        %v2987 = vunpack.c.l.b16 %v2823
        %v2988 = vunpack.c.h.b16 %v2823
        %v2989 = vunpack.c.l.b16 %v2824
        %v2990 = vunpack.c.h.b16 %v2824
        %v2991 = vunpack.c.l.b16 %v2825
        %v2992 = vunpack.c.h.b16 %v2825
        %v2993 = vunpack.c.l.b16 %v2826
        %v2994 = vunpack.c.h.b16 %v2826
        %v2995 = vunpack.c.l.b16 %v2827
        %v2996 = vunpack.c.h.b16 %v2827
        %v2997 = vunpack.c.l.b16 %v2828
        %v2998 = vunpack.c.h.b16 %v2828
        %v2999 = vunpack.c.l.b16 %v2829
        %v3000 = vunpack.c.h.b16 %v2829
        %v3001 = vunpack.c.l.b16 %v2830
        %v3002 = vunpack.c.h.b16 %v2830
        %v3003 = vunpack.c.l.b16 %v2831
        %v3004 = vunpack.c.h.b16 %v2831
        %v3005 = vunpack.c.l.b16 %v2832
        %v3006 = vunpack.c.h.b16 %v2832
        %v3007 = vunpack.c.l.b16 %v2833
        %v3008 = vunpack.c.h.b16 %v2833
        %v3009 = vunpack.c.l.b16 %v2834
        %v3010 = vunpack.c.h.b16 %v2834
        %v3011 = vunpack.c.l.b16 %v2835
        %v3012 = vunpack.c.h.b16 %v2835
        %v3013 = vunpack.c.l.b16 %v2836
        %v3014 = vunpack.c.h.b16 %v2836
        %v3015 = vunpack.c.l.b16 %v2837
        %v3016 = vunpack.c.h.b16 %v2837
        %v3017 = vunpack.c.l.b16 %v2838
        %v3018 = vunpack.c.h.b16 %v2838
        %v3019 = vunpack.c.l.b16 %v2839
        %v3020 = vunpack.c.h.b16 %v2839
        %v3021 = vunpack.c.l.b16 %v2840
        %v3022 = vunpack.c.h.b16 %v2840
        %v3023 = vunpack.c.l.b16 %v2841
        %v3024 = vunpack.c.h.b16 %v2841
        %v3025 = vunpack.c.l.b16 %v2842
        %v3026 = vunpack.c.h.b16 %v2842
        %v3027 = vunpack.c.l.b16 %v2843
        %v3028 = vunpack.c.h.b16 %v2843
        %v3029 = vunpack.c.l.b16 %v2844
        %v3030 = vunpack.c.h.b16 %v2844
        %v3031 = vunpack.c.l.b16 %v2845
        %v3032 = vunpack.c.h.b16 %v2845
        %v3033 = vunpack.c.l.b16 %v2846
        %v3034 = vunpack.c.h.b16 %v2846
        %v3035 = vunpack.c.l.b16 %v2847
        %v3036 = vunpack.c.h.b16 %v2847
        %v3037 = vunpack.c.l.b16 %v2848
        %v3038 = vunpack.c.h.b16 %v2848
        %v3039 = vunpack.c.l.b16 %v2849
        %v3040 = vunpack.c.h.b16 %v2849
        %v3041 = vunpack.c.l.b16 %v2850
        %v3042 = vunpack.c.h.b16 %v2850
        %v3043 = vunpack.c.l.b16 %v2851
        %v3044 = vunpack.c.h.b16 %v2851
        %v3045 = vunpack.c.l.b16 %v2852
        %v3046 = vunpack.c.h.b16 %v2852
        %v3047 = vunpack.c.l.b16 %v2853
        %v3048 = vunpack.c.h.b16 %v2853
        %v3049 = vunpack.c.l.b16 %v2854
        %v3050 = vunpack.c.h.b16 %v2854
        %v3051 = vunpack.c.l.b16 %v2855
        %v3052 = vunpack.c.h.b16 %v2855
        %v3053 = vunpack.c.l.b16 %v2856
        %v3054 = vunpack.c.h.b16 %v2856
        %v3055 = vunpack.c.l.b16 %v2857
        %v3056 = vunpack.c.h.b16 %v2857
        %v3057 = vunpack.c.l.b16 %v2858
        %v3058 = vunpack.c.h.b16 %v2858
        %v3059 = vunpack.c.l.b16 %v2859
        %v3060 = vunpack.c.h.b16 %v2859
        %v3061 = vunpack.c.l.b16 %v2860
        %v3062 = vunpack.c.h.b16 %v2860
        %v3063 = vunpack.c.l.b16 %v2861
        %v3064 = vunpack.c.h.b16 %v2861
        %v3065 = vunpack.c.l.b16 %v2862
        %v3066 = vunpack.c.h.b16 %v2862
        %v3067 = vpack.c.b16 %v2941, %v2939
        %v3068 = vpack.c.b16 %v2942, %v2940
        %v3069 = vpack.c.b16 %v2945, %v2943
        %v3070 = vpack.c.b16 %v2946, %v2944
        %v3071 = vpack.c.b16 %v2949, %v2947
        %v3072 = vpack.c.b16 %v2950, %v2948
        %v3073 = vpack.c.b16 %v2953, %v2951
        %v3074 = vpack.c.b16 %v2954, %v2952
        %v3075 = vpack.c.b16 %v2957, %v2955
        %v3076 = vpack.c.b16 %v2958, %v2956
        %v3077 = vpack.c.b16 %v2961, %v2959
        %v3078 = vpack.c.b16 %v2962, %v2960
        %v3079 = vpack.c.b16 %v2965, %v2963
        %v3080 = vpack.c.b16 %v2966, %v2964
        %v3081 = vpack.c.b16 %v2969, %v2967
        %v3082 = vpack.c.b16 %v2970, %v2968
        %v3083 = vpack.c.b16 %v2973, %v2971
        %v3084 = vpack.c.b16 %v2974, %v2972
        %v3085 = vpack.c.b16 %v2977, %v2975
        %v3086 = vpack.c.b16 %v2978, %v2976
        %v3087 = vpack.c.b16 %v2981, %v2979
        %v3088 = vpack.c.b16 %v2982, %v2980
        %v3089 = vpack.c.b16 %v2985, %v2983
        %v3090 = vpack.c.b16 %v2986, %v2984
        %v3091 = vpack.c.b16 %v2989, %v2987
        %v3092 = vpack.c.b16 %v2990, %v2988
        %v3093 = vpack.c.b16 %v2993, %v2991
        %v3094 = vpack.c.b16 %v2994, %v2992
        %v3095 = vpack.c.b16 %v2997, %v2995
        %v3096 = vpack.c.b16 %v2998, %v2996
        %v3097 = vpack.c.b16 %v3001, %v2999
        %v3098 = vpack.c.b16 %v3002, %v3000
        %v3099 = vpack.c.b16 %v3005, %v3003
        %v3100 = vpack.c.b16 %v3006, %v3004
        %v3101 = vpack.c.b16 %v3009, %v3007
        %v3102 = vpack.c.b16 %v3010, %v3008
        %v3103 = vpack.c.b16 %v3013, %v3011
        %v3104 = vpack.c.b16 %v3014, %v3012
        %v3105 = vpack.c.b16 %v3017, %v3015
        %v3106 = vpack.c.b16 %v3018, %v3016
        %v3107 = vpack.c.b16 %v3021, %v3019
        %v3108 = vpack.c.b16 %v3022, %v3020
        %v3109 = vpack.c.b16 %v3025, %v3023
        %v3110 = vpack.c.b16 %v3026, %v3024
        %v3111 = vpack.c.b16 %v3029, %v3027
        %v3112 = vpack.c.b16 %v3030, %v3028
        %v3113 = vpack.c.b16 %v3033, %v3031
        %v3114 = vpack.c.b16 %v3034, %v3032
        %v3115 = vpack.c.b16 %v3037, %v3035
        %v3116 = vpack.c.b16 %v3038, %v3036
        %v3117 = vpack.c.b16 %v3041, %v3039
        %v3118 = vpack.c.b16 %v3042, %v3040
        %v3119 = vpack.c.b16 %v3045, %v3043
        %v3120 = vpack.c.b16 %v3046, %v3044
        %v3121 = vpack.c.b16 %v3049, %v3047
        %v3122 = vpack.c.b16 %v3050, %v3048
        %v3123 = vpack.c.b16 %v3053, %v3051
        %v3124 = vpack.c.b16 %v3054, %v3052
        %v3125 = vpack.c.b16 %v3057, %v3055
        %v3126 = vpack.c.b16 %v3058, %v3056
        %v3127 = vpack.c.b16 %v3061, %v3059
        %v3128 = vpack.c.b16 %v3062, %v3060
        %v3129 = vpack.c.b16 %v3065, %v3063
        %v3130 = vpack.c.b16 %v3066, %v3064
        %3195 = vmatprep.subr.bf16.mxu0 %v3082
        %3196 = vmatpush1.bf16.msra.mxu0 %v3081
        %3197 = vmatprep.subr.bf16.mxu0 %v3080
        %3198 = vmatpush1.bf16.msra.mxu0 %v3079
        %3199 = vmatprep.subr.bf16.mxu0 %v3078
        %3200 = vmatpush1.bf16.msra.mxu0 %v3077
        %3201 = vmatprep.subr.bf16.mxu0 %v3076
        %3202 = vmatpush1.bf16.msra.mxu0 %v3075
        %3203 = vmatprep.subr.bf16.mxu0 %v3074
        %3204 = vmatpush1.bf16.msra.mxu0 %v3073
        %3205 = vmatprep.subr.bf16.mxu0 %v3072
        %3206 = vmatpush1.bf16.msra.mxu0 %v3071
        %3207 = vmatprep.subr.bf16.mxu0 %v3070
        %3208 = vmatpush1.bf16.msra.mxu0 %v3069
        %3209 = vmatprep.subr.bf16.mxu0 %v3068
        %3210 = vmatpush1.bf16.msra.mxu0 %v3067
        %3211 = vmatprep.subr.bf16.mxu0 %v3098
        %3212 = vmatpush2.bf16.msra.mxu0 %v3097
        %3213 = vmatprep.subr.bf16.mxu0 %v3096
        %3214 = vmatpush2.bf16.msra.mxu0 %v3095
        %3215 = vmatprep.subr.bf16.mxu0 %v3094
        %3216 = vmatpush2.bf16.msra.mxu0 %v3093
        %3217 = vmatprep.subr.bf16.mxu0 %v3092
        %3218 = vmatpush2.bf16.msra.mxu0 %v3091
        %3219 = vmatprep.subr.bf16.mxu0 %v3090
        %3220 = vmatpush2.bf16.msra.mxu0 %v3089
        %3221 = vmatprep.subr.bf16.mxu0 %v3088
        %3222 = vmatpush2.bf16.msra.mxu0 %v3087
        %3223 = vmatprep.subr.bf16.mxu0 %v3086
        %3224 = vmatpush2.bf16.msra.mxu0 %v3085
        %3225 = vmatprep.subr.bf16.mxu0 %v3084
        %3226 = vmatpush2.bf16.msra.mxu0 %v3083
        %3227 = vmatprep.mubr.bf16.mxu0 %v2796
        %3228 = vmatmul.mubr.bf16.gmra.mxu0 %v2795
        %v3229 = vpop.f32.mrf.mxu0
        %v3230 = vadd.f32 %v2868, %v3229
        %v3231 = vpop.f32.mrf.mxu0
        %v3232 = vadd.f32 %v2872, %v3231
        %v3233 = vpop.f32.mrf.mxu0
        %v3234 = vpop.f32.mrf.mxu0
        %3235 = vdwg.mxu0
        %3236 = vmatprep.subr.bf16.mxu0 %v3114
        %3237 = vmatpush1.bf16.msra.mxu0 %v3113
        %3238 = vmatprep.subr.bf16.mxu0 %v3112
        %3239 = vmatpush1.bf16.msra.mxu0 %v3111
        %3240 = vmatprep.subr.bf16.mxu0 %v3110
        %3241 = vmatpush1.bf16.msra.mxu0 %v3109
        %3242 = vmatprep.subr.bf16.mxu0 %v3108
        %3243 = vmatpush1.bf16.msra.mxu0 %v3107
        %3244 = vmatprep.subr.bf16.mxu0 %v3106
        %3245 = vmatpush1.bf16.msra.mxu0 %v3105
        %3246 = vmatprep.subr.bf16.mxu0 %v3104
        %3247 = vmatpush1.bf16.msra.mxu0 %v3103
        %3248 = vmatprep.subr.bf16.mxu0 %v3102
        %3249 = vmatpush1.bf16.msra.mxu0 %v3101
        %3250 = vmatprep.subr.bf16.mxu0 %v3100
        %3251 = vmatpush1.bf16.msra.mxu0 %v3099
        %3252 = vmatprep.subr.bf16.mxu0 %v3130
        %3253 = vmatpush2.bf16.msra.mxu0 %v3129
        %3254 = vmatprep.subr.bf16.mxu0 %v3128
        %3255 = vmatpush2.bf16.msra.mxu0 %v3127
        %3256 = vmatprep.subr.bf16.mxu0 %v3126
        %3257 = vmatpush2.bf16.msra.mxu0 %v3125
        %3258 = vmatprep.subr.bf16.mxu0 %v3124
        %3259 = vmatpush2.bf16.msra.mxu0 %v3123
        %3260 = vmatprep.subr.bf16.mxu0 %v3122
        %3261 = vmatpush2.bf16.msra.mxu0 %v3121
        %3262 = vmatprep.subr.bf16.mxu0 %v3120
        %3263 = vmatpush2.bf16.msra.mxu0 %v3119
        %3264 = vmatprep.subr.bf16.mxu0 %v3118
        %3265 = vmatpush2.bf16.msra.mxu0 %v3117
        %3266 = vmatprep.subr.bf16.mxu0 %v3116
        %3267 = vmatpush2.bf16.msra.mxu0 %v3115
        %3268 = vmatprep.mubr.bf16.mxu0 %v2798
        %3269 = vmatmul.mubr.bf16.gmra.mxu0 %v2797
        %v3270 = vpop.f32.mrf.mxu0
        %v3271 = vadd.f32 %v3230, %v3270
        %v3272 = vpop.f32.mrf.mxu0
        %v3273 = vadd.f32 %v3232, %v3272
        %v3274 = vpop.f32.mrf.mxu0
        %v3275 = vpop.f32.mrf.mxu0
        %3276 = vdwg.mxu0
        %v3277 = vadd.f32 %v2299, %v3271
        %v3278 = vadd.f32 %v2300, %v3273
        %v3279 = vld [vmem:[%s11] sm:$0x3]
        %v3280 = vld [vmem:[%s12] sm:$0x3]
        %v3281 = vadd.f32 %v3277, %v3278
        %3282 = vadd.xlane.f32.xlu0 %v3281
        %v3283 = vpop.xlane.xlu0 %3282
        %v3284 = vmul.f32 %v3283, %v2261
        %v3285 = vsub.f32 %v3277, %v3284
        %v3286 = vsub.f32 %v3278, %v3284
        %v3287 = vmul.f32 %v3285, %v3285
        %v3288 = vmul.f32 %v3286, %v3286
        %v3289 = vadd.f32 %v3287, %v3288
        %3290 = vadd.xlane.f32.xlu0 %v3289
        %v3291 = vpop.xlane.xlu0 %3290
        %v3292 = vmul.f32 %v3291, %v2261
        %v3293 = vadd.f32 %v3292, 1e-05
        %v3294 = vrsqrt.pop %v3293
        %v3295 = vmul.f32 %v3285, %v3294
        %v3296 = vmul.f32 %v3286, %v3294
        %v3298 = vlaneseq
        %v3299 = vshrl.u32 %v3298, 7
        %v3300 = vsub.s32 0, %v3299
        %v3301 = vrot.slane %v3279, %v3300
        %v3302 = vlaneseq
        %v3303 = vshrl.u32 %v3302, 7
        %v3304 = vsub.s32 1, %v3303
        %v3305 = vrot.slane %v3279, %v3304
        %v3308 = vmul.f32 %v3295, %v3301
        %v3309 = vmul.f32 %v3296, %v3305
        %v3311 = vlaneseq
        %v3312 = vshrl.u32 %v3311, 7
        %v3313 = vsub.s32 0, %v3312
        %v3314 = vrot.slane %v3280, %v3313
        %v3315 = vlaneseq
        %v3316 = vshrl.u32 %v3315, 7
        %v3317 = vsub.s32 1, %v3316
        %v3318 = vrot.slane %v3280, %v3317
        %v3321 = vadd.f32 %v3308, %v3314
        %v3322 = vadd.f32 %v3309, %v3318
        %3323 = vst [vmem:[%s529] sm:$0xff] %v3321
        %3324 = vst [vmem:[%s529 + $0x8] sm:$0xff] %v3322
        %s3325 = sand.u32 %s319, 1
        %s3326 = scalar_lea.sflag [#allocation4], %s3325
        %s3327 = sand.u32 %s319, 1
        %s3328 = smul.addr %s3327, 16
        %s3329 = scalar_lea.vmem [#allocation13], %s3328
        // Predicated region
        $region97: #{tpu_custom_call.1} parent=71 // pred_check
          %p3330 = pneg %p329
        $region98: #{tpu_custom_call.1} parent=71 // pred_check_branch
          %3332 = sbr.rel (%p3330) target = $region100
        $region99: #{tpu_custom_call.1} parent=71 // pred_region
          %s3334 = ssub.s32 256, 256
          %3335 = vsyncadd %s3326, %s3334
          %s3336 = smul.addr %s33, 2
          %s3337 = smul.addr %s3336, 128
          %s3338 = scalar_lea.hbm %s13, %s3337
          %s3340 = sshll.u32 %s3329, 4
          %s3341 = int_to_ptr.vmem [resolvable:$true] %s3340
          %3343 = dma.vmem_to_hbm [thread:$0]  %s3341, 256, %s3338, %s3326
        $region100: #{tpu_custom_call.1} parent=71 // pred_fallthru
          _
      $region72: #{tpu_custom_call.1} parent=5 // pred_fallthru
        _
      %p3344 = scmp.le.s32.totalorder 2, %s28
      // Predicated region
      $region101: #{tpu_custom_call.1} parent=5 // pred_check
        %p3345 = pneg %p3344
      $region102: #{tpu_custom_call.1} parent=5 // pred_check_branch
        %3347 = sbr.rel (%p3345) target = $region104
      $region103: #{tpu_custom_call.1} parent=5 // pred_region
        %s3348 = ssub.s32 %s28, 2
        // Predicated region
        $region105: #{tpu_custom_call.1} parent=103 // pred_check
          %p3349 = pneg %p335
        $region106: #{tpu_custom_call.1} parent=103 // pred_check_branch
          %3351 = sbr.rel (%p3349) target = $region108
        $region107: #{tpu_custom_call.1} parent=103 // pred_region
          %s3352 = sand.u32 %s320, 1
          %s3353 = scalar_lea.sflag [#allocation4], %s3352
          %s3354 = sand.u32 %s320, 1
          %s3355 = smul.addr %s3354, 16
          %s3356 = scalar_lea.vmem [#allocation13], %s3355
          %3357 = dma.done %s3353, 256
        $region108: #{tpu_custom_call.1} parent=103 // pred_fallthru
          _
      $region104: #{tpu_custom_call.1} parent=5 // pred_fallthru
        _
    $region6: #{tpu_custom_call.1} parent=1 // loop_footer
      %s32 = sadd.s32 1, %s28
    $region7: #{tpu_custom_call.1} parent=1 // loop_footer_branch
      %27 = sbr.rel target = $region3
    $region8: #{tpu_custom_call.1} parent=1 // loop_exit
      _
    %3358 = vsyncpa [#allocation3], 1
    %s3359 = scalar_lea.sflag [#allocation3], 1
    %3360 = vsyncpa %s3359, 1
    %3361 = vsyncpa [#allocation6], 1
    %3362 = vsyncpa [#allocation9], 1
    %3363 = vsyncpa [#allocation12], 1
    %3364 = vsyncpa [#allocation4], 1
    %s3365 = scalar_lea.sflag [#allocation4], 1
    %3366 = vsyncpa %s3365, 1

</llo_original>
